<compile_context>
chip_gen: v5e
topology: v5e:2x2
jax: 0.10.0
libtpu: 0.0.40
codegen_flags: <defaults>
</compile_context>

<pallas_src>
import numpy as np
import jax
import jax.numpy as jnp
from jax.experimental import pallas as pl
from jax.experimental.pallas import tpu as pltpu

_EPS = 1e-5


# ----------------------------------------------------------------------------
# Small helpers
# ----------------------------------------------------------------------------
def _nbytes(*arrays):
    return int(sum(a.size * a.dtype.itemsize for a in arrays))


def _compiler_params(io_bytes):
    # Small kernels keep a 32 MiB budget; the big fused stage5 kernels
    # (~11.5 MiB of bf16 weights, double-buffered) get a bit more headroom.
    # Capped at 56 MiB so every kernel fits v7x's 64 MiB physical VMEM.
    limit = int(min(max(32 * 1024 * 1024, 2 * io_bytes + 16 * 1024 * 1024),
                    56 * 1024 * 1024))
    return pltpu.CompilerParams(dimension_semantics=("arbitrary",),
                                vmem_limit_bytes=limit)


def _full_spec(shape):
    return pl.BlockSpec(shape, lambda i: (0,) * len(shape))


# Constant 0/1 tap-selection matrices for a 3x3 window with padding 1 and a given
# stride (used for both the in-kernel 3x3 conv and the fused MaxPool2d(3,2,1)).
# Row t*M2 + m2 has a single 1 at the flat input index that feeds tap t of output
# position m2, or is all-zero if that tap falls into the zero padding.
_SEL_CACHE = {}


def _tap_selection(n, h, w, stride):
    key = (n, h, w, stride)
    if key not in _SEL_CACHE:
        ho = (h - 1) // stride + 1
        wo = (w - 1) // stride + 1
        m2 = n * ho * wo
        sel = np.zeros((9 * m2, n * h * w), np.float32)
        for di in range(3):
            for dj in range(3):
                t = di * 3 + dj
                for b in range(n):
                    for oh in range(ho):
                        ih = stride * oh + di - 1
                        if not 0 <= ih < h:
                            continue
                        for ow in range(wo):
                            iw = stride * ow + dj - 1
                            if not 0 <= iw < w:
                                continue
                            sel[t * m2 + (b * ho + oh) * wo + ow,
                                (b * h + ih) * w + iw] = 1.0
        _SEL_CACHE[key] = (jnp.asarray(sel, jnp.bfloat16), (ho, wo))
    return _SEL_CACHE[key]


_POOL_CACHE = {}


def _avgpool_matrix(n, hw):
    key = (n, hw)
    if key not in _POOL_CACHE:
        a = np.zeros((n, n * hw), np.float32)
        for b in range(n):
            a[b, b * hw:(b + 1) * hw] = 1.0 / hw
        _POOL_CACHE[key] = jnp.asarray(a, jnp.float32)
    return _POOL_CACHE[key]


# ----------------------------------------------------------------------------
# In-kernel BatchNorm (train mode, batch statistics over the N*H*W axis)
# ----------------------------------------------------------------------------
def _bn(y, gamma, beta, relu):
    mu = jnp.mean(y, axis=0, keepdims=True)
    var = jnp.mean(jnp.square(y - mu), axis=0, keepdims=True)
    scale = gamma * jax.lax.rsqrt(var + _EPS)   # folded scale; rsqrt goes to EUP
    out = (y - mu) * scale + beta
    if relu:
        out = jnp.maximum(out, 0.0)
    return out


# ----------------------------------------------------------------------------
# Fused Bottleneck kernel
# ----------------------------------------------------------------------------
def _bottleneck_kernel(has_ds, m2, wc):
    """relu( BN(conv3( relu(BN(conv2( relu(BN(conv1(x))) ))) )) + identity )."""

    def kernel(*refs):
        if has_ds:
            (x_ref, s2_ref, w1_ref, g1_ref, b1_ref, w2_ref, g2_ref, b2_ref,
             w3_ref, g3_ref, b3_ref, wd_ref, gd_ref, bd_ref, o_ref) = refs
        else:
            (x_ref, s2_ref, w1_ref, g1_ref, b1_ref, w2_ref, g2_ref, b2_ref,
             w3_ref, g3_ref, b3_ref, o_ref) = refs

        x_f32 = x_ref[...]
        x_bf = x_f32.astype(jnp.bfloat16)

        # conv1: 1x1 + BN + ReLU          (M1, Cin) @ (Cin, wc)
        y1 = jnp.dot(x_bf, w1_ref[...], preferred_element_type=jnp.float32)
        h1 = _bn(y1, g1_ref[...], b1_ref[...], relu=True).astype(jnp.bfloat16)

        # conv2: 3x3 (stride baked into the selection matrix) via an MXU
        # tap-gather plus 9 accumulated tap matmuls.  The gather rows are exact
        # bf16 copies (or zeros for the padding), so this is equivalent to im2col.
        gath = jnp.dot(s2_ref[...], h1, preferred_element_type=jnp.float32)
        gath = gath.astype(jnp.bfloat16)
        acc = None
        for t in range(9):
            d = jnp.dot(gath[t * m2:(t + 1) * m2, :],
                        w2_ref[pl.ds(t * wc, wc), :],
                        preferred_element_type=jnp.float32)
            acc = d if acc is None else acc + d
        h2 = _bn(acc, g2_ref[...], b2_ref[...], relu=True).astype(jnp.bfloat16)

        # conv3: 1x1 + BN (no ReLU before the residual add)
        y3 = _bn(jnp.dot(h2, w3_ref[...], preferred_element_type=jnp.float32),
                 g3_ref[...], b3_ref[...], relu=False)

        # identity branch
        if has_ds:
            # centre tap (di=dj=1) of the selection matrix == strided subsample of x
            xg = jnp.dot(s2_ref[pl.ds(4 * m2, m2), :], x_bf,
                         preferred_element_type=jnp.float32).astype(jnp.bfloat16)
            ident = _bn(jnp.dot(xg, wd_ref[...],
                                preferred_element_type=jnp.float32),
                        gd_ref[...], bd_ref[...], relu=False)
        else:
            ident = x_f32

        o_ref[...] = jnp.maximum(y3 + ident, 0.0)

    return kernel


def _bottleneck_pallas(args, has_ds):
    x2d, s2, w1 = args[0], args[1], args[2]
    w3 = args[8]
    m1, cin = x2d.shape
    m2 = s2.shape[0] // 9
    wc = w1.shape[1]
    cout = w3.shape[1]
    io = _nbytes(*args) + m2 * cout * 4
    flops = 2 * (m1 * cin * wc + 9 * m2 * m1 * wc + 9 * m2 * wc * wc
                 + m2 * wc * cout)
    if has_ds:
        cds = args[11].shape[0]
        flops += 2 * (m2 * m1 * cin + m2 * cds * cout)
    return pl.pallas_call(
        _bottleneck_kernel(has_ds, m2, wc),
        out_shape=jax.ShapeDtypeStruct((m2, cout), jnp.float32),
        grid=(1,),
        in_specs=[_full_spec(a.shape) for a in args],
        out_specs=_full_spec((m2, cout)),
        compiler_params=_compiler_params(io),
        cost_estimate=pl.CostEstimate(flops=int(flops),
                                      transcendentals=int(4 * (wc + cout)),
                                      bytes_accessed=int(io)),
    )(*args)


@jax.jit
def _bottleneck_ds(x2d, s2, w1, g1, b1, w2, g2, b2, w3, g3, b3, wd, gd, bd):
    return _bottleneck_pallas((x2d, s2, w1, g1, b1, w2, g2, b2, w3, g3, b3,
                               wd, gd, bd), True)


@jax.jit
def _bottleneck_plain(x2d, s2, w1, g1, b1, w2, g2, b2, w3, g3, b3):
    return _bottleneck_pallas((x2d, s2, w1, g1, b1, w2, g2, b2, w3, g3, b3), False)


# ----------------------------------------------------------------------------
# Stem: 7x7/s2/p3 conv + BN + ReLU + MaxPool2d(3,2,1), one fused kernel
# ----------------------------------------------------------------------------
@jax.jit
def _stem_maxpool(x_nhwc, w, g, b, s_pool):
    n, h, wd, c = x_nhwc.shape
    k, stride, pad = 7, 2, 3
    ho = (h + 2 * pad - k) // stride + 1
    wo = (wd + 2 * pad - k) // stride + 1
    # 7x7 im2col (49 taps of a 3-channel image) done once with cheap XLA slices
    # inside this jit; everything else runs inside the Pallas kernel.
    xp = jnp.pad(x_nhwc, ((0, 0), (pad, pad), (pad, pad), (0, 0)))
    taps = [xp[:, i:i + stride * ho:stride, j:j + stride * wo:stride, :]
            for i in range(k) for j in range(k)]
    patches = jnp.stack(taps, axis=3).reshape(n * ho * wo, k * k * c)
    patches = patches.astype(jnp.bfloat16)

    m_in = n * ho * wo
    m_out = s_pool.shape[0] // 9
    cout = w.shape[1]

    def kernel(p_ref, w_ref, g_ref, b_ref, s_ref, o_ref):
        y = jnp.dot(p_ref[...], w_ref[...], preferred_element_type=jnp.float32)
        hact = _bn(y, g_ref[...], b_ref[...], relu=True).astype(jnp.bfloat16)
        gp = jnp.dot(s_ref[...], hact, preferred_element_type=jnp.float32)
        # MaxPool2d(3,2,1): max over the 9 gathered taps.  All-zero padding rows
        # are safe because hact >= 0 after the ReLU.
        out = gp[0:m_out, :]
        for t in range(1, 9):
            out = jnp.maximum(out, gp[t * m_out:(t + 1) * m_out, :])
        o_ref[...] = out

    args = (patches, w, g, b, s_pool)
    io = _nbytes(*args) + m_out * cout * 4
    flops = 2 * (m_in * k * k * c * cout + 9 * m_out * m_in * cout)
    return pl.pallas_call(
        kernel,
        out_shape=jax.ShapeDtypeStruct((m_out, cout), jnp.float32),
        grid=(1,),
        in_specs=[_full_spec(a.shape) for a in args],
        out_specs=_full_spec((m_out, cout)),
        compiler_params=_compiler_params(io),
        cost_estimate=pl.CostEstimate(flops=int(flops),
                                      transcendentals=int(2 * cout),
                                      bytes_accessed=int(io)),
    )(*args)


# ----------------------------------------------------------------------------
# Head: AdaptiveAvgPool2d((1,1)) + Flatten + Linear(2048,10) + Softmax(dim=1)
# ----------------------------------------------------------------------------
@jax.jit
def _head(x2d, pool_mat, fc_w, fc_b):
    n = pool_mat.shape[0]
    cout = fc_w.shape[1]

    def kernel(x_ref, a_ref, w_ref, b_ref, o_ref):
        pooled = jnp.dot(a_ref[...], x_ref[...],
                         preferred_element_type=jnp.float32)        # (N, C)
        logits = jnp.dot(pooled, w_ref[...],
                         preferred_element_type=jnp.float32) + b_ref[...]
        m = jnp.max(logits, axis=-1, keepdims=True)
        e = jnp.exp(logits - m)
        o_ref[...] = e / jnp.sum(e, axis=-1, keepdims=True)

    args = (x2d, pool_mat, fc_w, fc_b)
    io = _nbytes(*args) + n * cout * 4
    flops = 2 * (n * x2d.shape[0] * x2d.shape[1] + n * fc_w.shape[0] * cout)
    return pl.pallas_call(
        kernel,
        out_shape=jax.ShapeDtypeStruct((n, cout), jnp.float32),
        grid=(1,),
        in_specs=[_full_spec(a.shape) for a in args],
        out_specs=_full_spec((n, cout)),
        compiler_params=_compiler_params(io),
        cost_estimate=pl.CostEstimate(flops=int(flops),
                                      transcendentals=int(n * cout),
                                      bytes_accessed=int(io)),
    )(*args)


# ----------------------------------------------------------------------------
# Parameters (deterministic synthetic init; shapes follow the PyTorch module)
# ----------------------------------------------------------------------------
class KeyGen:
    def __init__(self, seed):
        self._key = jax.random.PRNGKey(seed)

    def __call__(self):
        self._key, sub = jax.random.split(self._key)
        return sub


def conv_bn_params(kg, cin, cout, k):
    # NOTE: conv bias is intentionally omitted -- a per-channel constant is
    # exactly cancelled by the mean subtraction of the train-mode BatchNorm that
    # follows every conv, so the forward output is unchanged.
    fan_in = cin * k * k
    w = jax.random.normal(kg(), (k * k * cin, cout), jnp.float32) / np.sqrt(fan_in)
    return dict(
        w=w.astype(jnp.bfloat16),                      # MXU-native dtype
        g=1.0 + 0.1 * jax.random.normal(kg(), (1, cout), jnp.float32),
        bt=0.1 * jax.random.normal(kg(), (1, cout), jnp.float32),
    )


def bottleneck_params(kg, in_ch, first_layer=False, next_layer=False,
                      down_sampling=False, stride=1):
    change = 4 * in_ch
    width = in_ch            # groups == 1 for ResNet_152
    ds_ch = 2 * in_ch
    if first_layer:
        c1_in = in_ch
    elif next_layer:
        c1_in = ds_ch
    else:
        c1_in = change
    p = dict(stride=stride)
    p["conv1"] = conv_bn_params(kg, c1_in, width, 1)
    p["conv2"] = conv_bn_params(kg, width, width, 3)
    p["conv3"] = conv_bn_params(kg, width, change, 1)
    if down_sampling:
        p["ds"] = conv_bn_params(kg, ds_ch, change, 1)     # 1x1, stride 2
    elif first_layer:
        p["ds"] = conv_bn_params(kg, in_ch, change, 1)     # 1x1, stride 1
    return p


def resnet_block_params(kg, in_ch, num_block, down_sampling=False, change=False):
    blocks = []
    for i in range(num_block):
        if i == 0:
            if change:
                blocks.append(bottleneck_params(kg, in_ch, next_layer=True,
                                                down_sampling=down_sampling,
                                                stride=2))
            else:
                blocks.append(bottleneck_params(kg, in_ch, first_layer=True,
                                                down_sampling=down_sampling,
                                                stride=1))
        else:
            blocks.append(bottleneck_params(kg, in_ch, stride=1))
    return blocks


def init_resnet152_params(seed=0):
    kg = KeyGen(seed)
    return {
        "stem": conv_bn_params(kg, 3, 64, 7),
        "stage2": resnet_block_params(kg, 64, 3, down_sampling=False),
        "stage3": resnet_block_params(kg, 128, 8, down_sampling=True, change=True),
        "stage4": resnet_block_params(kg, 256, 36, down_sampling=True, change=True),
        "stage5": resnet_block_params(kg, 512, 3, down_sampling=True, change=True),
        "fc_w": jax.random.normal(kg(), (512 * 4, 10), jnp.float32) / np.sqrt(2048.0),
        "fc_b": 0.01 * jax.random.normal(kg(), (1, 10), jnp.float32),
    }


# ----------------------------------------------------------------------------
# Forward pass
# ----------------------------------------------------------------------------
def bottleneck_forward(p, x2d, n, h, w):
    """x2d: (N*H*W, Cin) f32, rows in (n, h, w) order.  Returns (out2d, Ho, Wo)."""
    s2, (ho, wo) = _tap_selection(n, h, w, p["stride"])
    c1, c2, c3 = p["conv1"], p["conv2"], p["conv3"]
    if "ds" in p:
        d = p["ds"]
        out = _bottleneck_ds(x2d, s2,
                             c1["w"], c1["g"], c1["bt"],
                             c2["w"], c2["g"], c2["bt"],
                             c3["w"], c3["g"], c3["bt"],
                             d["w"], d["g"], d["bt"])
    else:
        out = _bottleneck_plain(x2d, s2,
                                c1["w"], c1["g"], c1["bt"],
                                c2["w"], c2["g"], c2["bt"],
                                c3["w"], c3["g"], c3["bt"])
    return out, ho, wo


def resnet152_forward(params, x_nchw):
    x = jnp.transpose(x_nchw, (0, 2, 3, 1)).astype(jnp.float32)   # NCHW -> NHWC
    n, h, w, _ = x.shape
    # stem: conv 7x7/s2/p3 + BN + ReLU + MaxPool2d(3,2,1), fused in one kernel
    hs = (h + 6 - 7) // 2 + 1
    ws = (w + 6 - 7) // 2 + 1
    s_pool, (hp, wp) = _tap_selection(n, hs, ws, 2)   # 3x3/p1/s2 == maxpool geometry
    st = params["stem"]
    act = _stem_maxpool(x, st["w"], st["g"], st["bt"], s_pool)    # (n*hp*wp, 64)
    cur_h, cur_w = hp, wp
    for stage in ("stage2", "stage3", "stage4", "stage5"):
        for blk in params[stage]:
            act, cur_h, cur_w = bottleneck_forward(blk, act, n, cur_h, cur_w)
    pool_mat = _avgpool_matrix(n, cur_h * cur_w)
    return _head(act, pool_mat, params["fc_w"], params["fc_b"])


# TODO(synk): BatchNorm running-stats buffer updates (momentum bookkeeping) are not
# modeled -- they are training-side state mutation and do not affect the forward output.

if __name__ == "__main__":
    params = init_resnet152_params(seed=0)
    x = jax.random.normal(jax.random.PRNGKey(0), (2, 3, 32, 32), jnp.float32)
    out = resnet152_forward(params, x)
    out = jax.block_until_ready(out)
    assert out.shape == (2, 10), out.shape
    assert bool(jnp.all(jnp.isfinite(out)))
    assert bool(jnp.allclose(jnp.sum(out, axis=1), 1.0, atol=1e-4))  # softmax rows
    print("KERNEL_OK")
</pallas_src>

<mosaic_0001>
module attributes {stable_mosaic.version = 11 : i64} {
  func.func @kernel(%arg0: i32, %arg1: memref<512x147xbf16, #tpu.memory_space<vmem>>, %arg2: memref<147x64xbf16, #tpu.memory_space<vmem>>, %arg3: memref<1x64xf32, #tpu.memory_space<vmem>>, %arg4: memref<1x64xf32, #tpu.memory_space<vmem>>, %arg5: memref<1152x512xbf16, #tpu.memory_space<vmem>>, %arg6: memref<128x64xf32, #tpu.memory_space<vmem>>) attributes {dimension_semantics = [#tpu.dimension_semantics<arbitrary>], iteration_bounds = array<i64: 1>, scalar_prefetch = 0 : i64, scratch_operands = 0 : i64, tpu.core_type = #tpu.core_type<tc>, window_params = [{pipeline_mode = #tpu.pipeline_mode<synchronous>, transform_indices = @transform_0, window_bounds = array<i64: 512, 147>}, {pipeline_mode = #tpu.pipeline_mode<synchronous>, transform_indices = @transform_1, window_bounds = array<i64: 147, 64>}, {pipeline_mode = #tpu.pipeline_mode<synchronous>, transform_indices = @transform_2, window_bounds = array<i64: 1, 64>}, {pipeline_mode = #tpu.pipeline_mode<synchronous>, transform_indices = @transform_3, window_bounds = array<i64: 1, 64>}, {pipeline_mode = #tpu.pipeline_mode<synchronous>, transform_indices = @transform_4, window_bounds = array<i64: 1152, 512>}, {pipeline_mode = #tpu.pipeline_mode<synchronous>, transform_indices = @transform_5, window_bounds = array<i64: 128, 64>}]} {
    %c0 = arith.constant 0 : index
    %c0_0 = arith.constant 0 : index
    %0 = vector.load %arg1[%c0, %c0_0] : memref<512x147xbf16, #tpu.memory_space<vmem>>, vector<512x147xbf16>
    %c0_1 = arith.constant 0 : index
    %c0_2 = arith.constant 0 : index
    %1 = vector.load %arg2[%c0_1, %c0_2] : memref<147x64xbf16, #tpu.memory_space<vmem>>, vector<147x64xbf16>
    %cst = arith.constant dense<0.000000e+00> : vector<512x64xf32>
    %2 = tpu.matmul %0, %1, %cst {dimension_numbers = #tpu.dot_dimension_numbers<[1], [0], [0], [1], [0, 0, 1, 1], [], []>} : vector<512x147xbf16>, vector<147x64xbf16>, vector<512x64xf32> -> vector<512x64xf32>
    %c0_3 = arith.constant 0 : index
    %c0_4 = arith.constant 0 : index
    %3 = vector.load %arg3[%c0_3, %c0_4] : memref<1x64xf32, #tpu.memory_space<vmem>>, vector<1x64xf32>
    %c0_5 = arith.constant 0 : index
    %c0_6 = arith.constant 0 : index
    %4 = vector.load %arg4[%c0_5, %c0_6] : memref<1x64xf32, #tpu.memory_space<vmem>>, vector<1x64xf32>
    %cst_7 = arith.constant dense<0.000000e+00> : vector<64xf32>
    %5 = vector.multi_reduction <add>, %2, %cst_7 [0] : vector<512x64xf32> to vector<64xf32>
    %6 = vector.shape_cast %5 : vector<64xf32> to vector<1x64xf32>
    %cst_8 = arith.constant 5.120000e+02 : f32
    %7 = vector.broadcast %cst_8 : f32 to vector<1x64xf32>
    %8 = arith.divf %6, %7 : vector<1x64xf32>
    %9 = vector.broadcast %8 : vector<1x64xf32> to vector<512x64xf32>
    %10 = arith.subf %2, %9 : vector<512x64xf32>
    %11 = arith.mulf %10, %10 : vector<512x64xf32>
    %cst_9 = arith.constant dense<0.000000e+00> : vector<64xf32>
    %12 = vector.multi_reduction <add>, %11, %cst_9 [0] : vector<512x64xf32> to vector<64xf32>
    %13 = vector.shape_cast %12 : vector<64xf32> to vector<1x64xf32>
    %cst_10 = arith.constant 5.120000e+02 : f32
    %14 = vector.broadcast %cst_10 : f32 to vector<1x64xf32>
    %15 = arith.divf %13, %14 : vector<1x64xf32>
    %cst_11 = arith.constant 9.99999974E-6 : f32
    %16 = vector.broadcast %cst_11 : f32 to vector<1x64xf32>
    %17 = arith.addf %15, %16 : vector<1x64xf32>
    %18 = math.rsqrt %17 : vector<1x64xf32>
    %19 = arith.mulf %3, %18 : vector<1x64xf32>
    %20 = vector.broadcast %8 : vector<1x64xf32> to vector<512x64xf32>
    %21 = arith.subf %2, %20 : vector<512x64xf32>
    %22 = vector.broadcast %19 : vector<1x64xf32> to vector<512x64xf32>
    %23 = arith.mulf %21, %22 : vector<512x64xf32>
    %24 = vector.broadcast %4 : vector<1x64xf32> to vector<512x64xf32>
    %25 = arith.addf %23, %24 : vector<512x64xf32>
    %cst_12 = arith.constant 0.000000e+00 : f32
    %26 = vector.broadcast %cst_12 : f32 to vector<512x64xf32>
    %27 = arith.maximumf %25, %26 : vector<512x64xf32>
    %28 = arith.truncf %27 : vector<512x64xf32> to vector<512x64xbf16>
    %c0_13 = arith.constant 0 : index
    %c0_14 = arith.constant 0 : index
    %29 = vector.load %arg5[%c0_13, %c0_14] : memref<1152x512xbf16, #tpu.memory_space<vmem>>, vector<1152x512xbf16>
    %cst_15 = arith.constant dense<0.000000e+00> : vector<1152x64xf32>
    %30 = tpu.matmul %29, %28, %cst_15 {dimension_numbers = #tpu.dot_dimension_numbers<[1], [0], [0], [1], [0, 0, 1, 1], [], []>} : vector<1152x512xbf16>, vector<512x64xbf16>, vector<1152x64xf32> -> vector<1152x64xf32>
    %31 = vector.extract_strided_slice %30 {offsets = [0, 0], sizes = [128, 64], strides = [1, 1]} : vector<1152x64xf32> to vector<128x64xf32>
    %32 = vector.extract_strided_slice %30 {offsets = [128, 0], sizes = [128, 64], strides = [1, 1]} : vector<1152x64xf32> to vector<128x64xf32>
    %33 = arith.maximumf %31, %32 : vector<128x64xf32>
    %34 = vector.extract_strided_slice %30 {offsets = [256, 0], sizes = [128, 64], strides = [1, 1]} : vector<1152x64xf32> to vector<128x64xf32>
    %35 = arith.maximumf %33, %34 : vector<128x64xf32>
    %36 = vector.extract_strided_slice %30 {offsets = [384, 0], sizes = [128, 64], strides = [1, 1]} : vector<1152x64xf32> to vector<128x64xf32>
    %37 = arith.maximumf %35, %36 : vector<128x64xf32>
    %38 = vector.extract_strided_slice %30 {offsets = [512, 0], sizes = [128, 64], strides = [1, 1]} : vector<1152x64xf32> to vector<128x64xf32>
    %39 = arith.maximumf %37, %38 : vector<128x64xf32>
    %40 = vector.extract_strided_slice %30 {offsets = [640, 0], sizes = [128, 64], strides = [1, 1]} : vector<1152x64xf32> to vector<128x64xf32>
    %41 = arith.maximumf %39, %40 : vector<128x64xf32>
    %42 = vector.extract_strided_slice %30 {offsets = [768, 0], sizes = [128, 64], strides = [1, 1]} : vector<1152x64xf32> to vector<128x64xf32>
    %43 = arith.maximumf %41, %42 : vector<128x64xf32>
    %44 = vector.extract_strided_slice %30 {offsets = [896, 0], sizes = [128, 64], strides = [1, 1]} : vector<1152x64xf32> to vector<128x64xf32>
    %45 = arith.maximumf %43, %44 : vector<128x64xf32>
    %46 = vector.extract_strided_slice %30 {offsets = [1024, 0], sizes = [128, 64], strides = [1, 1]} : vector<1152x64xf32> to vector<128x64xf32>
    %47 = arith.maximumf %45, %46 : vector<128x64xf32>
    %c0_16 = arith.constant 0 : index
    %c0_17 = arith.constant 0 : index
    %48 = vector.load %arg6[%c0_16, %c0_17] : memref<128x64xf32, #tpu.memory_space<vmem>>, vector<128x64xf32>
    tpu.vector_store %arg6[%c0_16, %c0_17], %47 {strides = array<i32>} : memref<128x64xf32, #tpu.memory_space<vmem>>, vector<128x64xf32>,
    return
  }
  func.func @transform_0(%arg0: i32) -> (i32, i32) {
    %c0_i32 = arith.constant 0 : i32
    %c0_i32_0 = arith.constant 0 : i32
    %c0_i32_1 = arith.constant 0 : i32
    return %c0_i32, %c0_i32_0 : i32, i32
  }
  func.func @transform_1(%arg0: i32) -> (i32, i32) {
    %c0_i32 = arith.constant 0 : i32
    %c0_i32_0 = arith.constant 0 : i32
    %c0_i32_1 = arith.constant 0 : i32
    return %c0_i32, %c0_i32_0 : i32, i32
  }
  func.func @transform_2(%arg0: i32) -> (i32, i32) {
    %c0_i32 = arith.constant 0 : i32
    %c0_i32_0 = arith.constant 0 : i32
    %c0_i32_1 = arith.constant 0 : i32
    return %c0_i32, %c0_i32_0 : i32, i32
  }
  func.func @transform_3(%arg0: i32) -> (i32, i32) {
    %c0_i32 = arith.constant 0 : i32
    %c0_i32_0 = arith.constant 0 : i32
    %c0_i32_1 = arith.constant 0 : i32
    return %c0_i32, %c0_i32_0 : i32, i32
  }
  func.func @transform_4(%arg0: i32) -> (i32, i32) {
    %c0_i32 = arith.constant 0 : i32
    %c0_i32_0 = arith.constant 0 : i32
    %c0_i32_1 = arith.constant 0 : i32
    return %c0_i32, %c0_i32_0 : i32, i32
  }
  func.func @transform_5(%arg0: i32) -> (i32, i32) {
    %c0_i32 = arith.constant 0 : i32
    %c0_i32_0 = arith.constant 0 : i32
    %c0_i32_1 = arith.constant 0 : i32
    return %c0_i32, %c0_i32_0 : i32, i32
  }
}

</mosaic_0001>

<llo_original>
// kernel: _stem_maxpool.1
$region0: #{_stem_maxpool.1}
  #allocation0 [shape = 'u32[]', space=smem, size = 0x4, offset = 0x4, fixed_abs, tag = 'smem constant byte address 0x4 - core index']
  #allocation1 [shape = 'u32[72,128]{1,0:T(1,128)}', space=vmem, size = 0x9000, scoped, tag = 'internal scratch']
  %s0 = inlined_call_operand.vmem [shape: bf16[512,147], index: 0, kind: input, shape index: {}]
  %s1 = inlined_call_operand.vmem [shape: bf16[147,64], index: 1, kind: input, shape index: {}]
  %s2 = inlined_call_operand.vmem [shape: f32[1,64], index: 2, kind: input, shape index: {}]
  %s3 = inlined_call_operand.vmem [shape: f32[1,64], index: 3, kind: input, shape index: {}]
  %s4 = inlined_call_operand.vmem [shape: bf16[1152,512], index: 4, kind: input, shape index: {}]
  %s5 = inlined_call_operand.vmem [shape: f32[128,64], index: 5, kind: output, shape index: {}]
  %s6 = sld [smem:[#allocation0]]
  $region30: #{_stem_maxpool.1} parent=0
    _
  %s8 = ssub.s32 1, %s6
  %s9 = scalar_select 0, %s8, %s6
  // Predicated region
  $region2: #{_stem_maxpool.1} parent=0 // pred_check
    _
  $region3: #{_stem_maxpool.1} parent=0 // pred_check_branch
    %11 = sbr.rel (0) target = $region5
  $region4: #{_stem_maxpool.1} parent=0 // pred_region
    _
  $region5: #{_stem_maxpool.1} parent=0 // pred_fallthru
    _
  // Predicated region
  $region6: #{_stem_maxpool.1} parent=0 // pred_check
    _
  $region7: #{_stem_maxpool.1} parent=0 // pred_check_branch
    %13 = sbr.rel (0) target = $region9
  $region8: #{_stem_maxpool.1} parent=0 // pred_region
    _
  $region9: #{_stem_maxpool.1} parent=0 // pred_fallthru
    _
  // Predicated region
  $region10: #{_stem_maxpool.1} parent=0 // pred_check
    _
  $region11: #{_stem_maxpool.1} parent=0 // pred_check_branch
    %15 = sbr.rel (0) target = $region13
  $region12: #{_stem_maxpool.1} parent=0 // pred_region
    _
  $region13: #{_stem_maxpool.1} parent=0 // pred_fallthru
    _
  // Predicated region
  $region14: #{_stem_maxpool.1} parent=0 // pred_check
    _
  $region15: #{_stem_maxpool.1} parent=0 // pred_check_branch
    %17 = sbr.rel (0) target = $region17
  $region16: #{_stem_maxpool.1} parent=0 // pred_region
    _
  $region17: #{_stem_maxpool.1} parent=0 // pred_fallthru
    _
  // Predicated region
  $region18: #{_stem_maxpool.1} parent=0 // pred_check
    _
  $region19: #{_stem_maxpool.1} parent=0 // pred_check_branch
    %19 = sbr.rel (0) target = $region21
  $region20: #{_stem_maxpool.1} parent=0 // pred_region
    _
  $region21: #{_stem_maxpool.1} parent=0 // pred_fallthru
    _
  %v21 = vld [vmem:[%s0] sm:$0xff]
  %v22 = vld [vmem:[%s0 + $0x8] sm:$0xff]
  %v23 = vld [vmem:[%s0 + $0x10] sm:$0xff]
  %v24 = vld [vmem:[%s0 + $0x18] sm:$0xff]
  %v25 = vld [vmem:[%s0 + $0x20] sm:$0xff]
  %v26 = vld [vmem:[%s0 + $0x28] sm:$0xff]
  %v27 = vld [vmem:[%s0 + $0x30] sm:$0xff]
  %v28 = vld [vmem:[%s0 + $0x38] sm:$0xff]
  %v29 = vld [vmem:[%s0 + $0x40] sm:$0xff]
  %v30 = vld [vmem:[%s0 + $0x48] sm:$0xff]
  %v31 = vld [vmem:[%s0 + $0x50] sm:$0xff]
  %v32 = vld [vmem:[%s0 + $0x58] sm:$0xff]
  %v33 = vld [vmem:[%s0 + $0x60] sm:$0xff]
  %v34 = vld [vmem:[%s0 + $0x68] sm:$0xff]
  %v35 = vld [vmem:[%s0 + $0x70] sm:$0xff]
  %v36 = vld [vmem:[%s0 + $0x78] sm:$0xff]
  %v37 = vld [vmem:[%s0 + $0x80] sm:$0xff]
  %v38 = vld [vmem:[%s0 + $0x88] sm:$0xff]
  %v39 = vld [vmem:[%s0 + $0x90] sm:$0xff]
  %v40 = vld [vmem:[%s0 + $0x98] sm:$0xff]
  %v41 = vld [vmem:[%s0 + $0xa0] sm:$0xff]
  %v42 = vld [vmem:[%s0 + $0xa8] sm:$0xff]
  %v43 = vld [vmem:[%s0 + $0xb0] sm:$0xff]
  %v44 = vld [vmem:[%s0 + $0xb8] sm:$0xff]
  %v45 = vld [vmem:[%s0 + $0xc0] sm:$0xff]
  %v46 = vld [vmem:[%s0 + $0xc8] sm:$0xff]
  %v47 = vld [vmem:[%s0 + $0xd0] sm:$0xff]
  %v48 = vld [vmem:[%s0 + $0xd8] sm:$0xff]
  %v49 = vld [vmem:[%s0 + $0xe0] sm:$0xff]
  %v50 = vld [vmem:[%s0 + $0xe8] sm:$0xff]
  %v51 = vld [vmem:[%s0 + $0xf0] sm:$0xff]
  %v52 = vld [vmem:[%s0 + $0xf8] sm:$0xff]
  %v53 = vld [vmem:[%s0 + $0x100] sm:$0xff]
  %v54 = vld [vmem:[%s0 + $0x108] sm:$0xff]
  %v55 = vld [vmem:[%s0 + $0x110] sm:$0xff]
  %v56 = vld [vmem:[%s0 + $0x118] sm:$0xff]
  %v57 = vld [vmem:[%s0 + $0x120] sm:$0xff]
  %v58 = vld [vmem:[%s0 + $0x128] sm:$0xff]
  %v59 = vld [vmem:[%s0 + $0x130] sm:$0xff]
  %v60 = vld [vmem:[%s0 + $0x138] sm:$0xff]
  %v61 = vld [vmem:[%s0 + $0x140] sm:$0xff]
  %v62 = vld [vmem:[%s0 + $0x148] sm:$0xff]
  %v63 = vld [vmem:[%s0 + $0x150] sm:$0xff]
  %v64 = vld [vmem:[%s0 + $0x158] sm:$0xff]
  %v65 = vld [vmem:[%s0 + $0x160] sm:$0xff]
  %v66 = vld [vmem:[%s0 + $0x168] sm:$0xff]
  %v67 = vld [vmem:[%s0 + $0x170] sm:$0xff]
  %v68 = vld [vmem:[%s0 + $0x178] sm:$0xff]
  %v69 = vld [vmem:[%s0 + $0x180] sm:$0xff]
  %v70 = vld [vmem:[%s0 + $0x188] sm:$0xff]
  %v71 = vld [vmem:[%s0 + $0x190] sm:$0xff]
  %v72 = vld [vmem:[%s0 + $0x198] sm:$0xff]
  %v73 = vld [vmem:[%s0 + $0x1a0] sm:$0xff]
  %v74 = vld [vmem:[%s0 + $0x1a8] sm:$0xff]
  %v75 = vld [vmem:[%s0 + $0x1b0] sm:$0xff]
  %v76 = vld [vmem:[%s0 + $0x1b8] sm:$0xff]
  %v77 = vld [vmem:[%s0 + $0x1c0] sm:$0xff]
  %v78 = vld [vmem:[%s0 + $0x1c8] sm:$0xff]
  %v79 = vld [vmem:[%s0 + $0x1d0] sm:$0xff]
  %v80 = vld [vmem:[%s0 + $0x1d8] sm:$0xff]
  %v81 = vld [vmem:[%s0 + $0x1e0] sm:$0xff]
  %v82 = vld [vmem:[%s0 + $0x1e8] sm:$0xff]
  %v83 = vld [vmem:[%s0 + $0x1f0] sm:$0xff]
  %v84 = vld [vmem:[%s0 + $0x1f8] sm:$0xff]
  %v85 = vld [vmem:[%s1] sm:$0xf]
  %v86 = vld [vmem:[%s1 + $0x4] sm:$0xf]
  %v87 = vld [vmem:[%s1 + $0x8] sm:$0xf]
  %v88 = vld [vmem:[%s1 + $0xc] sm:$0xf]
  %v89 = vld [vmem:[%s1 + $0x10] sm:$0xf]
  %v90 = vld [vmem:[%s1 + $0x14] sm:$0xf]
  %v91 = vld [vmem:[%s1 + $0x18] sm:$0xf]
  %v92 = vld [vmem:[%s1 + $0x1c] sm:$0xf]
  %v93 = vld [vmem:[%s1 + $0x20] sm:$0xf]
  %v94 = vld [vmem:[%s1 + $0x24] sm:$0xf]
  %v95 = vld [vmem:[%s1 + $0x28] sm:$0xf]
  %v96 = vld [vmem:[%s1 + $0x2c] sm:$0xf]
  %v97 = vld [vmem:[%s1 + $0x30] sm:$0xf]
  %v98 = vld [vmem:[%s1 + $0x34] sm:$0xf]
  %v99 = vld [vmem:[%s1 + $0x38] sm:$0xf]
  %v100 = vld [vmem:[%s1 + $0x3c] sm:$0xf]
  %v101 = vld [vmem:[%s1 + $0x40] sm:$0xf]
  %v102 = vld [vmem:[%s1 + $0x44] sm:$0xf]
  %v103 = vld [vmem:[%s1 + $0x48] sm:$0x3]
  %v168 = vunpack.c.l.b16 %v21
  %v169 = vunpack.c.h.b16 %v21
  %v170 = vunpack.c.l.b16 %v22
  %v171 = vunpack.c.h.b16 %v22
  %v172 = vunpack.c.l.b16 %v23
  %v173 = vunpack.c.h.b16 %v23
  %v174 = vunpack.c.l.b16 %v24
  %v175 = vunpack.c.h.b16 %v24
  %v176 = vunpack.c.l.b16 %v25
  %v177 = vunpack.c.h.b16 %v25
  %v178 = vunpack.c.l.b16 %v26
  %v179 = vunpack.c.h.b16 %v26
  %v180 = vunpack.c.l.b16 %v27
  %v181 = vunpack.c.h.b16 %v27
  %v182 = vunpack.c.l.b16 %v28
  %v183 = vunpack.c.h.b16 %v28
  %v184 = vunpack.c.l.b16 %v29
  %v185 = vunpack.c.h.b16 %v29
  %v186 = vunpack.c.l.b16 %v30
  %v187 = vunpack.c.h.b16 %v30
  %v188 = vunpack.c.l.b16 %v31
  %v189 = vunpack.c.h.b16 %v31
  %v190 = vunpack.c.l.b16 %v32
  %v191 = vunpack.c.h.b16 %v32
  %v192 = vunpack.c.l.b16 %v33
  %v193 = vunpack.c.h.b16 %v33
  %v194 = vunpack.c.l.b16 %v34
  %v195 = vunpack.c.h.b16 %v34
  %v196 = vunpack.c.l.b16 %v35
  %v197 = vunpack.c.h.b16 %v35
  %v198 = vunpack.c.l.b16 %v36
  %v199 = vunpack.c.h.b16 %v36
  %v200 = vunpack.c.l.b16 %v37
  %v201 = vunpack.c.h.b16 %v37
  %v202 = vunpack.c.l.b16 %v38
  %v203 = vunpack.c.h.b16 %v38
  %v204 = vunpack.c.l.b16 %v39
  %v205 = vunpack.c.h.b16 %v39
  %v206 = vunpack.c.l.b16 %v40
  %v207 = vunpack.c.h.b16 %v40
  %v208 = vunpack.c.l.b16 %v41
  %v209 = vunpack.c.h.b16 %v41
  %v210 = vunpack.c.l.b16 %v42
  %v211 = vunpack.c.h.b16 %v42
  %v212 = vunpack.c.l.b16 %v43
  %v213 = vunpack.c.h.b16 %v43
  %v214 = vunpack.c.l.b16 %v44
  %v215 = vunpack.c.h.b16 %v44
  %v216 = vunpack.c.l.b16 %v45
  %v217 = vunpack.c.h.b16 %v45
  %v218 = vunpack.c.l.b16 %v46
  %v219 = vunpack.c.h.b16 %v46
  %v220 = vunpack.c.l.b16 %v47
  %v221 = vunpack.c.h.b16 %v47
  %v222 = vunpack.c.l.b16 %v48
  %v223 = vunpack.c.h.b16 %v48
  %v224 = vunpack.c.l.b16 %v49
  %v225 = vunpack.c.h.b16 %v49
  %v226 = vunpack.c.l.b16 %v50
  %v227 = vunpack.c.h.b16 %v50
  %v228 = vunpack.c.l.b16 %v51
  %v229 = vunpack.c.h.b16 %v51
  %v230 = vunpack.c.l.b16 %v52
  %v231 = vunpack.c.h.b16 %v52
  %v232 = vunpack.c.l.b16 %v53
  %v233 = vunpack.c.h.b16 %v53
  %v234 = vunpack.c.l.b16 %v54
  %v235 = vunpack.c.h.b16 %v54
  %v236 = vunpack.c.l.b16 %v55
  %v237 = vunpack.c.h.b16 %v55
  %v238 = vunpack.c.l.b16 %v56
  %v239 = vunpack.c.h.b16 %v56
  %v240 = vunpack.c.l.b16 %v57
  %v241 = vunpack.c.h.b16 %v57
  %v242 = vunpack.c.l.b16 %v58
  %v243 = vunpack.c.h.b16 %v58
  %v244 = vunpack.c.l.b16 %v59
  %v245 = vunpack.c.h.b16 %v59
  %v246 = vunpack.c.l.b16 %v60
  %v247 = vunpack.c.h.b16 %v60
  %v248 = vunpack.c.l.b16 %v61
  %v249 = vunpack.c.h.b16 %v61
  %v250 = vunpack.c.l.b16 %v62
  %v251 = vunpack.c.h.b16 %v62
  %v252 = vunpack.c.l.b16 %v63
  %v253 = vunpack.c.h.b16 %v63
  %v254 = vunpack.c.l.b16 %v64
  %v255 = vunpack.c.h.b16 %v64
  %v256 = vunpack.c.l.b16 %v65
  %v257 = vunpack.c.h.b16 %v65
  %v258 = vunpack.c.l.b16 %v66
  %v259 = vunpack.c.h.b16 %v66
  %v260 = vunpack.c.l.b16 %v67
  %v261 = vunpack.c.h.b16 %v67
  %v262 = vunpack.c.l.b16 %v68
  %v263 = vunpack.c.h.b16 %v68
  %v264 = vunpack.c.l.b16 %v69
  %v265 = vunpack.c.h.b16 %v69
  %v266 = vunpack.c.l.b16 %v70
  %v267 = vunpack.c.h.b16 %v70
  %v268 = vunpack.c.l.b16 %v71
  %v269 = vunpack.c.h.b16 %v71
  %v270 = vunpack.c.l.b16 %v72
  %v271 = vunpack.c.h.b16 %v72
  %v272 = vunpack.c.l.b16 %v73
  %v273 = vunpack.c.h.b16 %v73
  %v274 = vunpack.c.l.b16 %v74
  %v275 = vunpack.c.h.b16 %v74
  %v276 = vunpack.c.l.b16 %v75
  %v277 = vunpack.c.h.b16 %v75
  %v278 = vunpack.c.l.b16 %v76
  %v279 = vunpack.c.h.b16 %v76
  %v280 = vunpack.c.l.b16 %v77
  %v281 = vunpack.c.h.b16 %v77
  %v282 = vunpack.c.l.b16 %v78
  %v283 = vunpack.c.h.b16 %v78
  %v284 = vunpack.c.l.b16 %v79
  %v285 = vunpack.c.h.b16 %v79
  %v286 = vunpack.c.l.b16 %v80
  %v287 = vunpack.c.h.b16 %v80
  %v288 = vunpack.c.l.b16 %v81
  %v289 = vunpack.c.h.b16 %v81
  %v290 = vunpack.c.l.b16 %v82
  %v291 = vunpack.c.h.b16 %v82
  %v292 = vunpack.c.l.b16 %v83
  %v293 = vunpack.c.h.b16 %v83
  %v294 = vunpack.c.l.b16 %v84
  %v295 = vunpack.c.h.b16 %v84
  %v296 = vpack.c.b16 %v170, %v168
  %v297 = vpack.c.b16 %v171, %v169
  %v298 = vpack.c.b16 %v174, %v172
  %v299 = vpack.c.b16 %v175, %v173
  %v300 = vpack.c.b16 %v178, %v176
  %v301 = vpack.c.b16 %v179, %v177
  %v302 = vpack.c.b16 %v182, %v180
  %v303 = vpack.c.b16 %v183, %v181
  %v304 = vpack.c.b16 %v186, %v184
  %v305 = vpack.c.b16 %v187, %v185
  %v306 = vpack.c.b16 %v190, %v188
  %v307 = vpack.c.b16 %v191, %v189
  %v308 = vpack.c.b16 %v194, %v192
  %v309 = vpack.c.b16 %v195, %v193
  %v310 = vpack.c.b16 %v198, %v196
  %v311 = vpack.c.b16 %v199, %v197
  %v312 = vpack.c.b16 %v202, %v200
  %v313 = vpack.c.b16 %v203, %v201
  %v314 = vpack.c.b16 %v206, %v204
  %v315 = vpack.c.b16 %v207, %v205
  %v316 = vpack.c.b16 %v210, %v208
  %v317 = vpack.c.b16 %v211, %v209
  %v318 = vpack.c.b16 %v214, %v212
  %v319 = vpack.c.b16 %v215, %v213
  %v320 = vpack.c.b16 %v218, %v216
  %v321 = vpack.c.b16 %v219, %v217
  %v322 = vpack.c.b16 %v222, %v220
  %v323 = vpack.c.b16 %v223, %v221
  %v324 = vpack.c.b16 %v226, %v224
  %v325 = vpack.c.b16 %v227, %v225
  %v326 = vpack.c.b16 %v230, %v228
  %v327 = vpack.c.b16 %v231, %v229
  %v328 = vpack.c.b16 %v234, %v232
  %v329 = vpack.c.b16 %v235, %v233
  %v330 = vpack.c.b16 %v238, %v236
  %v331 = vpack.c.b16 %v239, %v237
  %v332 = vpack.c.b16 %v242, %v240
  %v333 = vpack.c.b16 %v243, %v241
  %v334 = vpack.c.b16 %v246, %v244
  %v335 = vpack.c.b16 %v247, %v245
  %v336 = vpack.c.b16 %v250, %v248
  %v337 = vpack.c.b16 %v251, %v249
  %v338 = vpack.c.b16 %v254, %v252
  %v339 = vpack.c.b16 %v255, %v253
  %v340 = vpack.c.b16 %v258, %v256
  %v341 = vpack.c.b16 %v259, %v257
  %v342 = vpack.c.b16 %v262, %v260
  %v343 = vpack.c.b16 %v263, %v261
  %v344 = vpack.c.b16 %v266, %v264
  %v345 = vpack.c.b16 %v267, %v265
  %v346 = vpack.c.b16 %v270, %v268
  %v347 = vpack.c.b16 %v271, %v269
  %v348 = vpack.c.b16 %v274, %v272
  %v349 = vpack.c.b16 %v275, %v273
  %v350 = vpack.c.b16 %v278, %v276
  %v351 = vpack.c.b16 %v279, %v277
  %v352 = vpack.c.b16 %v282, %v280
  %v353 = vpack.c.b16 %v283, %v281
  %v354 = vpack.c.b16 %v286, %v284
  %v355 = vpack.c.b16 %v287, %v285
  %v356 = vpack.c.b16 %v290, %v288
  %v357 = vpack.c.b16 %v291, %v289
  %v358 = vpack.c.b16 %v294, %v292
  %v359 = vpack.c.b16 %v295, %v293
  %v411 = vunpack.c.l.b16 %v85
  %v412 = vunpack.c.l.b16 %v86
  %v413 = vunpack.c.l.b16 %v87
  %v414 = vunpack.c.l.b16 %v88
  %v415 = vunpack.c.l.b16 %v89
  %v416 = vunpack.c.l.b16 %v90
  %v417 = vunpack.c.l.b16 %v91
  %v418 = vunpack.c.l.b16 %v92
  %v419 = vunpack.c.l.b16 %v93
  %v420 = vunpack.c.l.b16 %v94
  %v421 = vunpack.c.l.b16 %v95
  %v422 = vunpack.c.l.b16 %v96
  %v423 = vunpack.c.l.b16 %v97
  %v424 = vunpack.c.l.b16 %v98
  %v425 = vunpack.c.l.b16 %v99
  %v426 = vunpack.c.l.b16 %v100
  %v427 = vunpack.c.l.b16 %v101
  %v428 = vunpack.c.l.b16 %v102
  %v429 = vunpack.c.l.b16 %v103
  %v430 = vpack.c.b16 %v412, %v411
  %v431 = vpack.c.b16 %v414, %v413
  %v432 = vpack.c.b16 %v416, %v415
  %v433 = vpack.c.b16 %v418, %v417
  %v434 = vpack.c.b16 %v420, %v419
  %v435 = vpack.c.b16 %v422, %v421
  %v436 = vpack.c.b16 %v424, %v423
  %v437 = vpack.c.b16 %v426, %v425
  %v438 = vpack.c.b16 %v428, %v427
  %v439 = vpack.c.b16 %v429, %v429
  %vm449 = vcmask 154624
  %v451 = vsel %vm449, %v297, 0
  %v454 = vsel %vm449, %v299, 0
  %v457 = vsel %vm449, %v301, 0
  %v460 = vsel %vm449, %v303, 0
  %v463 = vsel %vm449, %v305, 0
  %v466 = vsel %vm449, %v307, 0
  %v469 = vsel %vm449, %v309, 0
  %v472 = vsel %vm449, %v311, 0
  %v475 = vsel %vm449, %v313, 0
  %v478 = vsel %vm449, %v315, 0
  %v481 = vsel %vm449, %v317, 0
  %v484 = vsel %vm449, %v319, 0
  %v487 = vsel %vm449, %v321, 0
  %v490 = vsel %vm449, %v323, 0
  %v493 = vsel %vm449, %v325, 0
  %v496 = vsel %vm449, %v327, 0
  %v499 = vsel %vm449, %v329, 0
  %v502 = vsel %vm449, %v331, 0
  %v505 = vsel %vm449, %v333, 0
  %v508 = vsel %vm449, %v335, 0
  %v511 = vsel %vm449, %v337, 0
  %v514 = vsel %vm449, %v339, 0
  %v517 = vsel %vm449, %v341, 0
  %v520 = vsel %vm449, %v343, 0
  %v523 = vsel %vm449, %v345, 0
  %v526 = vsel %vm449, %v347, 0
  %v529 = vsel %vm449, %v349, 0
  %v532 = vsel %vm449, %v351, 0
  %v535 = vsel %vm449, %v353, 0
  %v538 = vsel %vm449, %v355, 0
  %v541 = vsel %vm449, %v357, 0
  %v544 = vsel %vm449, %v359, 0
  %vm546 = vcmask 1040384
  %vm547 = vcmask 1041408
  %v548 = vsel %vm546, 4294967295, 65535
  %v549 = vsel %vm547, %v548, 0
  %v551 = vand.u32 %v439, %v549
  %553 = vmatpush.bf16.msra.mxu0 %v437
  %554 = vmatpush.bf16.msra.mxu0 %v436
  %555 = vmatpush.bf16.msra.mxu0 %v435
  %556 = vmatpush.bf16.msra.mxu0 %v434
  %557 = vmatpush.bf16.msra.mxu0 %v433
  %558 = vmatpush.bf16.msra.mxu0 %v432
  %559 = vmatpush.bf16.msra.mxu0 %v431
  %560 = vmatpush.bf16.msra.mxu0 %v430
  %561 = vmatmul.bf16.gmra.mxu0 %v296
  %v562 = vpop.f32.mrf.mxu0
  %v563 = vadd.f32 0.0, %v562
  %v564 = vpop.f32.mrf.mxu0
  %v565 = vadd.f32 0.0, %v564
  %566 = vmatmul.bf16.gmra.mxu0 %v298
  %v567 = vpop.f32.mrf.mxu0
  %v568 = vadd.f32 0.0, %v567
  %v569 = vpop.f32.mrf.mxu0
  %v570 = vadd.f32 0.0, %v569
  %571 = vmatmul.bf16.gmra.mxu0 %v300
  %v572 = vpop.f32.mrf.mxu0
  %v573 = vadd.f32 0.0, %v572
  %v574 = vpop.f32.mrf.mxu0
  %v575 = vadd.f32 0.0, %v574
  %576 = vmatmul.bf16.gmra.mxu0 %v302
  %v577 = vpop.f32.mrf.mxu0
  %v578 = vadd.f32 0.0, %v577
  %v579 = vpop.f32.mrf.mxu0
  %v580 = vadd.f32 0.0, %v579
  %581 = vmatmul.bf16.gmra.mxu0 %v304
  %v582 = vpop.f32.mrf.mxu0
  %v583 = vadd.f32 0.0, %v582
  %v584 = vpop.f32.mrf.mxu0
  %v585 = vadd.f32 0.0, %v584
  %586 = vmatmul.bf16.gmra.mxu0 %v306
  %v587 = vpop.f32.mrf.mxu0
  %v588 = vadd.f32 0.0, %v587
  %v589 = vpop.f32.mrf.mxu0
  %v590 = vadd.f32 0.0, %v589
  %591 = vmatmul.bf16.gmra.mxu0 %v308
  %v592 = vpop.f32.mrf.mxu0
  %v593 = vadd.f32 0.0, %v592
  %v594 = vpop.f32.mrf.mxu0
  %v595 = vadd.f32 0.0, %v594
  %596 = vmatmul.bf16.gmra.mxu0 %v310
  %v597 = vpop.f32.mrf.mxu0
  %v598 = vadd.f32 0.0, %v597
  %v599 = vpop.f32.mrf.mxu0
  %v600 = vadd.f32 0.0, %v599
  %601 = vmatmul.bf16.gmra.mxu0 %v312
  %v602 = vpop.f32.mrf.mxu0
  %v603 = vadd.f32 0.0, %v602
  %v604 = vpop.f32.mrf.mxu0
  %v605 = vadd.f32 0.0, %v604
  %606 = vmatmul.bf16.gmra.mxu0 %v314
  %v607 = vpop.f32.mrf.mxu0
  %v608 = vadd.f32 0.0, %v607
  %v609 = vpop.f32.mrf.mxu0
  %v610 = vadd.f32 0.0, %v609
  %611 = vmatmul.bf16.gmra.mxu0 %v316
  %v612 = vpop.f32.mrf.mxu0
  %v613 = vadd.f32 0.0, %v612
  %v614 = vpop.f32.mrf.mxu0
  %v615 = vadd.f32 0.0, %v614
  %616 = vmatmul.bf16.gmra.mxu0 %v318
  %v617 = vpop.f32.mrf.mxu0
  %v618 = vadd.f32 0.0, %v617
  %v619 = vpop.f32.mrf.mxu0
  %v620 = vadd.f32 0.0, %v619
  %621 = vmatmul.bf16.gmra.mxu0 %v320
  %v622 = vpop.f32.mrf.mxu0
  %v623 = vadd.f32 0.0, %v622
  %v624 = vpop.f32.mrf.mxu0
  %v625 = vadd.f32 0.0, %v624
  %626 = vmatmul.bf16.gmra.mxu0 %v322
  %v627 = vpop.f32.mrf.mxu0
  %v628 = vadd.f32 0.0, %v627
  %v629 = vpop.f32.mrf.mxu0
  %v630 = vadd.f32 0.0, %v629
  %631 = vmatmul.bf16.gmra.mxu0 %v324
  %v632 = vpop.f32.mrf.mxu0
  %v633 = vadd.f32 0.0, %v632
  %v634 = vpop.f32.mrf.mxu0
  %v635 = vadd.f32 0.0, %v634
  %636 = vmatmul.bf16.gmra.mxu0 %v326
  %v637 = vpop.f32.mrf.mxu0
  %v638 = vadd.f32 0.0, %v637
  %v639 = vpop.f32.mrf.mxu0
  %v640 = vadd.f32 0.0, %v639
  %641 = vmatmul.bf16.gmra.mxu0 %v328
  %v642 = vpop.f32.mrf.mxu0
  %v643 = vadd.f32 0.0, %v642
  %v644 = vpop.f32.mrf.mxu0
  %v645 = vadd.f32 0.0, %v644
  %646 = vmatmul.bf16.gmra.mxu0 %v330
  %v647 = vpop.f32.mrf.mxu0
  %v648 = vadd.f32 0.0, %v647
  %v649 = vpop.f32.mrf.mxu0
  %v650 = vadd.f32 0.0, %v649
  %651 = vmatmul.bf16.gmra.mxu0 %v332
  %v652 = vpop.f32.mrf.mxu0
  %v653 = vadd.f32 0.0, %v652
  %v654 = vpop.f32.mrf.mxu0
  %v655 = vadd.f32 0.0, %v654
  %656 = vmatmul.bf16.gmra.mxu0 %v334
  %v657 = vpop.f32.mrf.mxu0
  %v658 = vadd.f32 0.0, %v657
  %v659 = vpop.f32.mrf.mxu0
  %v660 = vadd.f32 0.0, %v659
  %661 = vmatmul.bf16.gmra.mxu0 %v336
  %v662 = vpop.f32.mrf.mxu0
  %v663 = vadd.f32 0.0, %v662
  %v664 = vpop.f32.mrf.mxu0
  %v665 = vadd.f32 0.0, %v664
  %666 = vmatmul.bf16.gmra.mxu0 %v338
  %v667 = vpop.f32.mrf.mxu0
  %v668 = vadd.f32 0.0, %v667
  %v669 = vpop.f32.mrf.mxu0
  %v670 = vadd.f32 0.0, %v669
  %671 = vmatmul.bf16.gmra.mxu0 %v340
  %v672 = vpop.f32.mrf.mxu0
  %v673 = vadd.f32 0.0, %v672
  %v674 = vpop.f32.mrf.mxu0
  %v675 = vadd.f32 0.0, %v674
  %676 = vmatmul.bf16.gmra.mxu0 %v342
  %v677 = vpop.f32.mrf.mxu0
  %v678 = vadd.f32 0.0, %v677
  %v679 = vpop.f32.mrf.mxu0
  %v680 = vadd.f32 0.0, %v679
  %681 = vmatmul.bf16.gmra.mxu0 %v344
  %v682 = vpop.f32.mrf.mxu0
  %v683 = vadd.f32 0.0, %v682
  %v684 = vpop.f32.mrf.mxu0
  %v685 = vadd.f32 0.0, %v684
  %686 = vmatmul.bf16.gmra.mxu0 %v346
  %v687 = vpop.f32.mrf.mxu0
  %v688 = vadd.f32 0.0, %v687
  %v689 = vpop.f32.mrf.mxu0
  %v690 = vadd.f32 0.0, %v689
  %691 = vmatmul.bf16.gmra.mxu0 %v348
  %v692 = vpop.f32.mrf.mxu0
  %v693 = vadd.f32 0.0, %v692
  %v694 = vpop.f32.mrf.mxu0
  %v695 = vadd.f32 0.0, %v694
  %696 = vmatmul.bf16.gmra.mxu0 %v350
  %v697 = vpop.f32.mrf.mxu0
  %v698 = vadd.f32 0.0, %v697
  %v699 = vpop.f32.mrf.mxu0
  %v700 = vadd.f32 0.0, %v699
  %701 = vmatmul.bf16.gmra.mxu0 %v352
  %v702 = vpop.f32.mrf.mxu0
  %v703 = vadd.f32 0.0, %v702
  %v704 = vpop.f32.mrf.mxu0
  %v705 = vadd.f32 0.0, %v704
  %706 = vmatmul.bf16.gmra.mxu0 %v354
  %v707 = vpop.f32.mrf.mxu0
  %v708 = vadd.f32 0.0, %v707
  %v709 = vpop.f32.mrf.mxu0
  %v710 = vadd.f32 0.0, %v709
  %711 = vmatmul.bf16.gmra.mxu0 %v356
  %v712 = vpop.f32.mrf.mxu0
  %v713 = vadd.f32 0.0, %v712
  %v714 = vpop.f32.mrf.mxu0
  %v715 = vadd.f32 0.0, %v714
  %716 = vmatmul.bf16.gmra.mxu0 %v358
  %v717 = vpop.f32.mrf.mxu0
  %v718 = vadd.f32 0.0, %v717
  %v719 = vpop.f32.mrf.mxu0
  %v720 = vadd.f32 0.0, %v719
  %721 = vdwg.mxu0
  %722 = vmatpush.bf16.msra.mxu0 0
  %723 = vmatpush.bf16.msra.mxu0 0
  %724 = vmatpush.bf16.msra.mxu0 0
  %725 = vmatpush.bf16.msra.mxu0 0
  %726 = vmatpush.bf16.msra.mxu0 0
  %727 = vmatpush.bf16.msra.mxu0 0
  %728 = vmatpush.bf16.msra.mxu0 %v551
  %729 = vmatpush.bf16.msra.mxu0 %v438
  %730 = vmatmul.bf16.gmra.mxu0 %v451
  %v731 = vpop.f32.mrf.mxu0
  %v732 = vadd.f32 %v563, %v731
  %v733 = vpop.f32.mrf.mxu0
  %v734 = vadd.f32 %v565, %v733
  %735 = vmatmul.bf16.gmra.mxu0 %v454
  %v736 = vpop.f32.mrf.mxu0
  %v737 = vadd.f32 %v568, %v736
  %v738 = vpop.f32.mrf.mxu0
  %v739 = vadd.f32 %v570, %v738
  %740 = vmatmul.bf16.gmra.mxu0 %v457
  %v741 = vpop.f32.mrf.mxu0
  %v742 = vadd.f32 %v573, %v741
  %v743 = vpop.f32.mrf.mxu0
  %v744 = vadd.f32 %v575, %v743
  %745 = vmatmul.bf16.gmra.mxu0 %v460
  %v746 = vpop.f32.mrf.mxu0
  %v747 = vadd.f32 %v578, %v746
  %v748 = vpop.f32.mrf.mxu0
  %v749 = vadd.f32 %v580, %v748
  %750 = vmatmul.bf16.gmra.mxu0 %v463
  %v751 = vpop.f32.mrf.mxu0
  %v752 = vadd.f32 %v583, %v751
  %v753 = vpop.f32.mrf.mxu0
  %v754 = vadd.f32 %v585, %v753
  %755 = vmatmul.bf16.gmra.mxu0 %v466
  %v756 = vpop.f32.mrf.mxu0
  %v757 = vadd.f32 %v588, %v756
  %v758 = vpop.f32.mrf.mxu0
  %v759 = vadd.f32 %v590, %v758
  %760 = vmatmul.bf16.gmra.mxu0 %v469
  %v761 = vpop.f32.mrf.mxu0
  %v762 = vadd.f32 %v593, %v761
  %v763 = vpop.f32.mrf.mxu0
  %v764 = vadd.f32 %v595, %v763
  %765 = vmatmul.bf16.gmra.mxu0 %v472
  %v766 = vpop.f32.mrf.mxu0
  %v767 = vadd.f32 %v598, %v766
  %v768 = vpop.f32.mrf.mxu0
  %v769 = vadd.f32 %v600, %v768
  %770 = vmatmul.bf16.gmra.mxu0 %v475
  %v771 = vpop.f32.mrf.mxu0
  %v772 = vadd.f32 %v603, %v771
  %v773 = vpop.f32.mrf.mxu0
  %v774 = vadd.f32 %v605, %v773
  %775 = vmatmul.bf16.gmra.mxu0 %v478
  %v776 = vpop.f32.mrf.mxu0
  %v777 = vadd.f32 %v608, %v776
  %v778 = vpop.f32.mrf.mxu0
  %v779 = vadd.f32 %v610, %v778
  %780 = vmatmul.bf16.gmra.mxu0 %v481
  %v781 = vpop.f32.mrf.mxu0
  %v782 = vadd.f32 %v613, %v781
  %v783 = vpop.f32.mrf.mxu0
  %v784 = vadd.f32 %v615, %v783
  %785 = vmatmul.bf16.gmra.mxu0 %v484
  %v786 = vpop.f32.mrf.mxu0
  %v787 = vadd.f32 %v618, %v786
  %v788 = vpop.f32.mrf.mxu0
  %v789 = vadd.f32 %v620, %v788
  %790 = vmatmul.bf16.gmra.mxu0 %v487
  %v791 = vpop.f32.mrf.mxu0
  %v792 = vadd.f32 %v623, %v791
  %v793 = vpop.f32.mrf.mxu0
  %v794 = vadd.f32 %v625, %v793
  %795 = vmatmul.bf16.gmra.mxu0 %v490
  %v796 = vpop.f32.mrf.mxu0
  %v797 = vadd.f32 %v628, %v796
  %v798 = vpop.f32.mrf.mxu0
  %v799 = vadd.f32 %v630, %v798
  %800 = vmatmul.bf16.gmra.mxu0 %v493
  %v801 = vpop.f32.mrf.mxu0
  %v802 = vadd.f32 %v633, %v801
  %v803 = vpop.f32.mrf.mxu0
  %v804 = vadd.f32 %v635, %v803
  %805 = vmatmul.bf16.gmra.mxu0 %v496
  %v806 = vpop.f32.mrf.mxu0
  %v807 = vadd.f32 %v638, %v806
  %v808 = vpop.f32.mrf.mxu0
  %v809 = vadd.f32 %v640, %v808
  %810 = vmatmul.bf16.gmra.mxu0 %v499
  %v811 = vpop.f32.mrf.mxu0
  %v812 = vadd.f32 %v643, %v811
  %v813 = vpop.f32.mrf.mxu0
  %v814 = vadd.f32 %v645, %v813
  %815 = vmatmul.bf16.gmra.mxu0 %v502
  %v816 = vpop.f32.mrf.mxu0
  %v817 = vadd.f32 %v648, %v816
  %v818 = vpop.f32.mrf.mxu0
  %v819 = vadd.f32 %v650, %v818
  %820 = vmatmul.bf16.gmra.mxu0 %v505
  %v821 = vpop.f32.mrf.mxu0
  %v822 = vadd.f32 %v653, %v821
  %v823 = vpop.f32.mrf.mxu0
  %v824 = vadd.f32 %v655, %v823
  %825 = vmatmul.bf16.gmra.mxu0 %v508
  %v826 = vpop.f32.mrf.mxu0
  %v827 = vadd.f32 %v658, %v826
  %v828 = vpop.f32.mrf.mxu0
  %v829 = vadd.f32 %v660, %v828
  %830 = vmatmul.bf16.gmra.mxu0 %v511
  %v831 = vpop.f32.mrf.mxu0
  %v832 = vadd.f32 %v663, %v831
  %v833 = vpop.f32.mrf.mxu0
  %v834 = vadd.f32 %v665, %v833
  %835 = vmatmul.bf16.gmra.mxu0 %v514
  %v836 = vpop.f32.mrf.mxu0
  %v837 = vadd.f32 %v668, %v836
  %v838 = vpop.f32.mrf.mxu0
  %v839 = vadd.f32 %v670, %v838
  %840 = vmatmul.bf16.gmra.mxu0 %v517
  %v841 = vpop.f32.mrf.mxu0
  %v842 = vadd.f32 %v673, %v841
  %v843 = vpop.f32.mrf.mxu0
  %v844 = vadd.f32 %v675, %v843
  %845 = vmatmul.bf16.gmra.mxu0 %v520
  %v846 = vpop.f32.mrf.mxu0
  %v847 = vadd.f32 %v678, %v846
  %v848 = vpop.f32.mrf.mxu0
  %v849 = vadd.f32 %v680, %v848
  %850 = vmatmul.bf16.gmra.mxu0 %v523
  %v851 = vpop.f32.mrf.mxu0
  %v852 = vadd.f32 %v683, %v851
  %v853 = vpop.f32.mrf.mxu0
  %v854 = vadd.f32 %v685, %v853
  %855 = vmatmul.bf16.gmra.mxu0 %v526
  %v856 = vpop.f32.mrf.mxu0
  %v857 = vadd.f32 %v688, %v856
  %v858 = vpop.f32.mrf.mxu0
  %v859 = vadd.f32 %v690, %v858
  %860 = vmatmul.bf16.gmra.mxu0 %v529
  %v861 = vpop.f32.mrf.mxu0
  %v862 = vadd.f32 %v693, %v861
  %v863 = vpop.f32.mrf.mxu0
  %v864 = vadd.f32 %v695, %v863
  %865 = vmatmul.bf16.gmra.mxu0 %v532
  %v866 = vpop.f32.mrf.mxu0
  %v867 = vadd.f32 %v698, %v866
  %v868 = vpop.f32.mrf.mxu0
  %v869 = vadd.f32 %v700, %v868
  %870 = vmatmul.bf16.gmra.mxu0 %v535
  %v871 = vpop.f32.mrf.mxu0
  %v872 = vadd.f32 %v703, %v871
  %v873 = vpop.f32.mrf.mxu0
  %v874 = vadd.f32 %v705, %v873
  %875 = vmatmul.bf16.gmra.mxu0 %v538
  %v876 = vpop.f32.mrf.mxu0
  %v877 = vadd.f32 %v708, %v876
  %v878 = vpop.f32.mrf.mxu0
  %v879 = vadd.f32 %v710, %v878
  %880 = vmatmul.bf16.gmra.mxu0 %v541
  %v881 = vpop.f32.mrf.mxu0
  %v882 = vadd.f32 %v713, %v881
  %v883 = vpop.f32.mrf.mxu0
  %v884 = vadd.f32 %v715, %v883
  %885 = vmatmul.bf16.gmra.mxu0 %v544
  %v886 = vpop.f32.mrf.mxu0
  %v887 = vadd.f32 %v718, %v886
  %v888 = vpop.f32.mrf.mxu0
  %v889 = vadd.f32 %v720, %v888
  %890 = vdwg.mxu0
  %v891 = vld [vmem:[%s2] sm:$0x1]
  %v892 = vld [vmem:[%s3] sm:$0x1]
  %vm893 = vcmask 523264
  %v894 = vsel %vm893, %v732, 0.0
  %v895 = vsel %vm893, %v734, 0.0
  %v896 = vadd.f32 %v894, %v895
  %v897 = vsel %vm893, %v737, 0.0
  %v898 = vadd.f32 %v896, %v897
  %v899 = vsel %vm893, %v739, 0.0
  %v900 = vadd.f32 %v898, %v899
  %v901 = vsel %vm893, %v742, 0.0
  %v902 = vadd.f32 %v900, %v901
  %v903 = vsel %vm893, %v744, 0.0
  %v904 = vadd.f32 %v902, %v903
  %v905 = vsel %vm893, %v747, 0.0
  %v906 = vadd.f32 %v904, %v905
  %v907 = vsel %vm893, %v749, 0.0
  %v908 = vadd.f32 %v906, %v907
  %v909 = vsel %vm893, %v752, 0.0
  %v910 = vadd.f32 %v908, %v909
  %v911 = vsel %vm893, %v754, 0.0
  %v912 = vadd.f32 %v910, %v911
  %v913 = vsel %vm893, %v757, 0.0
  %v914 = vadd.f32 %v912, %v913
  %v915 = vsel %vm893, %v759, 0.0
  %v916 = vadd.f32 %v914, %v915
  %v917 = vsel %vm893, %v762, 0.0
  %v918 = vadd.f32 %v916, %v917
  %v919 = vsel %vm893, %v764, 0.0
  %v920 = vadd.f32 %v918, %v919
  %v921 = vsel %vm893, %v767, 0.0
  %v922 = vadd.f32 %v920, %v921
  %v923 = vsel %vm893, %v769, 0.0
  %v924 = vadd.f32 %v922, %v923
  %v925 = vsel %vm893, %v772, 0.0
  %v926 = vadd.f32 %v924, %v925
  %v927 = vsel %vm893, %v774, 0.0
  %v928 = vadd.f32 %v926, %v927
  %v929 = vsel %vm893, %v777, 0.0
  %v930 = vadd.f32 %v928, %v929
  %v931 = vsel %vm893, %v779, 0.0
  %v932 = vadd.f32 %v930, %v931
  %v933 = vsel %vm893, %v782, 0.0
  %v934 = vadd.f32 %v932, %v933
  %v935 = vsel %vm893, %v784, 0.0
  %v936 = vadd.f32 %v934, %v935
  %v937 = vsel %vm893, %v787, 0.0
  %v938 = vadd.f32 %v936, %v937
  %v939 = vsel %vm893, %v789, 0.0
  %v940 = vadd.f32 %v938, %v939
  %v941 = vsel %vm893, %v792, 0.0
  %v942 = vadd.f32 %v940, %v941
  %v943 = vsel %vm893, %v794, 0.0
  %v944 = vadd.f32 %v942, %v943
  %v945 = vsel %vm893, %v797, 0.0
  %v946 = vadd.f32 %v944, %v945
  %v947 = vsel %vm893, %v799, 0.0
  %v948 = vadd.f32 %v946, %v947
  %v949 = vsel %vm893, %v802, 0.0
  %v950 = vadd.f32 %v948, %v949
  %v951 = vsel %vm893, %v804, 0.0
  %v952 = vadd.f32 %v950, %v951
  %v953 = vsel %vm893, %v807, 0.0
  %v954 = vadd.f32 %v952, %v953
  %v955 = vsel %vm893, %v809, 0.0
  %v956 = vadd.f32 %v954, %v955
  %v957 = vsel %vm893, %v812, 0.0
  %v958 = vadd.f32 %v956, %v957
  %v959 = vsel %vm893, %v814, 0.0
  %v960 = vadd.f32 %v958, %v959
  %v961 = vsel %vm893, %v817, 0.0
  %v962 = vadd.f32 %v960, %v961
  %v963 = vsel %vm893, %v819, 0.0
  %v964 = vadd.f32 %v962, %v963
  %v965 = vsel %vm893, %v822, 0.0
  %v966 = vadd.f32 %v964, %v965
  %v967 = vsel %vm893, %v824, 0.0
  %v968 = vadd.f32 %v966, %v967
  %v969 = vsel %vm893, %v827, 0.0
  %v970 = vadd.f32 %v968, %v969
  %v971 = vsel %vm893, %v829, 0.0
  %v972 = vadd.f32 %v970, %v971
  %v973 = vsel %vm893, %v832, 0.0
  %v974 = vadd.f32 %v972, %v973
  %v975 = vsel %vm893, %v834, 0.0
  %v976 = vadd.f32 %v974, %v975
  %v977 = vsel %vm893, %v837, 0.0
  %v978 = vadd.f32 %v976, %v977
  %v979 = vsel %vm893, %v839, 0.0
  %v980 = vadd.f32 %v978, %v979
  %v981 = vsel %vm893, %v842, 0.0
  %v982 = vadd.f32 %v980, %v981
  %v983 = vsel %vm893, %v844, 0.0
  %v984 = vadd.f32 %v982, %v983
  %v985 = vsel %vm893, %v847, 0.0
  %v986 = vadd.f32 %v984, %v985
  %v987 = vsel %vm893, %v849, 0.0
  %v988 = vadd.f32 %v986, %v987
  %v989 = vsel %vm893, %v852, 0.0
  %v990 = vadd.f32 %v988, %v989
  %v991 = vsel %vm893, %v854, 0.0
  %v992 = vadd.f32 %v990, %v991
  %v993 = vsel %vm893, %v857, 0.0
  %v994 = vadd.f32 %v992, %v993
  %v995 = vsel %vm893, %v859, 0.0
  %v996 = vadd.f32 %v994, %v995
  %v997 = vsel %vm893, %v862, 0.0
  %v998 = vadd.f32 %v996, %v997
  %v999 = vsel %vm893, %v864, 0.0
  %v1000 = vadd.f32 %v998, %v999
  %v1001 = vsel %vm893, %v867, 0.0
  %v1002 = vadd.f32 %v1000, %v1001
  %v1003 = vsel %vm893, %v869, 0.0
  %v1004 = vadd.f32 %v1002, %v1003
  %v1005 = vsel %vm893, %v872, 0.0
  %v1006 = vadd.f32 %v1004, %v1005
  %v1007 = vsel %vm893, %v874, 0.0
  %v1008 = vadd.f32 %v1006, %v1007
  %v1009 = vsel %vm893, %v877, 0.0
  %v1010 = vadd.f32 %v1008, %v1009
  %v1011 = vsel %vm893, %v879, 0.0
  %v1012 = vadd.f32 %v1010, %v1011
  %v1013 = vsel %vm893, %v882, 0.0
  %v1014 = vadd.f32 %v1012, %v1013
  %v1015 = vsel %vm893, %v884, 0.0
  %v1016 = vadd.f32 %v1014, %v1015
  %v1017 = vsel %vm893, %v887, 0.0
  %v1018 = vadd.f32 %v1016, %v1017
  %v1019 = vsel %vm893, %v889, 0.0
  %v1020 = vadd.f32 %v1018, %v1019
  %v1021 = vrot.slane %v1020, 4
  %v1022 = vadd.f32 %v1020, %v1021
  %v1023 = vrot.slane %v1022, 2
  %v1024 = vadd.f32 %v1022, %v1023
  %v1025 = vrot.slane %v1024, 1
  %v1026 = vadd.f32 %v1024, %v1025
  %v1027 = vrcp.pop 512.0
  %v1028 = vmul.f32 512.0, %v1027
  %v1029 = vsub.f32 1.0, %v1028
  %v1030 = vmul.f32 %v1027, %v1029
  %v1031 = vadd.f32 %v1027, %v1030
  %vm1032 = vweird.f32 %v1027
  %v1033 = vsel %vm1032, %v1027, %v1031
  %v1034 = vmul.f32 %v1026, %v1033
  %v1035 = vsub.f32 %v732, %v1034
  %v1036 = vsub.f32 %v734, %v1034
  %v1037 = vsub.f32 %v737, %v1034
  %v1038 = vsub.f32 %v739, %v1034
  %v1039 = vsub.f32 %v742, %v1034
  %v1040 = vsub.f32 %v744, %v1034
  %v1041 = vsub.f32 %v747, %v1034
  %v1042 = vsub.f32 %v749, %v1034
  %v1043 = vsub.f32 %v752, %v1034
  %v1044 = vsub.f32 %v754, %v1034
  %v1045 = vsub.f32 %v757, %v1034
  %v1046 = vsub.f32 %v759, %v1034
  %v1047 = vsub.f32 %v762, %v1034
  %v1048 = vsub.f32 %v764, %v1034
  %v1049 = vsub.f32 %v767, %v1034
  %v1050 = vsub.f32 %v769, %v1034
  %v1051 = vsub.f32 %v772, %v1034
  %v1052 = vsub.f32 %v774, %v1034
  %v1053 = vsub.f32 %v777, %v1034
  %v1054 = vsub.f32 %v779, %v1034
  %v1055 = vsub.f32 %v782, %v1034
  %v1056 = vsub.f32 %v784, %v1034
  %v1057 = vsub.f32 %v787, %v1034
  %v1058 = vsub.f32 %v789, %v1034
  %v1059 = vsub.f32 %v792, %v1034
  %v1060 = vsub.f32 %v794, %v1034
  %v1061 = vsub.f32 %v797, %v1034
  %v1062 = vsub.f32 %v799, %v1034
  %v1063 = vsub.f32 %v802, %v1034
  %v1064 = vsub.f32 %v804, %v1034
  %v1065 = vsub.f32 %v807, %v1034
  %v1066 = vsub.f32 %v809, %v1034
  %v1067 = vsub.f32 %v812, %v1034
  %v1068 = vsub.f32 %v814, %v1034
  %v1069 = vsub.f32 %v817, %v1034
  %v1070 = vsub.f32 %v819, %v1034
  %v1071 = vsub.f32 %v822, %v1034
  %v1072 = vsub.f32 %v824, %v1034
  %v1073 = vsub.f32 %v827, %v1034
  %v1074 = vsub.f32 %v829, %v1034
  %v1075 = vsub.f32 %v832, %v1034
  %v1076 = vsub.f32 %v834, %v1034
  %v1077 = vsub.f32 %v837, %v1034
  %v1078 = vsub.f32 %v839, %v1034
  %v1079 = vsub.f32 %v842, %v1034
  %v1080 = vsub.f32 %v844, %v1034
  %v1081 = vsub.f32 %v847, %v1034
  %v1082 = vsub.f32 %v849, %v1034
  %v1083 = vsub.f32 %v852, %v1034
  %v1084 = vsub.f32 %v854, %v1034
  %v1085 = vsub.f32 %v857, %v1034
  %v1086 = vsub.f32 %v859, %v1034
  %v1087 = vsub.f32 %v862, %v1034
  %v1088 = vsub.f32 %v864, %v1034
  %v1089 = vsub.f32 %v867, %v1034
  %v1090 = vsub.f32 %v869, %v1034
  %v1091 = vsub.f32 %v872, %v1034
  %v1092 = vsub.f32 %v874, %v1034
  %v1093 = vsub.f32 %v877, %v1034
  %v1094 = vsub.f32 %v879, %v1034
  %v1095 = vsub.f32 %v882, %v1034
  %v1096 = vsub.f32 %v884, %v1034
  %v1097 = vsub.f32 %v887, %v1034
  %v1098 = vsub.f32 %v889, %v1034
  %v1099 = vmul.f32 %v1035, %v1035
  %v1100 = vmul.f32 %v1036, %v1036
  %v1101 = vmul.f32 %v1037, %v1037
  %v1102 = vmul.f32 %v1038, %v1038
  %v1103 = vmul.f32 %v1039, %v1039
  %v1104 = vmul.f32 %v1040, %v1040
  %v1105 = vmul.f32 %v1041, %v1041
  %v1106 = vmul.f32 %v1042, %v1042
  %v1107 = vmul.f32 %v1043, %v1043
  %v1108 = vmul.f32 %v1044, %v1044
  %v1109 = vmul.f32 %v1045, %v1045
  %v1110 = vmul.f32 %v1046, %v1046
  %v1111 = vmul.f32 %v1047, %v1047
  %v1112 = vmul.f32 %v1048, %v1048
  %v1113 = vmul.f32 %v1049, %v1049
  %v1114 = vmul.f32 %v1050, %v1050
  %v1115 = vmul.f32 %v1051, %v1051
  %v1116 = vmul.f32 %v1052, %v1052
  %v1117 = vmul.f32 %v1053, %v1053
  %v1118 = vmul.f32 %v1054, %v1054
  %v1119 = vmul.f32 %v1055, %v1055
  %v1120 = vmul.f32 %v1056, %v1056
  %v1121 = vmul.f32 %v1057, %v1057
  %v1122 = vmul.f32 %v1058, %v1058
  %v1123 = vmul.f32 %v1059, %v1059
  %v1124 = vmul.f32 %v1060, %v1060
  %v1125 = vmul.f32 %v1061, %v1061
  %v1126 = vmul.f32 %v1062, %v1062
  %v1127 = vmul.f32 %v1063, %v1063
  %v1128 = vmul.f32 %v1064, %v1064
  %v1129 = vmul.f32 %v1065, %v1065
  %v1130 = vmul.f32 %v1066, %v1066
  %v1131 = vmul.f32 %v1067, %v1067
  %v1132 = vmul.f32 %v1068, %v1068
  %v1133 = vmul.f32 %v1069, %v1069
  %v1134 = vmul.f32 %v1070, %v1070
  %v1135 = vmul.f32 %v1071, %v1071
  %v1136 = vmul.f32 %v1072, %v1072
  %v1137 = vmul.f32 %v1073, %v1073
  %v1138 = vmul.f32 %v1074, %v1074
  %v1139 = vmul.f32 %v1075, %v1075
  %v1140 = vmul.f32 %v1076, %v1076
  %v1141 = vmul.f32 %v1077, %v1077
  %v1142 = vmul.f32 %v1078, %v1078
  %v1143 = vmul.f32 %v1079, %v1079
  %v1144 = vmul.f32 %v1080, %v1080
  %v1145 = vmul.f32 %v1081, %v1081
  %v1146 = vmul.f32 %v1082, %v1082
  %v1147 = vmul.f32 %v1083, %v1083
  %v1148 = vmul.f32 %v1084, %v1084
  %v1149 = vmul.f32 %v1085, %v1085
  %v1150 = vmul.f32 %v1086, %v1086
  %v1151 = vmul.f32 %v1087, %v1087
  %v1152 = vmul.f32 %v1088, %v1088
  %v1153 = vmul.f32 %v1089, %v1089
  %v1154 = vmul.f32 %v1090, %v1090
  %v1155 = vmul.f32 %v1091, %v1091
  %v1156 = vmul.f32 %v1092, %v1092
  %v1157 = vmul.f32 %v1093, %v1093
  %v1158 = vmul.f32 %v1094, %v1094
  %v1159 = vmul.f32 %v1095, %v1095
  %v1160 = vmul.f32 %v1096, %v1096
  %v1161 = vmul.f32 %v1097, %v1097
  %v1162 = vmul.f32 %v1098, %v1098
  %v1163 = vsel %vm893, %v1099, 0.0
  %v1164 = vsel %vm893, %v1100, 0.0
  %v1165 = vadd.f32 %v1163, %v1164
  %v1166 = vsel %vm893, %v1101, 0.0
  %v1167 = vadd.f32 %v1165, %v1166
  %v1168 = vsel %vm893, %v1102, 0.0
  %v1169 = vadd.f32 %v1167, %v1168
  %v1170 = vsel %vm893, %v1103, 0.0
  %v1171 = vadd.f32 %v1169, %v1170
  %v1172 = vsel %vm893, %v1104, 0.0
  %v1173 = vadd.f32 %v1171, %v1172
  %v1174 = vsel %vm893, %v1105, 0.0
  %v1175 = vadd.f32 %v1173, %v1174
  %v1176 = vsel %vm893, %v1106, 0.0
  %v1177 = vadd.f32 %v1175, %v1176
  %v1178 = vsel %vm893, %v1107, 0.0
  %v1179 = vadd.f32 %v1177, %v1178
  %v1180 = vsel %vm893, %v1108, 0.0
  %v1181 = vadd.f32 %v1179, %v1180
  %v1182 = vsel %vm893, %v1109, 0.0
  %v1183 = vadd.f32 %v1181, %v1182
  %v1184 = vsel %vm893, %v1110, 0.0
  %v1185 = vadd.f32 %v1183, %v1184
  %v1186 = vsel %vm893, %v1111, 0.0
  %v1187 = vadd.f32 %v1185, %v1186
  %v1188 = vsel %vm893, %v1112, 0.0
  %v1189 = vadd.f32 %v1187, %v1188
  %v1190 = vsel %vm893, %v1113, 0.0
  %v1191 = vadd.f32 %v1189, %v1190
  %v1192 = vsel %vm893, %v1114, 0.0
  %v1193 = vadd.f32 %v1191, %v1192
  %v1194 = vsel %vm893, %v1115, 0.0
  %v1195 = vadd.f32 %v1193, %v1194
  %v1196 = vsel %vm893, %v1116, 0.0
  %v1197 = vadd.f32 %v1195, %v1196
  %v1198 = vsel %vm893, %v1117, 0.0
  %v1199 = vadd.f32 %v1197, %v1198
  %v1200 = vsel %vm893, %v1118, 0.0
  %v1201 = vadd.f32 %v1199, %v1200
  %v1202 = vsel %vm893, %v1119, 0.0
  %v1203 = vadd.f32 %v1201, %v1202
  %v1204 = vsel %vm893, %v1120, 0.0
  %v1205 = vadd.f32 %v1203, %v1204
  %v1206 = vsel %vm893, %v1121, 0.0
  %v1207 = vadd.f32 %v1205, %v1206
  %v1208 = vsel %vm893, %v1122, 0.0
  %v1209 = vadd.f32 %v1207, %v1208
  %v1210 = vsel %vm893, %v1123, 0.0
  %v1211 = vadd.f32 %v1209, %v1210
  %v1212 = vsel %vm893, %v1124, 0.0
  %v1213 = vadd.f32 %v1211, %v1212
  %v1214 = vsel %vm893, %v1125, 0.0
  %v1215 = vadd.f32 %v1213, %v1214
  %v1216 = vsel %vm893, %v1126, 0.0
  %v1217 = vadd.f32 %v1215, %v1216
  %v1218 = vsel %vm893, %v1127, 0.0
  %v1219 = vadd.f32 %v1217, %v1218
  %v1220 = vsel %vm893, %v1128, 0.0
  %v1221 = vadd.f32 %v1219, %v1220
  %v1222 = vsel %vm893, %v1129, 0.0
  %v1223 = vadd.f32 %v1221, %v1222
  %v1224 = vsel %vm893, %v1130, 0.0
  %v1225 = vadd.f32 %v1223, %v1224
  %v1226 = vsel %vm893, %v1131, 0.0
  %v1227 = vadd.f32 %v1225, %v1226
  %v1228 = vsel %vm893, %v1132, 0.0
  %v1229 = vadd.f32 %v1227, %v1228
  %v1230 = vsel %vm893, %v1133, 0.0
  %v1231 = vadd.f32 %v1229, %v1230
  %v1232 = vsel %vm893, %v1134, 0.0
  %v1233 = vadd.f32 %v1231, %v1232
  %v1234 = vsel %vm893, %v1135, 0.0
  %v1235 = vadd.f32 %v1233, %v1234
  %v1236 = vsel %vm893, %v1136, 0.0
  %v1237 = vadd.f32 %v1235, %v1236
  %v1238 = vsel %vm893, %v1137, 0.0
  %v1239 = vadd.f32 %v1237, %v1238
  %v1240 = vsel %vm893, %v1138, 0.0
  %v1241 = vadd.f32 %v1239, %v1240
  %v1242 = vsel %vm893, %v1139, 0.0
  %v1243 = vadd.f32 %v1241, %v1242
  %v1244 = vsel %vm893, %v1140, 0.0
  %v1245 = vadd.f32 %v1243, %v1244
  %v1246 = vsel %vm893, %v1141, 0.0
  %v1247 = vadd.f32 %v1245, %v1246
  %v1248 = vsel %vm893, %v1142, 0.0
  %v1249 = vadd.f32 %v1247, %v1248
  %v1250 = vsel %vm893, %v1143, 0.0
  %v1251 = vadd.f32 %v1249, %v1250
  %v1252 = vsel %vm893, %v1144, 0.0
  %v1253 = vadd.f32 %v1251, %v1252
  %v1254 = vsel %vm893, %v1145, 0.0
  %v1255 = vadd.f32 %v1253, %v1254
  %v1256 = vsel %vm893, %v1146, 0.0
  %v1257 = vadd.f32 %v1255, %v1256
  %v1258 = vsel %vm893, %v1147, 0.0
  %v1259 = vadd.f32 %v1257, %v1258
  %v1260 = vsel %vm893, %v1148, 0.0
  %v1261 = vadd.f32 %v1259, %v1260
  %v1262 = vsel %vm893, %v1149, 0.0
  %v1263 = vadd.f32 %v1261, %v1262
  %v1264 = vsel %vm893, %v1150, 0.0
  %v1265 = vadd.f32 %v1263, %v1264
  %v1266 = vsel %vm893, %v1151, 0.0
  %v1267 = vadd.f32 %v1265, %v1266
  %v1268 = vsel %vm893, %v1152, 0.0
  %v1269 = vadd.f32 %v1267, %v1268
  %v1270 = vsel %vm893, %v1153, 0.0
  %v1271 = vadd.f32 %v1269, %v1270
  %v1272 = vsel %vm893, %v1154, 0.0
  %v1273 = vadd.f32 %v1271, %v1272
  %v1274 = vsel %vm893, %v1155, 0.0
  %v1275 = vadd.f32 %v1273, %v1274
  %v1276 = vsel %vm893, %v1156, 0.0
  %v1277 = vadd.f32 %v1275, %v1276
  %v1278 = vsel %vm893, %v1157, 0.0
  %v1279 = vadd.f32 %v1277, %v1278
  %v1280 = vsel %vm893, %v1158, 0.0
  %v1281 = vadd.f32 %v1279, %v1280
  %v1282 = vsel %vm893, %v1159, 0.0
  %v1283 = vadd.f32 %v1281, %v1282
  %v1284 = vsel %vm893, %v1160, 0.0
  %v1285 = vadd.f32 %v1283, %v1284
  %v1286 = vsel %vm893, %v1161, 0.0
  %v1287 = vadd.f32 %v1285, %v1286
  %v1288 = vsel %vm893, %v1162, 0.0
  %v1289 = vadd.f32 %v1287, %v1288
  %v1290 = vrot.slane %v1289, 4
  %v1291 = vadd.f32 %v1289, %v1290
  %v1292 = vrot.slane %v1291, 2
  %v1293 = vadd.f32 %v1291, %v1292
  %v1294 = vrot.slane %v1293, 1
  %v1295 = vadd.f32 %v1293, %v1294
  %v1296 = vmul.f32 %v1295, %v1033
  %v1297 = vadd.f32 %v1296, 1e-05
  %v1298 = vrsqrt.pop %v1297
  %v1299 = vmul.f32 %v1298, %v1297
  %v1300 = vmul.f32 %v1299, %v1298
  %v1301 = vmul.f32 0.5, %v1300
  %v1302 = vsub.f32 1.5, %v1301
  %v1303 = vmul.f32 %v1298, %v1302
  %vm1304 = vweird.f32 %v1297
  %vm1305 = vweird.f32 %v1298
  %vm1306 = vmor %vm1304, %vm1305
  %v1307 = vsel %vm1306, %v1298, %v1303
  %v1308 = vmul.f32 %v891, %v1307
  %v1310 = vperm.slane %v1308, 0
  %v1312 = vmul.f32 %v1035, %v1310
  %v1313 = vmul.f32 %v1036, %v1310
  %v1314 = vmul.f32 %v1037, %v1310
  %v1315 = vmul.f32 %v1038, %v1310
  %v1316 = vmul.f32 %v1039, %v1310
  %v1317 = vmul.f32 %v1040, %v1310
  %v1318 = vmul.f32 %v1041, %v1310
  %v1319 = vmul.f32 %v1042, %v1310
  %v1320 = vmul.f32 %v1043, %v1310
  %v1321 = vmul.f32 %v1044, %v1310
  %v1322 = vmul.f32 %v1045, %v1310
  %v1323 = vmul.f32 %v1046, %v1310
  %v1324 = vmul.f32 %v1047, %v1310
  %v1325 = vmul.f32 %v1048, %v1310
  %v1326 = vmul.f32 %v1049, %v1310
  %v1327 = vmul.f32 %v1050, %v1310
  %v1328 = vmul.f32 %v1051, %v1310
  %v1329 = vmul.f32 %v1052, %v1310
  %v1330 = vmul.f32 %v1053, %v1310
  %v1331 = vmul.f32 %v1054, %v1310
  %v1332 = vmul.f32 %v1055, %v1310
  %v1333 = vmul.f32 %v1056, %v1310
  %v1334 = vmul.f32 %v1057, %v1310
  %v1335 = vmul.f32 %v1058, %v1310
  %v1336 = vmul.f32 %v1059, %v1310
  %v1337 = vmul.f32 %v1060, %v1310
  %v1338 = vmul.f32 %v1061, %v1310
  %v1339 = vmul.f32 %v1062, %v1310
  %v1340 = vmul.f32 %v1063, %v1310
  %v1341 = vmul.f32 %v1064, %v1310
  %v1342 = vmul.f32 %v1065, %v1310
  %v1343 = vmul.f32 %v1066, %v1310
  %v1344 = vmul.f32 %v1067, %v1310
  %v1345 = vmul.f32 %v1068, %v1310
  %v1346 = vmul.f32 %v1069, %v1310
  %v1347 = vmul.f32 %v1070, %v1310
  %v1348 = vmul.f32 %v1071, %v1310
  %v1349 = vmul.f32 %v1072, %v1310
  %v1350 = vmul.f32 %v1073, %v1310
  %v1351 = vmul.f32 %v1074, %v1310
  %v1352 = vmul.f32 %v1075, %v1310
  %v1353 = vmul.f32 %v1076, %v1310
  %v1354 = vmul.f32 %v1077, %v1310
  %v1355 = vmul.f32 %v1078, %v1310
  %v1356 = vmul.f32 %v1079, %v1310
  %v1357 = vmul.f32 %v1080, %v1310
  %v1358 = vmul.f32 %v1081, %v1310
  %v1359 = vmul.f32 %v1082, %v1310
  %v1360 = vmul.f32 %v1083, %v1310
  %v1361 = vmul.f32 %v1084, %v1310
  %v1362 = vmul.f32 %v1085, %v1310
  %v1363 = vmul.f32 %v1086, %v1310
  %v1364 = vmul.f32 %v1087, %v1310
  %v1365 = vmul.f32 %v1088, %v1310
  %v1366 = vmul.f32 %v1089, %v1310
  %v1367 = vmul.f32 %v1090, %v1310
  %v1368 = vmul.f32 %v1091, %v1310
  %v1369 = vmul.f32 %v1092, %v1310
  %v1370 = vmul.f32 %v1093, %v1310
  %v1371 = vmul.f32 %v1094, %v1310
  %v1372 = vmul.f32 %v1095, %v1310
  %v1373 = vmul.f32 %v1096, %v1310
  %v1374 = vmul.f32 %v1097, %v1310
  %v1375 = vmul.f32 %v1098, %v1310
  %v1377 = vperm.slane %v892, 0
  %v1379 = vadd.f32 %v1312, %v1377
  %v1380 = vadd.f32 %v1313, %v1377
  %v1381 = vadd.f32 %v1314, %v1377
  %v1382 = vadd.f32 %v1315, %v1377
  %v1383 = vadd.f32 %v1316, %v1377
  %v1384 = vadd.f32 %v1317, %v1377
  %v1385 = vadd.f32 %v1318, %v1377
  %v1386 = vadd.f32 %v1319, %v1377
  %v1387 = vadd.f32 %v1320, %v1377
  %v1388 = vadd.f32 %v1321, %v1377
  %v1389 = vadd.f32 %v1322, %v1377
  %v1390 = vadd.f32 %v1323, %v1377
  %v1391 = vadd.f32 %v1324, %v1377
  %v1392 = vadd.f32 %v1325, %v1377
  %v1393 = vadd.f32 %v1326, %v1377
  %v1394 = vadd.f32 %v1327, %v1377
  %v1395 = vadd.f32 %v1328, %v1377
  %v1396 = vadd.f32 %v1329, %v1377
  %v1397 = vadd.f32 %v1330, %v1377
  %v1398 = vadd.f32 %v1331, %v1377
  %v1399 = vadd.f32 %v1332, %v1377
  %v1400 = vadd.f32 %v1333, %v1377
  %v1401 = vadd.f32 %v1334, %v1377
  %v1402 = vadd.f32 %v1335, %v1377
  %v1403 = vadd.f32 %v1336, %v1377
  %v1404 = vadd.f32 %v1337, %v1377
  %v1405 = vadd.f32 %v1338, %v1377
  %v1406 = vadd.f32 %v1339, %v1377
  %v1407 = vadd.f32 %v1340, %v1377
  %v1408 = vadd.f32 %v1341, %v1377
  %v1409 = vadd.f32 %v1342, %v1377
  %v1410 = vadd.f32 %v1343, %v1377
  %v1411 = vadd.f32 %v1344, %v1377
  %v1412 = vadd.f32 %v1345, %v1377
  %v1413 = vadd.f32 %v1346, %v1377
  %v1414 = vadd.f32 %v1347, %v1377
  %v1415 = vadd.f32 %v1348, %v1377
  %v1416 = vadd.f32 %v1349, %v1377
  %v1417 = vadd.f32 %v1350, %v1377
  %v1418 = vadd.f32 %v1351, %v1377
  %v1419 = vadd.f32 %v1352, %v1377
  %v1420 = vadd.f32 %v1353, %v1377
  %v1421 = vadd.f32 %v1354, %v1377
  %v1422 = vadd.f32 %v1355, %v1377
  %v1423 = vadd.f32 %v1356, %v1377
  %v1424 = vadd.f32 %v1357, %v1377
  %v1425 = vadd.f32 %v1358, %v1377
  %v1426 = vadd.f32 %v1359, %v1377
  %v1427 = vadd.f32 %v1360, %v1377
  %v1428 = vadd.f32 %v1361, %v1377
  %v1429 = vadd.f32 %v1362, %v1377
  %v1430 = vadd.f32 %v1363, %v1377
  %v1431 = vadd.f32 %v1364, %v1377
  %v1432 = vadd.f32 %v1365, %v1377
  %v1433 = vadd.f32 %v1366, %v1377
  %v1434 = vadd.f32 %v1367, %v1377
  %v1435 = vadd.f32 %v1368, %v1377
  %v1436 = vadd.f32 %v1369, %v1377
  %v1437 = vadd.f32 %v1370, %v1377
  %v1438 = vadd.f32 %v1371, %v1377
  %v1439 = vadd.f32 %v1372, %v1377
  %v1440 = vadd.f32 %v1373, %v1377
  %v1441 = vadd.f32 %v1374, %v1377
  %v1442 = vadd.f32 %v1375, %v1377
  %v1443 = vmax.f32 %v1379, 0.0
  %v1444 = vmax.f32 %v1380, 0.0
  %v1445 = vmax.f32 %v1381, 0.0
  %v1446 = vmax.f32 %v1382, 0.0
  %v1447 = vmax.f32 %v1383, 0.0
  %v1448 = vmax.f32 %v1384, 0.0
  %v1449 = vmax.f32 %v1385, 0.0
  %v1450 = vmax.f32 %v1386, 0.0
  %v1451 = vmax.f32 %v1387, 0.0
  %v1452 = vmax.f32 %v1388, 0.0
  %v1453 = vmax.f32 %v1389, 0.0
  %v1454 = vmax.f32 %v1390, 0.0
  %v1455 = vmax.f32 %v1391, 0.0
  %v1456 = vmax.f32 %v1392, 0.0
  %v1457 = vmax.f32 %v1393, 0.0
  %v1458 = vmax.f32 %v1394, 0.0
  %v1459 = vmax.f32 %v1395, 0.0
  %v1460 = vmax.f32 %v1396, 0.0
  %v1461 = vmax.f32 %v1397, 0.0
  %v1462 = vmax.f32 %v1398, 0.0
  %v1463 = vmax.f32 %v1399, 0.0
  %v1464 = vmax.f32 %v1400, 0.0
  %v1465 = vmax.f32 %v1401, 0.0
  %v1466 = vmax.f32 %v1402, 0.0
  %v1467 = vmax.f32 %v1403, 0.0
  %v1468 = vmax.f32 %v1404, 0.0
  %v1469 = vmax.f32 %v1405, 0.0
  %v1470 = vmax.f32 %v1406, 0.0
  %v1471 = vmax.f32 %v1407, 0.0
  %v1472 = vmax.f32 %v1408, 0.0
  %v1473 = vmax.f32 %v1409, 0.0
  %v1474 = vmax.f32 %v1410, 0.0
  %v1475 = vmax.f32 %v1411, 0.0
  %v1476 = vmax.f32 %v1412, 0.0
  %v1477 = vmax.f32 %v1413, 0.0
  %v1478 = vmax.f32 %v1414, 0.0
  %v1479 = vmax.f32 %v1415, 0.0
  %v1480 = vmax.f32 %v1416, 0.0
  %v1481 = vmax.f32 %v1417, 0.0
  %v1482 = vmax.f32 %v1418, 0.0
  %v1483 = vmax.f32 %v1419, 0.0
  %v1484 = vmax.f32 %v1420, 0.0
  %v1485 = vmax.f32 %v1421, 0.0
  %v1486 = vmax.f32 %v1422, 0.0
  %v1487 = vmax.f32 %v1423, 0.0
  %v1488 = vmax.f32 %v1424, 0.0
  %v1489 = vmax.f32 %v1425, 0.0
  %v1490 = vmax.f32 %v1426, 0.0
  %v1491 = vmax.f32 %v1427, 0.0
  %v1492 = vmax.f32 %v1428, 0.0
  %v1493 = vmax.f32 %v1429, 0.0
  %v1494 = vmax.f32 %v1430, 0.0
  %v1495 = vmax.f32 %v1431, 0.0
  %v1496 = vmax.f32 %v1432, 0.0
  %v1497 = vmax.f32 %v1433, 0.0
  %v1498 = vmax.f32 %v1434, 0.0
  %v1499 = vmax.f32 %v1435, 0.0
  %v1500 = vmax.f32 %v1436, 0.0
  %v1501 = vmax.f32 %v1437, 0.0
  %v1502 = vmax.f32 %v1438, 0.0
  %v1503 = vmax.f32 %v1439, 0.0
  %v1504 = vmax.f32 %v1440, 0.0
  %v1505 = vmax.f32 %v1441, 0.0
  %v1506 = vmax.f32 %v1442, 0.0
  %v1507 = vpack.c.bf16 %v1444, %v1443
  %v1508 = vpack.c.bf16 %v1446, %v1445
  %v1509 = vpack.c.bf16 %v1448, %v1447
  %v1510 = vpack.c.bf16 %v1450, %v1449
  %v1511 = vpack.c.bf16 %v1452, %v1451
  %v1512 = vpack.c.bf16 %v1454, %v1453
  %v1513 = vpack.c.bf16 %v1456, %v1455
  %v1514 = vpack.c.bf16 %v1458, %v1457
  %v1515 = vpack.c.bf16 %v1460, %v1459
  %v1516 = vpack.c.bf16 %v1462, %v1461
  %v1517 = vpack.c.bf16 %v1464, %v1463
  %v1518 = vpack.c.bf16 %v1466, %v1465
  %v1519 = vpack.c.bf16 %v1468, %v1467
  %v1520 = vpack.c.bf16 %v1470, %v1469
  %v1521 = vpack.c.bf16 %v1472, %v1471
  %v1522 = vpack.c.bf16 %v1474, %v1473
  %v1523 = vpack.c.bf16 %v1476, %v1475
  %v1524 = vpack.c.bf16 %v1478, %v1477
  %v1525 = vpack.c.bf16 %v1480, %v1479
  %v1526 = vpack.c.bf16 %v1482, %v1481
  %v1527 = vpack.c.bf16 %v1484, %v1483
  %v1528 = vpack.c.bf16 %v1486, %v1485
  %v1529 = vpack.c.bf16 %v1488, %v1487
  %v1530 = vpack.c.bf16 %v1490, %v1489
  %v1531 = vpack.c.bf16 %v1492, %v1491
  %v1532 = vpack.c.bf16 %v1494, %v1493
  %v1533 = vpack.c.bf16 %v1496, %v1495
  %v1534 = vpack.c.bf16 %v1498, %v1497
  %v1535 = vpack.c.bf16 %v1500, %v1499
  %v1536 = vpack.c.bf16 %v1502, %v1501
  %v1537 = vpack.c.bf16 %v1504, %v1503
  %v1538 = vpack.c.bf16 %v1506, %v1505
  %v1539 = vld [vmem:[%s4] sm:$0xff]
  %v1540 = vld [vmem:[%s4 + $0x8] sm:$0xff]
  %v1541 = vld [vmem:[%s4 + $0x10] sm:$0xff]
  %v1542 = vld [vmem:[%s4 + $0x18] sm:$0xff]
  %v1543 = vld [vmem:[%s4 + $0x20] sm:$0xff]
  %v1544 = vld [vmem:[%s4 + $0x28] sm:$0xff]
  %v1545 = vld [vmem:[%s4 + $0x30] sm:$0xff]
  %v1546 = vld [vmem:[%s4 + $0x38] sm:$0xff]
  %v1547 = vld [vmem:[%s4 + $0x40] sm:$0xff]
  %v1548 = vld [vmem:[%s4 + $0x48] sm:$0xff]
  %v1549 = vld [vmem:[%s4 + $0x50] sm:$0xff]
  %v1550 = vld [vmem:[%s4 + $0x58] sm:$0xff]
  %v1551 = vld [vmem:[%s4 + $0x60] sm:$0xff]
  %v1552 = vld [vmem:[%s4 + $0x68] sm:$0xff]
  %v1553 = vld [vmem:[%s4 + $0x70] sm:$0xff]
  %v1554 = vld [vmem:[%s4 + $0x78] sm:$0xff]
  %v1555 = vld [vmem:[%s4 + $0x80] sm:$0xff]
  %v1556 = vld [vmem:[%s4 + $0x88] sm:$0xff]
  %v1557 = vld [vmem:[%s4 + $0x90] sm:$0xff]
  %v1558 = vld [vmem:[%s4 + $0x98] sm:$0xff]
  %v1559 = vld [vmem:[%s4 + $0xa0] sm:$0xff]
  %v1560 = vld [vmem:[%s4 + $0xa8] sm:$0xff]
  %v1561 = vld [vmem:[%s4 + $0xb0] sm:$0xff]
  %v1562 = vld [vmem:[%s4 + $0xb8] sm:$0xff]
  %v1563 = vld [vmem:[%s4 + $0xc0] sm:$0xff]
  %v1564 = vld [vmem:[%s4 + $0xc8] sm:$0xff]
  %v1565 = vld [vmem:[%s4 + $0xd0] sm:$0xff]
  %v1566 = vld [vmem:[%s4 + $0xd8] sm:$0xff]
  %v1567 = vld [vmem:[%s4 + $0xe0] sm:$0xff]
  %v1568 = vld [vmem:[%s4 + $0xe8] sm:$0xff]
  %v1569 = vld [vmem:[%s4 + $0xf0] sm:$0xff]
  %v1570 = vld [vmem:[%s4 + $0xf8] sm:$0xff]
  %v1571 = vld [vmem:[%s4 + $0x100] sm:$0xff]
  %v1572 = vld [vmem:[%s4 + $0x108] sm:$0xff]
  %v1573 = vld [vmem:[%s4 + $0x110] sm:$0xff]
  %v1574 = vld [vmem:[%s4 + $0x118] sm:$0xff]
  %v1575 = vld [vmem:[%s4 + $0x120] sm:$0xff]
  %v1576 = vld [vmem:[%s4 + $0x128] sm:$0xff]
  %v1577 = vld [vmem:[%s4 + $0x130] sm:$0xff]
  %v1578 = vld [vmem:[%s4 + $0x138] sm:$0xff]
  %v1579 = vld [vmem:[%s4 + $0x140] sm:$0xff]
  %v1580 = vld [vmem:[%s4 + $0x148] sm:$0xff]
  %v1581 = vld [vmem:[%s4 + $0x150] sm:$0xff]
  %v1582 = vld [vmem:[%s4 + $0x158] sm:$0xff]
  %v1583 = vld [vmem:[%s4 + $0x160] sm:$0xff]
  %v1584 = vld [vmem:[%s4 + $0x168] sm:$0xff]
  %v1585 = vld [vmem:[%s4 + $0x170] sm:$0xff]
  %v1586 = vld [vmem:[%s4 + $0x178] sm:$0xff]
  %v1587 = vld [vmem:[%s4 + $0x180] sm:$0xff]
  %v1588 = vld [vmem:[%s4 + $0x188] sm:$0xff]
  %v1589 = vld [vmem:[%s4 + $0x190] sm:$0xff]
  %v1590 = vld [vmem:[%s4 + $0x198] sm:$0xff]
  %v1591 = vld [vmem:[%s4 + $0x1a0] sm:$0xff]
  %v1592 = vld [vmem:[%s4 + $0x1a8] sm:$0xff]
  %v1593 = vld [vmem:[%s4 + $0x1b0] sm:$0xff]
  %v1594 = vld [vmem:[%s4 + $0x1b8] sm:$0xff]
  %v1595 = vld [vmem:[%s4 + $0x1c0] sm:$0xff]
  %v1596 = vld [vmem:[%s4 + $0x1c8] sm:$0xff]
  %v1597 = vld [vmem:[%s4 + $0x1d0] sm:$0xff]
  %v1598 = vld [vmem:[%s4 + $0x1d8] sm:$0xff]
  %v1599 = vld [vmem:[%s4 + $0x1e0] sm:$0xff]
  %v1600 = vld [vmem:[%s4 + $0x1e8] sm:$0xff]
  %v1601 = vld [vmem:[%s4 + $0x1f0] sm:$0xff]
  %v1602 = vld [vmem:[%s4 + $0x1f8] sm:$0xff]
  %v1603 = vld [vmem:[%s4 + $0x200] sm:$0xff]
  %v1604 = vld [vmem:[%s4 + $0x208] sm:$0xff]
  %v1605 = vld [vmem:[%s4 + $0x210] sm:$0xff]
  %v1606 = vld [vmem:[%s4 + $0x218] sm:$0xff]
  %v1607 = vld [vmem:[%s4 + $0x220] sm:$0xff]
  %v1608 = vld [vmem:[%s4 + $0x228] sm:$0xff]
  %v1609 = vld [vmem:[%s4 + $0x230] sm:$0xff]
  %v1610 = vld [vmem:[%s4 + $0x238] sm:$0xff]
  %v1611 = vld [vmem:[%s4 + $0x240] sm:$0xff]
  %v1612 = vld [vmem:[%s4 + $0x248] sm:$0xff]
  %v1613 = vld [vmem:[%s4 + $0x250] sm:$0xff]
  %v1614 = vld [vmem:[%s4 + $0x258] sm:$0xff]
  %v1615 = vld [vmem:[%s4 + $0x260] sm:$0xff]
  %v1616 = vld [vmem:[%s4 + $0x268] sm:$0xff]
  %v1617 = vld [vmem:[%s4 + $0x270] sm:$0xff]
  %v1618 = vld [vmem:[%s4 + $0x278] sm:$0xff]
  %v1619 = vld [vmem:[%s4 + $0x280] sm:$0xff]
  %v1620 = vld [vmem:[%s4 + $0x288] sm:$0xff]
  %v1621 = vld [vmem:[%s4 + $0x290] sm:$0xff]
  %v1622 = vld [vmem:[%s4 + $0x298] sm:$0xff]
  %v1623 = vld [vmem:[%s4 + $0x2a0] sm:$0xff]
  %v1624 = vld [vmem:[%s4 + $0x2a8] sm:$0xff]
  %v1625 = vld [vmem:[%s4 + $0x2b0] sm:$0xff]
  %v1626 = vld [vmem:[%s4 + $0x2b8] sm:$0xff]
  %v1627 = vld [vmem:[%s4 + $0x2c0] sm:$0xff]
  %v1628 = vld [vmem:[%s4 + $0x2c8] sm:$0xff]
  %v1629 = vld [vmem:[%s4 + $0x2d0] sm:$0xff]
  %v1630 = vld [vmem:[%s4 + $0x2d8] sm:$0xff]
  %v1631 = vld [vmem:[%s4 + $0x2e0] sm:$0xff]
  %v1632 = vld [vmem:[%s4 + $0x2e8] sm:$0xff]
  %v1633 = vld [vmem:[%s4 + $0x2f0] sm:$0xff]
  %v1634 = vld [vmem:[%s4 + $0x2f8] sm:$0xff]
  %v1635 = vld [vmem:[%s4 + $0x300] sm:$0xff]
  %v1636 = vld [vmem:[%s4 + $0x308] sm:$0xff]
  %v1637 = vld [vmem:[%s4 + $0x310] sm:$0xff]
  %v1638 = vld [vmem:[%s4 + $0x318] sm:$0xff]
  %v1639 = vld [vmem:[%s4 + $0x320] sm:$0xff]
  %v1640 = vld [vmem:[%s4 + $0x328] sm:$0xff]
  %v1641 = vld [vmem:[%s4 + $0x330] sm:$0xff]
  %v1642 = vld [vmem:[%s4 + $0x338] sm:$0xff]
  %v1643 = vld [vmem:[%s4 + $0x340] sm:$0xff]
  %v1644 = vld [vmem:[%s4 + $0x348] sm:$0xff]
  %v1645 = vld [vmem:[%s4 + $0x350] sm:$0xff]
  %v1646 = vld [vmem:[%s4 + $0x358] sm:$0xff]
  %v1647 = vld [vmem:[%s4 + $0x360] sm:$0xff]
  %v1648 = vld [vmem:[%s4 + $0x368] sm:$0xff]
  %v1649 = vld [vmem:[%s4 + $0x370] sm:$0xff]
  %v1650 = vld [vmem:[%s4 + $0x378] sm:$0xff]
  %v1651 = vld [vmem:[%s4 + $0x380] sm:$0xff]
  %v1652 = vld [vmem:[%s4 + $0x388] sm:$0xff]
  %v1653 = vld [vmem:[%s4 + $0x390] sm:$0xff]
  %v1654 = vld [vmem:[%s4 + $0x398] sm:$0xff]
  %v1655 = vld [vmem:[%s4 + $0x3a0] sm:$0xff]
  %v1656 = vld [vmem:[%s4 + $0x3a8] sm:$0xff]
  %v1657 = vld [vmem:[%s4 + $0x3b0] sm:$0xff]
  %v1658 = vld [vmem:[%s4 + $0x3b8] sm:$0xff]
  %v1659 = vld [vmem:[%s4 + $0x3c0] sm:$0xff]
  %v1660 = vld [vmem:[%s4 + $0x3c8] sm:$0xff]
  %v1661 = vld [vmem:[%s4 + $0x3d0] sm:$0xff]
  %v1662 = vld [vmem:[%s4 + $0x3d8] sm:$0xff]
  %v1663 = vld [vmem:[%s4 + $0x3e0] sm:$0xff]
  %v1664 = vld [vmem:[%s4 + $0x3e8] sm:$0xff]
  %v1665 = vld [vmem:[%s4 + $0x3f0] sm:$0xff]
  %v1666 = vld [vmem:[%s4 + $0x3f8] sm:$0xff]
  %v1667 = vld [vmem:[%s4 + $0x400] sm:$0xff]
  %v1668 = vld [vmem:[%s4 + $0x408] sm:$0xff]
  %v1669 = vld [vmem:[%s4 + $0x410] sm:$0xff]
  %v1670 = vld [vmem:[%s4 + $0x418] sm:$0xff]
  %v1671 = vld [vmem:[%s4 + $0x420] sm:$0xff]
  %v1672 = vld [vmem:[%s4 + $0x428] sm:$0xff]
  %v1673 = vld [vmem:[%s4 + $0x430] sm:$0xff]
  %v1674 = vld [vmem:[%s4 + $0x438] sm:$0xff]
  %v1675 = vld [vmem:[%s4 + $0x440] sm:$0xff]
  %v1676 = vld [vmem:[%s4 + $0x448] sm:$0xff]
  %v1677 = vld [vmem:[%s4 + $0x450] sm:$0xff]
  %v1678 = vld [vmem:[%s4 + $0x458] sm:$0xff]
  %v1679 = vld [vmem:[%s4 + $0x460] sm:$0xff]
  %v1680 = vld [vmem:[%s4 + $0x468] sm:$0xff]
  %v1681 = vld [vmem:[%s4 + $0x470] sm:$0xff]
  %v1682 = vld [vmem:[%s4 + $0x478] sm:$0xff]
  %v1683 = vld [vmem:[%s4 + $0x480] sm:$0xff]
  %v1684 = vld [vmem:[%s4 + $0x488] sm:$0xff]
  %v1685 = vld [vmem:[%s4 + $0x490] sm:$0xff]
  %v1686 = vld [vmem:[%s4 + $0x498] sm:$0xff]
  %v1687 = vld [vmem:[%s4 + $0x4a0] sm:$0xff]
  %v1688 = vld [vmem:[%s4 + $0x4a8] sm:$0xff]
  %v1689 = vld [vmem:[%s4 + $0x4b0] sm:$0xff]
  %v1690 = vld [vmem:[%s4 + $0x4b8] sm:$0xff]
  %v1691 = vld [vmem:[%s4 + $0x4c0] sm:$0xff]
  %v1692 = vld [vmem:[%s4 + $0x4c8] sm:$0xff]
  %v1693 = vld [vmem:[%s4 + $0x4d0] sm:$0xff]
  %v1694 = vld [vmem:[%s4 + $0x4d8] sm:$0xff]
  %v1695 = vld [vmem:[%s4 + $0x4e0] sm:$0xff]
  %v1696 = vld [vmem:[%s4 + $0x4e8] sm:$0xff]
  %v1697 = vld [vmem:[%s4 + $0x4f0] sm:$0xff]
  %v1698 = vld [vmem:[%s4 + $0x4f8] sm:$0xff]
  %v1699 = vld [vmem:[%s4 + $0x500] sm:$0xff]
  %v1700 = vld [vmem:[%s4 + $0x508] sm:$0xff]
  %v1701 = vld [vmem:[%s4 + $0x510] sm:$0xff]
  %v1702 = vld [vmem:[%s4 + $0x518] sm:$0xff]
  %v1703 = vld [vmem:[%s4 + $0x520] sm:$0xff]
  %v1704 = vld [vmem:[%s4 + $0x528] sm:$0xff]
  %v1705 = vld [vmem:[%s4 + $0x530] sm:$0xff]
  %v1706 = vld [vmem:[%s4 + $0x538] sm:$0xff]
  %v1707 = vld [vmem:[%s4 + $0x540] sm:$0xff]
  %v1708 = vld [vmem:[%s4 + $0x548] sm:$0xff]
  %v1709 = vld [vmem:[%s4 + $0x550] sm:$0xff]
  %v1710 = vld [vmem:[%s4 + $0x558] sm:$0xff]
  %v1711 = vld [vmem:[%s4 + $0x560] sm:$0xff]
  %v1712 = vld [vmem:[%s4 + $0x568] sm:$0xff]
  %v1713 = vld [vmem:[%s4 + $0x570] sm:$0xff]
  %v1714 = vld [vmem:[%s4 + $0x578] sm:$0xff]
  %v1715 = vld [vmem:[%s4 + $0x580] sm:$0xff]
  %v1716 = vld [vmem:[%s4 + $0x588] sm:$0xff]
  %v1717 = vld [vmem:[%s4 + $0x590] sm:$0xff]
  %v1718 = vld [vmem:[%s4 + $0x598] sm:$0xff]
  %v1719 = vld [vmem:[%s4 + $0x5a0] sm:$0xff]
  %v1720 = vld [vmem:[%s4 + $0x5a8] sm:$0xff]
  %v1721 = vld [vmem:[%s4 + $0x5b0] sm:$0xff]
  %v1722 = vld [vmem:[%s4 + $0x5b8] sm:$0xff]
  %v1723 = vld [vmem:[%s4 + $0x5c0] sm:$0xff]
  %v1724 = vld [vmem:[%s4 + $0x5c8] sm:$0xff]
  %v1725 = vld [vmem:[%s4 + $0x5d0] sm:$0xff]
  %v1726 = vld [vmem:[%s4 + $0x5d8] sm:$0xff]
  %v1727 = vld [vmem:[%s4 + $0x5e0] sm:$0xff]
  %v1728 = vld [vmem:[%s4 + $0x5e8] sm:$0xff]
  %v1729 = vld [vmem:[%s4 + $0x5f0] sm:$0xff]
  %v1730 = vld [vmem:[%s4 + $0x5f8] sm:$0xff]
  %v1731 = vld [vmem:[%s4 + $0x600] sm:$0xff]
  %v1732 = vld [vmem:[%s4 + $0x608] sm:$0xff]
  %v1733 = vld [vmem:[%s4 + $0x610] sm:$0xff]
  %v1734 = vld [vmem:[%s4 + $0x618] sm:$0xff]
  %v1735 = vld [vmem:[%s4 + $0x620] sm:$0xff]
  %v1736 = vld [vmem:[%s4 + $0x628] sm:$0xff]
  %v1737 = vld [vmem:[%s4 + $0x630] sm:$0xff]
  %v1738 = vld [vmem:[%s4 + $0x638] sm:$0xff]
  %v1739 = vld [vmem:[%s4 + $0x640] sm:$0xff]
  %v1740 = vld [vmem:[%s4 + $0x648] sm:$0xff]
  %v1741 = vld [vmem:[%s4 + $0x650] sm:$0xff]
  %v1742 = vld [vmem:[%s4 + $0x658] sm:$0xff]
  %v1743 = vld [vmem:[%s4 + $0x660] sm:$0xff]
  %v1744 = vld [vmem:[%s4 + $0x668] sm:$0xff]
  %v1745 = vld [vmem:[%s4 + $0x670] sm:$0xff]
  %v1746 = vld [vmem:[%s4 + $0x678] sm:$0xff]
  %v1747 = vld [vmem:[%s4 + $0x680] sm:$0xff]
  %v1748 = vld [vmem:[%s4 + $0x688] sm:$0xff]
  %v1749 = vld [vmem:[%s4 + $0x690] sm:$0xff]
  %v1750 = vld [vmem:[%s4 + $0x698] sm:$0xff]
  %v1751 = vld [vmem:[%s4 + $0x6a0] sm:$0xff]
  %v1752 = vld [vmem:[%s4 + $0x6a8] sm:$0xff]
  %v1753 = vld [vmem:[%s4 + $0x6b0] sm:$0xff]
  %v1754 = vld [vmem:[%s4 + $0x6b8] sm:$0xff]
  %v1755 = vld [vmem:[%s4 + $0x6c0] sm:$0xff]
  %v1756 = vld [vmem:[%s4 + $0x6c8] sm:$0xff]
  %v1757 = vld [vmem:[%s4 + $0x6d0] sm:$0xff]
  %v1758 = vld [vmem:[%s4 + $0x6d8] sm:$0xff]
  %v1759 = vld [vmem:[%s4 + $0x6e0] sm:$0xff]
  %v1760 = vld [vmem:[%s4 + $0x6e8] sm:$0xff]
  %v1761 = vld [vmem:[%s4 + $0x6f0] sm:$0xff]
  %v1762 = vld [vmem:[%s4 + $0x6f8] sm:$0xff]
  %v1763 = vld [vmem:[%s4 + $0x700] sm:$0xff]
  %v1764 = vld [vmem:[%s4 + $0x708] sm:$0xff]
  %v1765 = vld [vmem:[%s4 + $0x710] sm:$0xff]
  %v1766 = vld [vmem:[%s4 + $0x718] sm:$0xff]
  %v1767 = vld [vmem:[%s4 + $0x720] sm:$0xff]
  %v1768 = vld [vmem:[%s4 + $0x728] sm:$0xff]
  %v1769 = vld [vmem:[%s4 + $0x730] sm:$0xff]
  %v1770 = vld [vmem:[%s4 + $0x738] sm:$0xff]
  %v1771 = vld [vmem:[%s4 + $0x740] sm:$0xff]
  %v1772 = vld [vmem:[%s4 + $0x748] sm:$0xff]
  %v1773 = vld [vmem:[%s4 + $0x750] sm:$0xff]
  %v1774 = vld [vmem:[%s4 + $0x758] sm:$0xff]
  %v1775 = vld [vmem:[%s4 + $0x760] sm:$0xff]
  %v1776 = vld [vmem:[%s4 + $0x768] sm:$0xff]
  %v1777 = vld [vmem:[%s4 + $0x770] sm:$0xff]
  %v1778 = vld [vmem:[%s4 + $0x778] sm:$0xff]
  %v1779 = vld [vmem:[%s4 + $0x780] sm:$0xff]
  %v1780 = vld [vmem:[%s4 + $0x788] sm:$0xff]
  %v1781 = vld [vmem:[%s4 + $0x790] sm:$0xff]
  %v1782 = vld [vmem:[%s4 + $0x798] sm:$0xff]
  %v1783 = vld [vmem:[%s4 + $0x7a0] sm:$0xff]
  %v1784 = vld [vmem:[%s4 + $0x7a8] sm:$0xff]
  %v1785 = vld [vmem:[%s4 + $0x7b0] sm:$0xff]
  %v1786 = vld [vmem:[%s4 + $0x7b8] sm:$0xff]
  %v1787 = vld [vmem:[%s4 + $0x7c0] sm:$0xff]
  %v1788 = vld [vmem:[%s4 + $0x7c8] sm:$0xff]
  %v1789 = vld [vmem:[%s4 + $0x7d0] sm:$0xff]
  %v1790 = vld [vmem:[%s4 + $0x7d8] sm:$0xff]
  %v1791 = vld [vmem:[%s4 + $0x7e0] sm:$0xff]
  %v1792 = vld [vmem:[%s4 + $0x7e8] sm:$0xff]
  %v1793 = vld [vmem:[%s4 + $0x7f0] sm:$0xff]
  %v1794 = vld [vmem:[%s4 + $0x7f8] sm:$0xff]
  %v1795 = vld [vmem:[%s4 + $0x800] sm:$0xff]
  %v1796 = vld [vmem:[%s4 + $0x808] sm:$0xff]
  %v1797 = vld [vmem:[%s4 + $0x810] sm:$0xff]
  %v1798 = vld [vmem:[%s4 + $0x818] sm:$0xff]
  %v1799 = vld [vmem:[%s4 + $0x820] sm:$0xff]
  %v1800 = vld [vmem:[%s4 + $0x828] sm:$0xff]
  %v1801 = vld [vmem:[%s4 + $0x830] sm:$0xff]
  %v1802 = vld [vmem:[%s4 + $0x838] sm:$0xff]
  %v1803 = vld [vmem:[%s4 + $0x840] sm:$0xff]
  %v1804 = vld [vmem:[%s4 + $0x848] sm:$0xff]
  %v1805 = vld [vmem:[%s4 + $0x850] sm:$0xff]
  %v1806 = vld [vmem:[%s4 + $0x858] sm:$0xff]
  %v1807 = vld [vmem:[%s4 + $0x860] sm:$0xff]
  %v1808 = vld [vmem:[%s4 + $0x868] sm:$0xff]
  %v1809 = vld [vmem:[%s4 + $0x870] sm:$0xff]
  %v1810 = vld [vmem:[%s4 + $0x878] sm:$0xff]
  %v1811 = vld [vmem:[%s4 + $0x880] sm:$0xff]
  %v1812 = vld [vmem:[%s4 + $0x888] sm:$0xff]
  %v1813 = vld [vmem:[%s4 + $0x890] sm:$0xff]
  %v1814 = vld [vmem:[%s4 + $0x898] sm:$0xff]
  %v1815 = vld [vmem:[%s4 + $0x8a0] sm:$0xff]
  %v1816 = vld [vmem:[%s4 + $0x8a8] sm:$0xff]
  %v1817 = vld [vmem:[%s4 + $0x8b0] sm:$0xff]
  %v1818 = vld [vmem:[%s4 + $0x8b8] sm:$0xff]
  %v1819 = vld [vmem:[%s4 + $0x8c0] sm:$0xff]
  %v1820 = vld [vmem:[%s4 + $0x8c8] sm:$0xff]
  %v1821 = vld [vmem:[%s4 + $0x8d0] sm:$0xff]
  %v1822 = vld [vmem:[%s4 + $0x8d8] sm:$0xff]
  %v1823 = vld [vmem:[%s4 + $0x8e0] sm:$0xff]
  %v1824 = vld [vmem:[%s4 + $0x8e8] sm:$0xff]
  %v1825 = vld [vmem:[%s4 + $0x8f0] sm:$0xff]
  %v1826 = vld [vmem:[%s4 + $0x8f8] sm:$0xff]
  %v2115 = vunpack.c.l.b16 %v1539
  %v2116 = vunpack.c.h.b16 %v1539
  %v2117 = vunpack.c.l.b16 %v1540
  %v2118 = vunpack.c.h.b16 %v1540
  %v2119 = vunpack.c.l.b16 %v1541
  %v2120 = vunpack.c.h.b16 %v1541
  %v2121 = vunpack.c.l.b16 %v1542
  %v2122 = vunpack.c.h.b16 %v1542
  %v2123 = vunpack.c.l.b16 %v1543
  %v2124 = vunpack.c.h.b16 %v1543
  %v2125 = vunpack.c.l.b16 %v1544
  %v2126 = vunpack.c.h.b16 %v1544
  %v2127 = vunpack.c.l.b16 %v1545
  %v2128 = vunpack.c.h.b16 %v1545
  %v2129 = vunpack.c.l.b16 %v1546
  %v2130 = vunpack.c.h.b16 %v1546
  %v2131 = vunpack.c.l.b16 %v1547
  %v2132 = vunpack.c.h.b16 %v1547
  %v2133 = vunpack.c.l.b16 %v1548
  %v2134 = vunpack.c.h.b16 %v1548
  %v2135 = vunpack.c.l.b16 %v1549
  %v2136 = vunpack.c.h.b16 %v1549
  %v2137 = vunpack.c.l.b16 %v1550
  %v2138 = vunpack.c.h.b16 %v1550
  %v2139 = vunpack.c.l.b16 %v1551
  %v2140 = vunpack.c.h.b16 %v1551
  %v2141 = vunpack.c.l.b16 %v1552
  %v2142 = vunpack.c.h.b16 %v1552
  %v2143 = vunpack.c.l.b16 %v1553
  %v2144 = vunpack.c.h.b16 %v1553
  %v2145 = vunpack.c.l.b16 %v1554
  %v2146 = vunpack.c.h.b16 %v1554
  %v2147 = vunpack.c.l.b16 %v1555
  %v2148 = vunpack.c.h.b16 %v1555
  %v2149 = vunpack.c.l.b16 %v1556
  %v2150 = vunpack.c.h.b16 %v1556
  %v2151 = vunpack.c.l.b16 %v1557
  %v2152 = vunpack.c.h.b16 %v1557
  %v2153 = vunpack.c.l.b16 %v1558
  %v2154 = vunpack.c.h.b16 %v1558
  %v2155 = vunpack.c.l.b16 %v1559
  %v2156 = vunpack.c.h.b16 %v1559
  %v2157 = vunpack.c.l.b16 %v1560
  %v2158 = vunpack.c.h.b16 %v1560
  %v2159 = vunpack.c.l.b16 %v1561
  %v2160 = vunpack.c.h.b16 %v1561
  %v2161 = vunpack.c.l.b16 %v1562
  %v2162 = vunpack.c.h.b16 %v1562
  %v2163 = vunpack.c.l.b16 %v1563
  %v2164 = vunpack.c.h.b16 %v1563
  %v2165 = vunpack.c.l.b16 %v1564
  %v2166 = vunpack.c.h.b16 %v1564
  %v2167 = vunpack.c.l.b16 %v1565
  %v2168 = vunpack.c.h.b16 %v1565
  %v2169 = vunpack.c.l.b16 %v1566
  %v2170 = vunpack.c.h.b16 %v1566
  %v2171 = vunpack.c.l.b16 %v1567
  %v2172 = vunpack.c.h.b16 %v1567
  %v2173 = vunpack.c.l.b16 %v1568
  %v2174 = vunpack.c.h.b16 %v1568
  %v2175 = vunpack.c.l.b16 %v1569
  %v2176 = vunpack.c.h.b16 %v1569
  %v2177 = vunpack.c.l.b16 %v1570
  %v2178 = vunpack.c.h.b16 %v1570
  %v2179 = vunpack.c.l.b16 %v1571
  %v2180 = vunpack.c.h.b16 %v1571
  %v2181 = vunpack.c.l.b16 %v1572
  %v2182 = vunpack.c.h.b16 %v1572
  %v2183 = vunpack.c.l.b16 %v1573
  %v2184 = vunpack.c.h.b16 %v1573
  %v2185 = vunpack.c.l.b16 %v1574
  %v2186 = vunpack.c.h.b16 %v1574
  %v2187 = vunpack.c.l.b16 %v1575
  %v2188 = vunpack.c.h.b16 %v1575
  %v2189 = vunpack.c.l.b16 %v1576
  %v2190 = vunpack.c.h.b16 %v1576
  %v2191 = vunpack.c.l.b16 %v1577
  %v2192 = vunpack.c.h.b16 %v1577
  %v2193 = vunpack.c.l.b16 %v1578
  %v2194 = vunpack.c.h.b16 %v1578
  %v2195 = vunpack.c.l.b16 %v1579
  %v2196 = vunpack.c.h.b16 %v1579
  %v2197 = vunpack.c.l.b16 %v1580
  %v2198 = vunpack.c.h.b16 %v1580
  %v2199 = vunpack.c.l.b16 %v1581
  %v2200 = vunpack.c.h.b16 %v1581
  %v2201 = vunpack.c.l.b16 %v1582
  %v2202 = vunpack.c.h.b16 %v1582
  %v2203 = vunpack.c.l.b16 %v1583
  %v2204 = vunpack.c.h.b16 %v1583
  %v2205 = vunpack.c.l.b16 %v1584
  %v2206 = vunpack.c.h.b16 %v1584
  %v2207 = vunpack.c.l.b16 %v1585
  %v2208 = vunpack.c.h.b16 %v1585
  %v2209 = vunpack.c.l.b16 %v1586
  %v2210 = vunpack.c.h.b16 %v1586
  %v2211 = vunpack.c.l.b16 %v1587
  %v2212 = vunpack.c.h.b16 %v1587
  %v2213 = vunpack.c.l.b16 %v1588
  %v2214 = vunpack.c.h.b16 %v1588
  %v2215 = vunpack.c.l.b16 %v1589
  %v2216 = vunpack.c.h.b16 %v1589
  %v2217 = vunpack.c.l.b16 %v1590
  %v2218 = vunpack.c.h.b16 %v1590
  %v2219 = vunpack.c.l.b16 %v1591
  %v2220 = vunpack.c.h.b16 %v1591
  %v2221 = vunpack.c.l.b16 %v1592
  %v2222 = vunpack.c.h.b16 %v1592
  %v2223 = vunpack.c.l.b16 %v1593
  %v2224 = vunpack.c.h.b16 %v1593
  %v2225 = vunpack.c.l.b16 %v1594
  %v2226 = vunpack.c.h.b16 %v1594
  %v2227 = vunpack.c.l.b16 %v1595
  %v2228 = vunpack.c.h.b16 %v1595
  %v2229 = vunpack.c.l.b16 %v1596
  %v2230 = vunpack.c.h.b16 %v1596
  %v2231 = vunpack.c.l.b16 %v1597
  %v2232 = vunpack.c.h.b16 %v1597
  %v2233 = vunpack.c.l.b16 %v1598
  %v2234 = vunpack.c.h.b16 %v1598
  %v2235 = vunpack.c.l.b16 %v1599
  %v2236 = vunpack.c.h.b16 %v1599
  %v2237 = vunpack.c.l.b16 %v1600
  %v2238 = vunpack.c.h.b16 %v1600
  %v2239 = vunpack.c.l.b16 %v1601
  %v2240 = vunpack.c.h.b16 %v1601
  %v2241 = vunpack.c.l.b16 %v1602
  %v2242 = vunpack.c.h.b16 %v1602
  %v2243 = vunpack.c.l.b16 %v1603
  %v2244 = vunpack.c.h.b16 %v1603
  %v2245 = vunpack.c.l.b16 %v1604
  %v2246 = vunpack.c.h.b16 %v1604
  %v2247 = vunpack.c.l.b16 %v1605
  %v2248 = vunpack.c.h.b16 %v1605
  %v2249 = vunpack.c.l.b16 %v1606
  %v2250 = vunpack.c.h.b16 %v1606
  %v2251 = vunpack.c.l.b16 %v1607
  %v2252 = vunpack.c.h.b16 %v1607
  %v2253 = vunpack.c.l.b16 %v1608
  %v2254 = vunpack.c.h.b16 %v1608
  %v2255 = vunpack.c.l.b16 %v1609
  %v2256 = vunpack.c.h.b16 %v1609
  %v2257 = vunpack.c.l.b16 %v1610
  %v2258 = vunpack.c.h.b16 %v1610
  %v2259 = vunpack.c.l.b16 %v1611
  %v2260 = vunpack.c.h.b16 %v1611
  %v2261 = vunpack.c.l.b16 %v1612
  %v2262 = vunpack.c.h.b16 %v1612
  %v2263 = vunpack.c.l.b16 %v1613
  %v2264 = vunpack.c.h.b16 %v1613
  %v2265 = vunpack.c.l.b16 %v1614
  %v2266 = vunpack.c.h.b16 %v1614
  %v2267 = vunpack.c.l.b16 %v1615
  %v2268 = vunpack.c.h.b16 %v1615
  %v2269 = vunpack.c.l.b16 %v1616
  %v2270 = vunpack.c.h.b16 %v1616
  %v2271 = vunpack.c.l.b16 %v1617
  %v2272 = vunpack.c.h.b16 %v1617
  %v2273 = vunpack.c.l.b16 %v1618
  %v2274 = vunpack.c.h.b16 %v1618
  %v2275 = vunpack.c.l.b16 %v1619
  %v2276 = vunpack.c.h.b16 %v1619
  %v2277 = vunpack.c.l.b16 %v1620
  %v2278 = vunpack.c.h.b16 %v1620
  %v2279 = vunpack.c.l.b16 %v1621
  %v2280 = vunpack.c.h.b16 %v1621
  %v2281 = vunpack.c.l.b16 %v1622
  %v2282 = vunpack.c.h.b16 %v1622
  %v2283 = vunpack.c.l.b16 %v1623
  %v2284 = vunpack.c.h.b16 %v1623
  %v2285 = vunpack.c.l.b16 %v1624
  %v2286 = vunpack.c.h.b16 %v1624
  %v2287 = vunpack.c.l.b16 %v1625
  %v2288 = vunpack.c.h.b16 %v1625
  %v2289 = vunpack.c.l.b16 %v1626
  %v2290 = vunpack.c.h.b16 %v1626
  %v2291 = vunpack.c.l.b16 %v1627
  %v2292 = vunpack.c.h.b16 %v1627
  %v2293 = vunpack.c.l.b16 %v1628
  %v2294 = vunpack.c.h.b16 %v1628
  %v2295 = vunpack.c.l.b16 %v1629
  %v2296 = vunpack.c.h.b16 %v1629
  %v2297 = vunpack.c.l.b16 %v1630
  %v2298 = vunpack.c.h.b16 %v1630
  %v2299 = vunpack.c.l.b16 %v1631
  %v2300 = vunpack.c.h.b16 %v1631
  %v2301 = vunpack.c.l.b16 %v1632
  %v2302 = vunpack.c.h.b16 %v1632
  %v2303 = vunpack.c.l.b16 %v1633
  %v2304 = vunpack.c.h.b16 %v1633
  %v2305 = vunpack.c.l.b16 %v1634
  %v2306 = vunpack.c.h.b16 %v1634
  %v2307 = vunpack.c.l.b16 %v1635
  %v2308 = vunpack.c.h.b16 %v1635
  %v2309 = vunpack.c.l.b16 %v1636
  %v2310 = vunpack.c.h.b16 %v1636
  %v2311 = vunpack.c.l.b16 %v1637
  %v2312 = vunpack.c.h.b16 %v1637
  %v2313 = vunpack.c.l.b16 %v1638
  %v2314 = vunpack.c.h.b16 %v1638
  %v2315 = vunpack.c.l.b16 %v1639
  %v2316 = vunpack.c.h.b16 %v1639
  %v2317 = vunpack.c.l.b16 %v1640
  %v2318 = vunpack.c.h.b16 %v1640
  %v2319 = vunpack.c.l.b16 %v1641
  %v2320 = vunpack.c.h.b16 %v1641
  %v2321 = vunpack.c.l.b16 %v1642
  %v2322 = vunpack.c.h.b16 %v1642
  %v2323 = vunpack.c.l.b16 %v1643
  %v2324 = vunpack.c.h.b16 %v1643
  %v2325 = vunpack.c.l.b16 %v1644
  %v2326 = vunpack.c.h.b16 %v1644
  %v2327 = vunpack.c.l.b16 %v1645
  %v2328 = vunpack.c.h.b16 %v1645
  %v2329 = vunpack.c.l.b16 %v1646
  %v2330 = vunpack.c.h.b16 %v1646
  %v2331 = vunpack.c.l.b16 %v1647
  %v2332 = vunpack.c.h.b16 %v1647
  %v2333 = vunpack.c.l.b16 %v1648
  %v2334 = vunpack.c.h.b16 %v1648
  %v2335 = vunpack.c.l.b16 %v1649
  %v2336 = vunpack.c.h.b16 %v1649
  %v2337 = vunpack.c.l.b16 %v1650
  %v2338 = vunpack.c.h.b16 %v1650
  %v2339 = vunpack.c.l.b16 %v1651
  %v2340 = vunpack.c.h.b16 %v1651
  %v2341 = vunpack.c.l.b16 %v1652
  %v2342 = vunpack.c.h.b16 %v1652
  %v2343 = vunpack.c.l.b16 %v1653
  %v2344 = vunpack.c.h.b16 %v1653
  %v2345 = vunpack.c.l.b16 %v1654
  %v2346 = vunpack.c.h.b16 %v1654
  %v2347 = vunpack.c.l.b16 %v1655
  %v2348 = vunpack.c.h.b16 %v1655
  %v2349 = vunpack.c.l.b16 %v1656
  %v2350 = vunpack.c.h.b16 %v1656
  %v2351 = vunpack.c.l.b16 %v1657
  %v2352 = vunpack.c.h.b16 %v1657
  %v2353 = vunpack.c.l.b16 %v1658
  %v2354 = vunpack.c.h.b16 %v1658
  %v2355 = vunpack.c.l.b16 %v1659
  %v2356 = vunpack.c.h.b16 %v1659
  %v2357 = vunpack.c.l.b16 %v1660
  %v2358 = vunpack.c.h.b16 %v1660
  %v2359 = vunpack.c.l.b16 %v1661
  %v2360 = vunpack.c.h.b16 %v1661
  %v2361 = vunpack.c.l.b16 %v1662
  %v2362 = vunpack.c.h.b16 %v1662
  %v2363 = vunpack.c.l.b16 %v1663
  %v2364 = vunpack.c.h.b16 %v1663
  %v2365 = vunpack.c.l.b16 %v1664
  %v2366 = vunpack.c.h.b16 %v1664
  %v2367 = vunpack.c.l.b16 %v1665
  %v2368 = vunpack.c.h.b16 %v1665
  %v2369 = vunpack.c.l.b16 %v1666
  %v2370 = vunpack.c.h.b16 %v1666
  %v2371 = vunpack.c.l.b16 %v1667
  %v2372 = vunpack.c.h.b16 %v1667
  %v2373 = vunpack.c.l.b16 %v1668
  %v2374 = vunpack.c.h.b16 %v1668
  %v2375 = vunpack.c.l.b16 %v1669
  %v2376 = vunpack.c.h.b16 %v1669
  %v2377 = vunpack.c.l.b16 %v1670
  %v2378 = vunpack.c.h.b16 %v1670
  %v2379 = vunpack.c.l.b16 %v1671
  %v2380 = vunpack.c.h.b16 %v1671
  %v2381 = vunpack.c.l.b16 %v1672
  %v2382 = vunpack.c.h.b16 %v1672
  %v2383 = vunpack.c.l.b16 %v1673
  %v2384 = vunpack.c.h.b16 %v1673
  %v2385 = vunpack.c.l.b16 %v1674
  %v2386 = vunpack.c.h.b16 %v1674
  %v2387 = vunpack.c.l.b16 %v1675
  %v2388 = vunpack.c.h.b16 %v1675
  %v2389 = vunpack.c.l.b16 %v1676
  %v2390 = vunpack.c.h.b16 %v1676
  %v2391 = vunpack.c.l.b16 %v1677
  %v2392 = vunpack.c.h.b16 %v1677
  %v2393 = vunpack.c.l.b16 %v1678
  %v2394 = vunpack.c.h.b16 %v1678
  %v2395 = vunpack.c.l.b16 %v1679
  %v2396 = vunpack.c.h.b16 %v1679
  %v2397 = vunpack.c.l.b16 %v1680
  %v2398 = vunpack.c.h.b16 %v1680
  %v2399 = vunpack.c.l.b16 %v1681
  %v2400 = vunpack.c.h.b16 %v1681
  %v2401 = vunpack.c.l.b16 %v1682
  %v2402 = vunpack.c.h.b16 %v1682
  %v2403 = vunpack.c.l.b16 %v1683
  %v2404 = vunpack.c.h.b16 %v1683
  %v2405 = vunpack.c.l.b16 %v1684
  %v2406 = vunpack.c.h.b16 %v1684
  %v2407 = vunpack.c.l.b16 %v1685
  %v2408 = vunpack.c.h.b16 %v1685
  %v2409 = vunpack.c.l.b16 %v1686
  %v2410 = vunpack.c.h.b16 %v1686
  %v2411 = vunpack.c.l.b16 %v1687
  %v2412 = vunpack.c.h.b16 %v1687
  %v2413 = vunpack.c.l.b16 %v1688
  %v2414 = vunpack.c.h.b16 %v1688
  %v2415 = vunpack.c.l.b16 %v1689
  %v2416 = vunpack.c.h.b16 %v1689
  %v2417 = vunpack.c.l.b16 %v1690
  %v2418 = vunpack.c.h.b16 %v1690
  %v2419 = vunpack.c.l.b16 %v1691
  %v2420 = vunpack.c.h.b16 %v1691
  %v2421 = vunpack.c.l.b16 %v1692
  %v2422 = vunpack.c.h.b16 %v1692
  %v2423 = vunpack.c.l.b16 %v1693
  %v2424 = vunpack.c.h.b16 %v1693
  %v2425 = vunpack.c.l.b16 %v1694
  %v2426 = vunpack.c.h.b16 %v1694
  %v2427 = vunpack.c.l.b16 %v1695
  %v2428 = vunpack.c.h.b16 %v1695
  %v2429 = vunpack.c.l.b16 %v1696
  %v2430 = vunpack.c.h.b16 %v1696
  %v2431 = vunpack.c.l.b16 %v1697
  %v2432 = vunpack.c.h.b16 %v1697
  %v2433 = vunpack.c.l.b16 %v1698
  %v2434 = vunpack.c.h.b16 %v1698
  %v2435 = vunpack.c.l.b16 %v1699
  %v2436 = vunpack.c.h.b16 %v1699
  %v2437 = vunpack.c.l.b16 %v1700
  %v2438 = vunpack.c.h.b16 %v1700
  %v2439 = vunpack.c.l.b16 %v1701
  %v2440 = vunpack.c.h.b16 %v1701
  %v2441 = vunpack.c.l.b16 %v1702
  %v2442 = vunpack.c.h.b16 %v1702
  %v2443 = vunpack.c.l.b16 %v1703
  %v2444 = vunpack.c.h.b16 %v1703
  %v2445 = vunpack.c.l.b16 %v1704
  %v2446 = vunpack.c.h.b16 %v1704
  %v2447 = vunpack.c.l.b16 %v1705
  %v2448 = vunpack.c.h.b16 %v1705
  %v2449 = vunpack.c.l.b16 %v1706
  %v2450 = vunpack.c.h.b16 %v1706
  %v2451 = vunpack.c.l.b16 %v1707
  %v2452 = vunpack.c.h.b16 %v1707
  %v2453 = vunpack.c.l.b16 %v1708
  %v2454 = vunpack.c.h.b16 %v1708
  %v2455 = vunpack.c.l.b16 %v1709
  %v2456 = vunpack.c.h.b16 %v1709
  %v2457 = vunpack.c.l.b16 %v1710
  %v2458 = vunpack.c.h.b16 %v1710
  %v2459 = vunpack.c.l.b16 %v1711
  %v2460 = vunpack.c.h.b16 %v1711
  %v2461 = vunpack.c.l.b16 %v1712
  %v2462 = vunpack.c.h.b16 %v1712
  %v2463 = vunpack.c.l.b16 %v1713
  %v2464 = vunpack.c.h.b16 %v1713
  %v2465 = vunpack.c.l.b16 %v1714
  %v2466 = vunpack.c.h.b16 %v1714
  %v2467 = vunpack.c.l.b16 %v1715
  %v2468 = vunpack.c.h.b16 %v1715
  %v2469 = vunpack.c.l.b16 %v1716
  %v2470 = vunpack.c.h.b16 %v1716
  %v2471 = vunpack.c.l.b16 %v1717
  %v2472 = vunpack.c.h.b16 %v1717
  %v2473 = vunpack.c.l.b16 %v1718
  %v2474 = vunpack.c.h.b16 %v1718
  %v2475 = vunpack.c.l.b16 %v1719
  %v2476 = vunpack.c.h.b16 %v1719
  %v2477 = vunpack.c.l.b16 %v1720
  %v2478 = vunpack.c.h.b16 %v1720
  %v2479 = vunpack.c.l.b16 %v1721
  %v2480 = vunpack.c.h.b16 %v1721
  %v2481 = vunpack.c.l.b16 %v1722
  %v2482 = vunpack.c.h.b16 %v1722
  %v2483 = vunpack.c.l.b16 %v1723
  %v2484 = vunpack.c.h.b16 %v1723
  %v2485 = vunpack.c.l.b16 %v1724
  %v2486 = vunpack.c.h.b16 %v1724
  %v2487 = vunpack.c.l.b16 %v1725
  %v2488 = vunpack.c.h.b16 %v1725
  %v2489 = vunpack.c.l.b16 %v1726
  %v2490 = vunpack.c.h.b16 %v1726
  %v2491 = vunpack.c.l.b16 %v1727
  %v2492 = vunpack.c.h.b16 %v1727
  %v2493 = vunpack.c.l.b16 %v1728
  %v2494 = vunpack.c.h.b16 %v1728
  %v2495 = vunpack.c.l.b16 %v1729
  %v2496 = vunpack.c.h.b16 %v1729
  %v2497 = vunpack.c.l.b16 %v1730
  %v2498 = vunpack.c.h.b16 %v1730
  %v2499 = vunpack.c.l.b16 %v1731
  %v2500 = vunpack.c.h.b16 %v1731
  %v2501 = vunpack.c.l.b16 %v1732
  %v2502 = vunpack.c.h.b16 %v1732
  %v2503 = vunpack.c.l.b16 %v1733
  %v2504 = vunpack.c.h.b16 %v1733
  %v2505 = vunpack.c.l.b16 %v1734
  %v2506 = vunpack.c.h.b16 %v1734
  %v2507 = vunpack.c.l.b16 %v1735
  %v2508 = vunpack.c.h.b16 %v1735
  %v2509 = vunpack.c.l.b16 %v1736
  %v2510 = vunpack.c.h.b16 %v1736
  %v2511 = vunpack.c.l.b16 %v1737
  %v2512 = vunpack.c.h.b16 %v1737
  %v2513 = vunpack.c.l.b16 %v1738
  %v2514 = vunpack.c.h.b16 %v1738
  %v2515 = vunpack.c.l.b16 %v1739
  %v2516 = vunpack.c.h.b16 %v1739
  %v2517 = vunpack.c.l.b16 %v1740
  %v2518 = vunpack.c.h.b16 %v1740
  %v2519 = vunpack.c.l.b16 %v1741
  %v2520 = vunpack.c.h.b16 %v1741
  %v2521 = vunpack.c.l.b16 %v1742
  %v2522 = vunpack.c.h.b16 %v1742
  %v2523 = vunpack.c.l.b16 %v1743
  %v2524 = vunpack.c.h.b16 %v1743
  %v2525 = vunpack.c.l.b16 %v1744
  %v2526 = vunpack.c.h.b16 %v1744
  %v2527 = vunpack.c.l.b16 %v1745
  %v2528 = vunpack.c.h.b16 %v1745
  %v2529 = vunpack.c.l.b16 %v1746
  %v2530 = vunpack.c.h.b16 %v1746
  %v2531 = vunpack.c.l.b16 %v1747
  %v2532 = vunpack.c.h.b16 %v1747
  %v2533 = vunpack.c.l.b16 %v1748
  %v2534 = vunpack.c.h.b16 %v1748
  %v2535 = vunpack.c.l.b16 %v1749
  %v2536 = vunpack.c.h.b16 %v1749
  %v2537 = vunpack.c.l.b16 %v1750
  %v2538 = vunpack.c.h.b16 %v1750
  %v2539 = vunpack.c.l.b16 %v1751
  %v2540 = vunpack.c.h.b16 %v1751
  %v2541 = vunpack.c.l.b16 %v1752
  %v2542 = vunpack.c.h.b16 %v1752
  %v2543 = vunpack.c.l.b16 %v1753
  %v2544 = vunpack.c.h.b16 %v1753
  %v2545 = vunpack.c.l.b16 %v1754
  %v2546 = vunpack.c.h.b16 %v1754
  %v2547 = vunpack.c.l.b16 %v1755
  %v2548 = vunpack.c.h.b16 %v1755
  %v2549 = vunpack.c.l.b16 %v1756
  %v2550 = vunpack.c.h.b16 %v1756
  %v2551 = vunpack.c.l.b16 %v1757
  %v2552 = vunpack.c.h.b16 %v1757
  %v2553 = vunpack.c.l.b16 %v1758
  %v2554 = vunpack.c.h.b16 %v1758
  %v2555 = vunpack.c.l.b16 %v1759
  %v2556 = vunpack.c.h.b16 %v1759
  %v2557 = vunpack.c.l.b16 %v1760
  %v2558 = vunpack.c.h.b16 %v1760
  %v2559 = vunpack.c.l.b16 %v1761
  %v2560 = vunpack.c.h.b16 %v1761
  %v2561 = vunpack.c.l.b16 %v1762
  %v2562 = vunpack.c.h.b16 %v1762
  %v2563 = vunpack.c.l.b16 %v1763
  %v2564 = vunpack.c.h.b16 %v1763
  %v2565 = vunpack.c.l.b16 %v1764
  %v2566 = vunpack.c.h.b16 %v1764
  %v2567 = vunpack.c.l.b16 %v1765
  %v2568 = vunpack.c.h.b16 %v1765
  %v2569 = vunpack.c.l.b16 %v1766
  %v2570 = vunpack.c.h.b16 %v1766
  %v2571 = vunpack.c.l.b16 %v1767
  %v2572 = vunpack.c.h.b16 %v1767
  %v2573 = vunpack.c.l.b16 %v1768
  %v2574 = vunpack.c.h.b16 %v1768
  %v2575 = vunpack.c.l.b16 %v1769
  %v2576 = vunpack.c.h.b16 %v1769
  %v2577 = vunpack.c.l.b16 %v1770
  %v2578 = vunpack.c.h.b16 %v1770
  %v2579 = vunpack.c.l.b16 %v1771
  %v2580 = vunpack.c.h.b16 %v1771
  %v2581 = vunpack.c.l.b16 %v1772
  %v2582 = vunpack.c.h.b16 %v1772
  %v2583 = vunpack.c.l.b16 %v1773
  %v2584 = vunpack.c.h.b16 %v1773
  %v2585 = vunpack.c.l.b16 %v1774
  %v2586 = vunpack.c.h.b16 %v1774
  %v2587 = vunpack.c.l.b16 %v1775
  %v2588 = vunpack.c.h.b16 %v1775
  %v2589 = vunpack.c.l.b16 %v1776
  %v2590 = vunpack.c.h.b16 %v1776
  %v2591 = vunpack.c.l.b16 %v1777
  %v2592 = vunpack.c.h.b16 %v1777
  %v2593 = vunpack.c.l.b16 %v1778
  %v2594 = vunpack.c.h.b16 %v1778
  %v2595 = vunpack.c.l.b16 %v1779
  %v2596 = vunpack.c.h.b16 %v1779
  %v2597 = vunpack.c.l.b16 %v1780
  %v2598 = vunpack.c.h.b16 %v1780
  %v2599 = vunpack.c.l.b16 %v1781
  %v2600 = vunpack.c.h.b16 %v1781
  %v2601 = vunpack.c.l.b16 %v1782
  %v2602 = vunpack.c.h.b16 %v1782
  %v2603 = vunpack.c.l.b16 %v1783
  %v2604 = vunpack.c.h.b16 %v1783
  %v2605 = vunpack.c.l.b16 %v1784
  %v2606 = vunpack.c.h.b16 %v1784
  %v2607 = vunpack.c.l.b16 %v1785
  %v2608 = vunpack.c.h.b16 %v1785
  %v2609 = vunpack.c.l.b16 %v1786
  %v2610 = vunpack.c.h.b16 %v1786
  %v2611 = vunpack.c.l.b16 %v1787
  %v2612 = vunpack.c.h.b16 %v1787
  %v2613 = vunpack.c.l.b16 %v1788
  %v2614 = vunpack.c.h.b16 %v1788
  %v2615 = vunpack.c.l.b16 %v1789
  %v2616 = vunpack.c.h.b16 %v1789
  %v2617 = vunpack.c.l.b16 %v1790
  %v2618 = vunpack.c.h.b16 %v1790
  %v2619 = vunpack.c.l.b16 %v1791
  %v2620 = vunpack.c.h.b16 %v1791
  %v2621 = vunpack.c.l.b16 %v1792
  %v2622 = vunpack.c.h.b16 %v1792
  %v2623 = vunpack.c.l.b16 %v1793
  %v2624 = vunpack.c.h.b16 %v1793
  %v2625 = vunpack.c.l.b16 %v1794
  %v2626 = vunpack.c.h.b16 %v1794
  %v2627 = vunpack.c.l.b16 %v1795
  %v2628 = vunpack.c.h.b16 %v1795
  %v2629 = vunpack.c.l.b16 %v1796
  %v2630 = vunpack.c.h.b16 %v1796
  %v2631 = vunpack.c.l.b16 %v1797
  %v2632 = vunpack.c.h.b16 %v1797
  %v2633 = vunpack.c.l.b16 %v1798
  %v2634 = vunpack.c.h.b16 %v1798
  %v2635 = vunpack.c.l.b16 %v1799
  %v2636 = vunpack.c.h.b16 %v1799
  %v2637 = vunpack.c.l.b16 %v1800
  %v2638 = vunpack.c.h.b16 %v1800
  %v2639 = vunpack.c.l.b16 %v1801
  %v2640 = vunpack.c.h.b16 %v1801
  %v2641 = vunpack.c.l.b16 %v1802
  %v2642 = vunpack.c.h.b16 %v1802
  %v2643 = vunpack.c.l.b16 %v1803
  %v2644 = vunpack.c.h.b16 %v1803
  %v2645 = vunpack.c.l.b16 %v1804
  %v2646 = vunpack.c.h.b16 %v1804
  %v2647 = vunpack.c.l.b16 %v1805
  %v2648 = vunpack.c.h.b16 %v1805
  %v2649 = vunpack.c.l.b16 %v1806
  %v2650 = vunpack.c.h.b16 %v1806
  %v2651 = vunpack.c.l.b16 %v1807
  %v2652 = vunpack.c.h.b16 %v1807
  %v2653 = vunpack.c.l.b16 %v1808
  %v2654 = vunpack.c.h.b16 %v1808
  %v2655 = vunpack.c.l.b16 %v1809
  %v2656 = vunpack.c.h.b16 %v1809
  %v2657 = vunpack.c.l.b16 %v1810
  %v2658 = vunpack.c.h.b16 %v1810
  %v2659 = vunpack.c.l.b16 %v1811
  %v2660 = vunpack.c.h.b16 %v1811
  %v2661 = vunpack.c.l.b16 %v1812
  %v2662 = vunpack.c.h.b16 %v1812
  %v2663 = vunpack.c.l.b16 %v1813
  %v2664 = vunpack.c.h.b16 %v1813
  %v2665 = vunpack.c.l.b16 %v1814
  %v2666 = vunpack.c.h.b16 %v1814
  %v2667 = vunpack.c.l.b16 %v1815
  %v2668 = vunpack.c.h.b16 %v1815
  %v2669 = vunpack.c.l.b16 %v1816
  %v2670 = vunpack.c.h.b16 %v1816
  %v2671 = vunpack.c.l.b16 %v1817
  %v2672 = vunpack.c.h.b16 %v1817
  %v2673 = vunpack.c.l.b16 %v1818
  %v2674 = vunpack.c.h.b16 %v1818
  %v2675 = vunpack.c.l.b16 %v1819
  %v2676 = vunpack.c.h.b16 %v1819
  %v2677 = vunpack.c.l.b16 %v1820
  %v2678 = vunpack.c.h.b16 %v1820
  %v2679 = vunpack.c.l.b16 %v1821
  %v2680 = vunpack.c.h.b16 %v1821
  %v2681 = vunpack.c.l.b16 %v1822
  %v2682 = vunpack.c.h.b16 %v1822
  %v2683 = vunpack.c.l.b16 %v1823
  %v2684 = vunpack.c.h.b16 %v1823
  %v2685 = vunpack.c.l.b16 %v1824
  %v2686 = vunpack.c.h.b16 %v1824
  %v2687 = vunpack.c.l.b16 %v1825
  %v2688 = vunpack.c.h.b16 %v1825
  %v2689 = vunpack.c.l.b16 %v1826
  %v2690 = vunpack.c.h.b16 %v1826
  %v2691 = vpack.c.b16 %v2119, %v2115
  %v2692 = vpack.c.b16 %v2120, %v2116
  %v2693 = vpack.c.b16 %v2121, %v2117
  %v2694 = vpack.c.b16 %v2122, %v2118
  %v2695 = vpack.c.b16 %v2127, %v2123
  %v2696 = vpack.c.b16 %v2128, %v2124
  %v2697 = vpack.c.b16 %v2129, %v2125
  %v2698 = vpack.c.b16 %v2130, %v2126
  %v2699 = vpack.c.b16 %v2135, %v2131
  %v2700 = vpack.c.b16 %v2136, %v2132
  %v2701 = vpack.c.b16 %v2137, %v2133
  %v2702 = vpack.c.b16 %v2138, %v2134
  %v2703 = vpack.c.b16 %v2143, %v2139
  %v2704 = vpack.c.b16 %v2144, %v2140
  %v2705 = vpack.c.b16 %v2145, %v2141
  %v2706 = vpack.c.b16 %v2146, %v2142
  %v2707 = vpack.c.b16 %v2151, %v2147
  %v2708 = vpack.c.b16 %v2152, %v2148
  %v2709 = vpack.c.b16 %v2153, %v2149
  %v2710 = vpack.c.b16 %v2154, %v2150
  %v2711 = vpack.c.b16 %v2159, %v2155
  %v2712 = vpack.c.b16 %v2160, %v2156
  %v2713 = vpack.c.b16 %v2161, %v2157
  %v2714 = vpack.c.b16 %v2162, %v2158
  %v2715 = vpack.c.b16 %v2167, %v2163
  %v2716 = vpack.c.b16 %v2168, %v2164
  %v2717 = vpack.c.b16 %v2169, %v2165
  %v2718 = vpack.c.b16 %v2170, %v2166
  %v2719 = vpack.c.b16 %v2175, %v2171
  %v2720 = vpack.c.b16 %v2176, %v2172
  %v2721 = vpack.c.b16 %v2177, %v2173
  %v2722 = vpack.c.b16 %v2178, %v2174
  %v2723 = vpack.c.b16 %v2183, %v2179
  %v2724 = vpack.c.b16 %v2184, %v2180
  %v2725 = vpack.c.b16 %v2185, %v2181
  %v2726 = vpack.c.b16 %v2186, %v2182
  %v2727 = vpack.c.b16 %v2191, %v2187
  %v2728 = vpack.c.b16 %v2192, %v2188
  %v2729 = vpack.c.b16 %v2193, %v2189
  %v2730 = vpack.c.b16 %v2194, %v2190
  %v2731 = vpack.c.b16 %v2199, %v2195
  %v2732 = vpack.c.b16 %v2200, %v2196
  %v2733 = vpack.c.b16 %v2201, %v2197
  %v2734 = vpack.c.b16 %v2202, %v2198
  %v2735 = vpack.c.b16 %v2207, %v2203
  %v2736 = vpack.c.b16 %v2208, %v2204
  %v2737 = vpack.c.b16 %v2209, %v2205
  %v2738 = vpack.c.b16 %v2210, %v2206
  %v2739 = vpack.c.b16 %v2215, %v2211
  %v2740 = vpack.c.b16 %v2216, %v2212
  %v2741 = vpack.c.b16 %v2217, %v2213
  %v2742 = vpack.c.b16 %v2218, %v2214
  %v2743 = vpack.c.b16 %v2223, %v2219
  %v2744 = vpack.c.b16 %v2224, %v2220
  %v2745 = vpack.c.b16 %v2225, %v2221
  %v2746 = vpack.c.b16 %v2226, %v2222
  %v2747 = vpack.c.b16 %v2231, %v2227
  %v2748 = vpack.c.b16 %v2232, %v2228
  %v2749 = vpack.c.b16 %v2233, %v2229
  %v2750 = vpack.c.b16 %v2234, %v2230
  %v2751 = vpack.c.b16 %v2239, %v2235
  %v2752 = vpack.c.b16 %v2240, %v2236
  %v2753 = vpack.c.b16 %v2241, %v2237
  %v2754 = vpack.c.b16 %v2242, %v2238
  %v2755 = vpack.c.b16 %v2247, %v2243
  %v2756 = vpack.c.b16 %v2248, %v2244
  %v2757 = vpack.c.b16 %v2249, %v2245
  %v2758 = vpack.c.b16 %v2250, %v2246
  %v2759 = vpack.c.b16 %v2255, %v2251
  %v2760 = vpack.c.b16 %v2256, %v2252
  %v2761 = vpack.c.b16 %v2257, %v2253
  %v2762 = vpack.c.b16 %v2258, %v2254
  %v2763 = vpack.c.b16 %v2263, %v2259
  %v2764 = vpack.c.b16 %v2264, %v2260
  %v2765 = vpack.c.b16 %v2265, %v2261
  %v2766 = vpack.c.b16 %v2266, %v2262
  %v2767 = vpack.c.b16 %v2271, %v2267
  %v2768 = vpack.c.b16 %v2272, %v2268
  %v2769 = vpack.c.b16 %v2273, %v2269
  %v2770 = vpack.c.b16 %v2274, %v2270
  %v2771 = vpack.c.b16 %v2279, %v2275
  %v2772 = vpack.c.b16 %v2280, %v2276
  %v2773 = vpack.c.b16 %v2281, %v2277
  %v2774 = vpack.c.b16 %v2282, %v2278
  %v2775 = vpack.c.b16 %v2287, %v2283
  %v2776 = vpack.c.b16 %v2288, %v2284
  %v2777 = vpack.c.b16 %v2289, %v2285
  %v2778 = vpack.c.b16 %v2290, %v2286
  %v2779 = vpack.c.b16 %v2295, %v2291
  %v2780 = vpack.c.b16 %v2296, %v2292
  %v2781 = vpack.c.b16 %v2297, %v2293
  %v2782 = vpack.c.b16 %v2298, %v2294
  %v2783 = vpack.c.b16 %v2303, %v2299
  %v2784 = vpack.c.b16 %v2304, %v2300
  %v2785 = vpack.c.b16 %v2305, %v2301
  %v2786 = vpack.c.b16 %v2306, %v2302
  %v2787 = vpack.c.b16 %v2311, %v2307
  %v2788 = vpack.c.b16 %v2312, %v2308
  %v2789 = vpack.c.b16 %v2313, %v2309
  %v2790 = vpack.c.b16 %v2314, %v2310
  %v2791 = vpack.c.b16 %v2319, %v2315
  %v2792 = vpack.c.b16 %v2320, %v2316
  %v2793 = vpack.c.b16 %v2321, %v2317
  %v2794 = vpack.c.b16 %v2322, %v2318
  %v2795 = vpack.c.b16 %v2327, %v2323
  %v2796 = vpack.c.b16 %v2328, %v2324
  %v2797 = vpack.c.b16 %v2329, %v2325
  %v2798 = vpack.c.b16 %v2330, %v2326
  %v2799 = vpack.c.b16 %v2335, %v2331
  %v2800 = vpack.c.b16 %v2336, %v2332
  %v2801 = vpack.c.b16 %v2337, %v2333
  %v2802 = vpack.c.b16 %v2338, %v2334
  %v2803 = vpack.c.b16 %v2343, %v2339
  %v2804 = vpack.c.b16 %v2344, %v2340
  %v2805 = vpack.c.b16 %v2345, %v2341
  %v2806 = vpack.c.b16 %v2346, %v2342
  %v2807 = vpack.c.b16 %v2351, %v2347
  %v2808 = vpack.c.b16 %v2352, %v2348
  %v2809 = vpack.c.b16 %v2353, %v2349
  %v2810 = vpack.c.b16 %v2354, %v2350
  %v2811 = vpack.c.b16 %v2359, %v2355
  %v2812 = vpack.c.b16 %v2360, %v2356
  %v2813 = vpack.c.b16 %v2361, %v2357
  %v2814 = vpack.c.b16 %v2362, %v2358
  %v2815 = vpack.c.b16 %v2367, %v2363
  %v2816 = vpack.c.b16 %v2368, %v2364
  %v2817 = vpack.c.b16 %v2369, %v2365
  %v2818 = vpack.c.b16 %v2370, %v2366
  %v2819 = vpack.c.b16 %v2375, %v2371
  %v2820 = vpack.c.b16 %v2376, %v2372
  %v2821 = vpack.c.b16 %v2377, %v2373
  %v2822 = vpack.c.b16 %v2378, %v2374
  %v2823 = vpack.c.b16 %v2383, %v2379
  %v2824 = vpack.c.b16 %v2384, %v2380
  %v2825 = vpack.c.b16 %v2385, %v2381
  %v2826 = vpack.c.b16 %v2386, %v2382
  %v2827 = vpack.c.b16 %v2391, %v2387
  %v2828 = vpack.c.b16 %v2392, %v2388
  %v2829 = vpack.c.b16 %v2393, %v2389
  %v2830 = vpack.c.b16 %v2394, %v2390
  %v2831 = vpack.c.b16 %v2399, %v2395
  %v2832 = vpack.c.b16 %v2400, %v2396
  %v2833 = vpack.c.b16 %v2401, %v2397
  %v2834 = vpack.c.b16 %v2402, %v2398
  %v2835 = vpack.c.b16 %v2407, %v2403
  %v2836 = vpack.c.b16 %v2408, %v2404
  %v2837 = vpack.c.b16 %v2409, %v2405
  %v2838 = vpack.c.b16 %v2410, %v2406
  %v2839 = vpack.c.b16 %v2415, %v2411
  %v2840 = vpack.c.b16 %v2416, %v2412
  %v2841 = vpack.c.b16 %v2417, %v2413
  %v2842 = vpack.c.b16 %v2418, %v2414
  %v2843 = vpack.c.b16 %v2423, %v2419
  %v2844 = vpack.c.b16 %v2424, %v2420
  %v2845 = vpack.c.b16 %v2425, %v2421
  %v2846 = vpack.c.b16 %v2426, %v2422
  %v2847 = vpack.c.b16 %v2431, %v2427
  %v2848 = vpack.c.b16 %v2432, %v2428
  %v2849 = vpack.c.b16 %v2433, %v2429
  %v2850 = vpack.c.b16 %v2434, %v2430
  %v2851 = vpack.c.b16 %v2439, %v2435
  %v2852 = vpack.c.b16 %v2440, %v2436
  %v2853 = vpack.c.b16 %v2441, %v2437
  %v2854 = vpack.c.b16 %v2442, %v2438
  %v2855 = vpack.c.b16 %v2447, %v2443
  %v2856 = vpack.c.b16 %v2448, %v2444
  %v2857 = vpack.c.b16 %v2449, %v2445
  %v2858 = vpack.c.b16 %v2450, %v2446
  %v2859 = vpack.c.b16 %v2455, %v2451
  %v2860 = vpack.c.b16 %v2456, %v2452
  %v2861 = vpack.c.b16 %v2457, %v2453
  %v2862 = vpack.c.b16 %v2458, %v2454
  %v2863 = vpack.c.b16 %v2463, %v2459
  %v2864 = vpack.c.b16 %v2464, %v2460
  %v2865 = vpack.c.b16 %v2465, %v2461
  %v2866 = vpack.c.b16 %v2466, %v2462
  %v2867 = vpack.c.b16 %v2471, %v2467
  %v2868 = vpack.c.b16 %v2472, %v2468
  %v2869 = vpack.c.b16 %v2473, %v2469
  %v2870 = vpack.c.b16 %v2474, %v2470
  %v2871 = vpack.c.b16 %v2479, %v2475
  %v2872 = vpack.c.b16 %v2480, %v2476
  %v2873 = vpack.c.b16 %v2481, %v2477
  %v2874 = vpack.c.b16 %v2482, %v2478
  %v2875 = vpack.c.b16 %v2487, %v2483
  %v2876 = vpack.c.b16 %v2488, %v2484
  %v2877 = vpack.c.b16 %v2489, %v2485
  %v2878 = vpack.c.b16 %v2490, %v2486
  %v2879 = vpack.c.b16 %v2495, %v2491
  %v2880 = vpack.c.b16 %v2496, %v2492
  %v2881 = vpack.c.b16 %v2497, %v2493
  %v2882 = vpack.c.b16 %v2498, %v2494
  %v2883 = vpack.c.b16 %v2503, %v2499
  %v2884 = vpack.c.b16 %v2504, %v2500
  %v2885 = vpack.c.b16 %v2505, %v2501
  %v2886 = vpack.c.b16 %v2506, %v2502
  %v2887 = vpack.c.b16 %v2511, %v2507
  %v2888 = vpack.c.b16 %v2512, %v2508
  %v2889 = vpack.c.b16 %v2513, %v2509
  %v2890 = vpack.c.b16 %v2514, %v2510
  %v2891 = vpack.c.b16 %v2519, %v2515
  %v2892 = vpack.c.b16 %v2520, %v2516
  %v2893 = vpack.c.b16 %v2521, %v2517
  %v2894 = vpack.c.b16 %v2522, %v2518
  %v2895 = vpack.c.b16 %v2527, %v2523
  %v2896 = vpack.c.b16 %v2528, %v2524
  %v2897 = vpack.c.b16 %v2529, %v2525
  %v2898 = vpack.c.b16 %v2530, %v2526
  %v2899 = vpack.c.b16 %v2535, %v2531
  %v2900 = vpack.c.b16 %v2536, %v2532
  %v2901 = vpack.c.b16 %v2537, %v2533
  %v2902 = vpack.c.b16 %v2538, %v2534
  %v2903 = vpack.c.b16 %v2543, %v2539
  %v2904 = vpack.c.b16 %v2544, %v2540
  %v2905 = vpack.c.b16 %v2545, %v2541
  %v2906 = vpack.c.b16 %v2546, %v2542
  %v2907 = vpack.c.b16 %v2551, %v2547
  %v2908 = vpack.c.b16 %v2552, %v2548
  %v2909 = vpack.c.b16 %v2553, %v2549
  %v2910 = vpack.c.b16 %v2554, %v2550
  %v2911 = vpack.c.b16 %v2559, %v2555
  %v2912 = vpack.c.b16 %v2560, %v2556
  %v2913 = vpack.c.b16 %v2561, %v2557
  %v2914 = vpack.c.b16 %v2562, %v2558
  %v2915 = vpack.c.b16 %v2567, %v2563
  %v2916 = vpack.c.b16 %v2568, %v2564
  %v2917 = vpack.c.b16 %v2569, %v2565
  %v2918 = vpack.c.b16 %v2570, %v2566
  %v2919 = vpack.c.b16 %v2575, %v2571
  %v2920 = vpack.c.b16 %v2576, %v2572
  %v2921 = vpack.c.b16 %v2577, %v2573
  %v2922 = vpack.c.b16 %v2578, %v2574
  %v2923 = vpack.c.b16 %v2583, %v2579
  %v2924 = vpack.c.b16 %v2584, %v2580
  %v2925 = vpack.c.b16 %v2585, %v2581
  %v2926 = vpack.c.b16 %v2586, %v2582
  %v2927 = vpack.c.b16 %v2591, %v2587
  %v2928 = vpack.c.b16 %v2592, %v2588
  %v2929 = vpack.c.b16 %v2593, %v2589
  %v2930 = vpack.c.b16 %v2594, %v2590
  %v2931 = vpack.c.b16 %v2599, %v2595
  %v2932 = vpack.c.b16 %v2600, %v2596
  %v2933 = vpack.c.b16 %v2601, %v2597
  %v2934 = vpack.c.b16 %v2602, %v2598
  %v2935 = vpack.c.b16 %v2607, %v2603
  %v2936 = vpack.c.b16 %v2608, %v2604
  %v2937 = vpack.c.b16 %v2609, %v2605
  %v2938 = vpack.c.b16 %v2610, %v2606
  %v2939 = vpack.c.b16 %v2615, %v2611
  %v2940 = vpack.c.b16 %v2616, %v2612
  %v2941 = vpack.c.b16 %v2617, %v2613
  %v2942 = vpack.c.b16 %v2618, %v2614
  %v2943 = vpack.c.b16 %v2623, %v2619
  %v2944 = vpack.c.b16 %v2624, %v2620
  %v2945 = vpack.c.b16 %v2625, %v2621
  %v2946 = vpack.c.b16 %v2626, %v2622
  %v2947 = vpack.c.b16 %v2631, %v2627
  %v2948 = vpack.c.b16 %v2632, %v2628
  %v2949 = vpack.c.b16 %v2633, %v2629
  %v2950 = vpack.c.b16 %v2634, %v2630
  %v2951 = vpack.c.b16 %v2639, %v2635
  %v2952 = vpack.c.b16 %v2640, %v2636
  %v2953 = vpack.c.b16 %v2641, %v2637
  %v2954 = vpack.c.b16 %v2642, %v2638
  %v2955 = vpack.c.b16 %v2647, %v2643
  %v2956 = vpack.c.b16 %v2648, %v2644
  %v2957 = vpack.c.b16 %v2649, %v2645
  %v2958 = vpack.c.b16 %v2650, %v2646
  %v2959 = vpack.c.b16 %v2655, %v2651
  %v2960 = vpack.c.b16 %v2656, %v2652
  %v2961 = vpack.c.b16 %v2657, %v2653
  %v2962 = vpack.c.b16 %v2658, %v2654
  %v2963 = vpack.c.b16 %v2663, %v2659
  %v2964 = vpack.c.b16 %v2664, %v2660
  %v2965 = vpack.c.b16 %v2665, %v2661
  %v2966 = vpack.c.b16 %v2666, %v2662
  %v2967 = vpack.c.b16 %v2671, %v2667
  %v2968 = vpack.c.b16 %v2672, %v2668
  %v2969 = vpack.c.b16 %v2673, %v2669
  %v2970 = vpack.c.b16 %v2674, %v2670
  %v2971 = vpack.c.b16 %v2679, %v2675
  %v2972 = vpack.c.b16 %v2680, %v2676
  %v2973 = vpack.c.b16 %v2681, %v2677
  %v2974 = vpack.c.b16 %v2682, %v2678
  %v2975 = vpack.c.b16 %v2687, %v2683
  %v2976 = vpack.c.b16 %v2688, %v2684
  %v2977 = vpack.c.b16 %v2689, %v2685
  %v2978 = vpack.c.b16 %v2690, %v2686
  %3267 = vmatpush.bf16.msra.mxu0 %v1514
  %3268 = vmatpush.bf16.msra.mxu0 %v1513
  %3269 = vmatpush.bf16.msra.mxu0 %v1512
  %3270 = vmatpush.bf16.msra.mxu0 %v1511
  %3271 = vmatpush.bf16.msra.mxu0 %v1510
  %3272 = vmatpush.bf16.msra.mxu0 %v1509
  %3273 = vmatpush.bf16.msra.mxu0 %v1508
  %3274 = vmatpush.bf16.msra.mxu0 %v1507
  %3275 = vmatmul.bf16.gmra.mxu0 %v2691
  %v3276 = vpop.f32.mrf.mxu0
  %v3277 = vadd.f32 0.0, %v3276
  %v3278 = vpop.f32.mrf.mxu0
  %v3279 = vadd.f32 0.0, %v3278
  %3280 = vmatmul.bf16.gmra.mxu0 %v2695
  %v3281 = vpop.f32.mrf.mxu0
  %v3282 = vadd.f32 0.0, %v3281
  %v3283 = vpop.f32.mrf.mxu0
  %v3284 = vadd.f32 0.0, %v3283
  %3285 = vmatmul.bf16.gmra.mxu0 %v2699
  %v3286 = vpop.f32.mrf.mxu0
  %v3287 = vadd.f32 0.0, %v3286
  %v3288 = vpop.f32.mrf.mxu0
  %v3289 = vadd.f32 0.0, %v3288
  %3290 = vmatmul.bf16.gmra.mxu0 %v2703
  %v3291 = vpop.f32.mrf.mxu0
  %v3292 = vadd.f32 0.0, %v3291
  %v3293 = vpop.f32.mrf.mxu0
  %v3294 = vadd.f32 0.0, %v3293
  %3295 = vmatmul.bf16.gmra.mxu0 %v2707
  %v3296 = vpop.f32.mrf.mxu0
  %v3297 = vadd.f32 0.0, %v3296
  %v3298 = vpop.f32.mrf.mxu0
  %v3299 = vadd.f32 0.0, %v3298
  %3300 = vmatmul.bf16.gmra.mxu0 %v2711
  %v3301 = vpop.f32.mrf.mxu0
  %v3302 = vadd.f32 0.0, %v3301
  %v3303 = vpop.f32.mrf.mxu0
  %v3304 = vadd.f32 0.0, %v3303
  %3305 = vmatmul.bf16.gmra.mxu0 %v2715
  %v3306 = vpop.f32.mrf.mxu0
  %v3307 = vadd.f32 0.0, %v3306
  %v3308 = vpop.f32.mrf.mxu0
  %v3309 = vadd.f32 0.0, %v3308
  %3310 = vmatmul.bf16.gmra.mxu0 %v2719
  %v3311 = vpop.f32.mrf.mxu0
  %v3312 = vadd.f32 0.0, %v3311
  %v3313 = vpop.f32.mrf.mxu0
  %v3314 = vadd.f32 0.0, %v3313
  %3315 = vmatmul.bf16.gmra.mxu0 %v2723
  %v3316 = vpop.f32.mrf.mxu0
  %v3317 = vadd.f32 0.0, %v3316
  %v3318 = vpop.f32.mrf.mxu0
  %v3319 = vadd.f32 0.0, %v3318
  %3320 = vmatmul.bf16.gmra.mxu0 %v2727
  %v3321 = vpop.f32.mrf.mxu0
  %v3322 = vadd.f32 0.0, %v3321
  %v3323 = vpop.f32.mrf.mxu0
  %v3324 = vadd.f32 0.0, %v3323
  %3325 = vmatmul.bf16.gmra.mxu0 %v2731
  %v3326 = vpop.f32.mrf.mxu0
  %v3327 = vadd.f32 0.0, %v3326
  %v3328 = vpop.f32.mrf.mxu0
  %v3329 = vadd.f32 0.0, %v3328
  %3330 = vmatmul.bf16.gmra.mxu0 %v2735
  %v3331 = vpop.f32.mrf.mxu0
  %v3332 = vadd.f32 0.0, %v3331
  %v3333 = vpop.f32.mrf.mxu0
  %v3334 = vadd.f32 0.0, %v3333
  %3335 = vmatmul.bf16.gmra.mxu0 %v2739
  %v3336 = vpop.f32.mrf.mxu0
  %v3337 = vadd.f32 0.0, %v3336
  %v3338 = vpop.f32.mrf.mxu0
  %v3339 = vadd.f32 0.0, %v3338
  %3340 = vmatmul.bf16.gmra.mxu0 %v2743
  %v3341 = vpop.f32.mrf.mxu0
  %v3342 = vadd.f32 0.0, %v3341
  %v3343 = vpop.f32.mrf.mxu0
  %v3344 = vadd.f32 0.0, %v3343
  %3345 = vmatmul.bf16.gmra.mxu0 %v2747
  %v3346 = vpop.f32.mrf.mxu0
  %v3347 = vadd.f32 0.0, %v3346
  %v3348 = vpop.f32.mrf.mxu0
  %v3349 = vadd.f32 0.0, %v3348
  %3350 = vmatmul.bf16.gmra.mxu0 %v2751
  %v3351 = vpop.f32.mrf.mxu0
  %v3352 = vadd.f32 0.0, %v3351
  %v3353 = vpop.f32.mrf.mxu0
  %v3354 = vadd.f32 0.0, %v3353
  %3355 = vmatmul.bf16.gmra.mxu0 %v2755
  %v3356 = vpop.f32.mrf.mxu0
  %v3357 = vadd.f32 0.0, %v3356
  %v3358 = vpop.f32.mrf.mxu0
  %v3359 = vadd.f32 0.0, %v3358
  %3360 = vmatmul.bf16.gmra.mxu0 %v2759
  %v3361 = vpop.f32.mrf.mxu0
  %v3362 = vadd.f32 0.0, %v3361
  %v3363 = vpop.f32.mrf.mxu0
  %v3364 = vadd.f32 0.0, %v3363
  %3365 = vmatmul.bf16.gmra.mxu0 %v2763
  %v3366 = vpop.f32.mrf.mxu0
  %v3367 = vadd.f32 0.0, %v3366
  %v3368 = vpop.f32.mrf.mxu0
  %v3369 = vadd.f32 0.0, %v3368
  %3370 = vmatmul.bf16.gmra.mxu0 %v2767
  %v3371 = vpop.f32.mrf.mxu0
  %v3372 = vadd.f32 0.0, %v3371
  %v3373 = vpop.f32.mrf.mxu0
  %v3374 = vadd.f32 0.0, %v3373
  %3375 = vmatmul.bf16.gmra.mxu0 %v2771
  %v3376 = vpop.f32.mrf.mxu0
  %v3377 = vadd.f32 0.0, %v3376
  %v3378 = vpop.f32.mrf.mxu0
  %v3379 = vadd.f32 0.0, %v3378
  %3380 = vmatmul.bf16.gmra.mxu0 %v2775
  %v3381 = vpop.f32.mrf.mxu0
  %v3382 = vadd.f32 0.0, %v3381
  %v3383 = vpop.f32.mrf.mxu0
  %v3384 = vadd.f32 0.0, %v3383
  %3385 = vmatmul.bf16.gmra.mxu0 %v2779
  %v3386 = vpop.f32.mrf.mxu0
  %v3387 = vadd.f32 0.0, %v3386
  %v3388 = vpop.f32.mrf.mxu0
  %v3389 = vadd.f32 0.0, %v3388
  %3390 = vmatmul.bf16.gmra.mxu0 %v2783
  %v3391 = vpop.f32.mrf.mxu0
  %v3392 = vadd.f32 0.0, %v3391
  %v3393 = vpop.f32.mrf.mxu0
  %v3394 = vadd.f32 0.0, %v3393
  %3395 = vmatmul.bf16.gmra.mxu0 %v2787
  %v3396 = vpop.f32.mrf.mxu0
  %v3397 = vadd.f32 0.0, %v3396
  %v3398 = vpop.f32.mrf.mxu0
  %v3399 = vadd.f32 0.0, %v3398
  %3400 = vmatmul.bf16.gmra.mxu0 %v2791
  %v3401 = vpop.f32.mrf.mxu0
  %v3402 = vadd.f32 0.0, %v3401
  %v3403 = vpop.f32.mrf.mxu0
  %v3404 = vadd.f32 0.0, %v3403
  %3405 = vmatmul.bf16.gmra.mxu0 %v2795
  %v3406 = vpop.f32.mrf.mxu0
  %v3407 = vadd.f32 0.0, %v3406
  %v3408 = vpop.f32.mrf.mxu0
  %v3409 = vadd.f32 0.0, %v3408
  %3410 = vmatmul.bf16.gmra.mxu0 %v2799
  %v3411 = vpop.f32.mrf.mxu0
  %v3412 = vadd.f32 0.0, %v3411
  %v3413 = vpop.f32.mrf.mxu0
  %v3414 = vadd.f32 0.0, %v3413
  %3415 = vmatmul.bf16.gmra.mxu0 %v2803
  %v3416 = vpop.f32.mrf.mxu0
  %v3417 = vadd.f32 0.0, %v3416
  %v3418 = vpop.f32.mrf.mxu0
  %v3419 = vadd.f32 0.0, %v3418
  %3420 = vmatmul.bf16.gmra.mxu0 %v2807
  %v3421 = vpop.f32.mrf.mxu0
  %v3422 = vadd.f32 0.0, %v3421
  %v3423 = vpop.f32.mrf.mxu0
  %v3424 = vadd.f32 0.0, %v3423
  %3425 = vmatmul.bf16.gmra.mxu0 %v2811
  %v3426 = vpop.f32.mrf.mxu0
  %v3427 = vadd.f32 0.0, %v3426
  %v3428 = vpop.f32.mrf.mxu0
  %v3429 = vadd.f32 0.0, %v3428
  %3430 = vmatmul.bf16.gmra.mxu0 %v2815
  %v3431 = vpop.f32.mrf.mxu0
  %v3432 = vadd.f32 0.0, %v3431
  %v3433 = vpop.f32.mrf.mxu0
  %v3434 = vadd.f32 0.0, %v3433
  %3435 = vmatmul.bf16.gmra.mxu0 %v2819
  %v3436 = vpop.f32.mrf.mxu0
  %v3437 = vadd.f32 0.0, %v3436
  %v3438 = vpop.f32.mrf.mxu0
  %v3439 = vadd.f32 0.0, %v3438
  %3440 = vmatmul.bf16.gmra.mxu0 %v2823
  %v3441 = vpop.f32.mrf.mxu0
  %v3442 = vadd.f32 0.0, %v3441
  %v3443 = vpop.f32.mrf.mxu0
  %v3444 = vadd.f32 0.0, %v3443
  %3445 = vmatmul.bf16.gmra.mxu0 %v2827
  %v3446 = vpop.f32.mrf.mxu0
  %v3447 = vadd.f32 0.0, %v3446
  %v3448 = vpop.f32.mrf.mxu0
  %v3449 = vadd.f32 0.0, %v3448
  %3450 = vmatmul.bf16.gmra.mxu0 %v2831
  %v3451 = vpop.f32.mrf.mxu0
  %v3452 = vadd.f32 0.0, %v3451
  %v3453 = vpop.f32.mrf.mxu0
  %v3454 = vadd.f32 0.0, %v3453
  %3455 = vmatmul.bf16.gmra.mxu0 %v2835
  %v3456 = vpop.f32.mrf.mxu0
  %v3457 = vadd.f32 0.0, %v3456
  %v3458 = vpop.f32.mrf.mxu0
  %v3459 = vadd.f32 0.0, %v3458
  %3460 = vmatmul.bf16.gmra.mxu0 %v2839
  %v3461 = vpop.f32.mrf.mxu0
  %v3462 = vadd.f32 0.0, %v3461
  %v3463 = vpop.f32.mrf.mxu0
  %v3464 = vadd.f32 0.0, %v3463
  %3465 = vmatmul.bf16.gmra.mxu0 %v2843
  %v3466 = vpop.f32.mrf.mxu0
  %v3467 = vadd.f32 0.0, %v3466
  %v3468 = vpop.f32.mrf.mxu0
  %v3469 = vadd.f32 0.0, %v3468
  %3470 = vmatmul.bf16.gmra.mxu0 %v2847
  %v3471 = vpop.f32.mrf.mxu0
  %v3472 = vadd.f32 0.0, %v3471
  %v3473 = vpop.f32.mrf.mxu0
  %v3474 = vadd.f32 0.0, %v3473
  %3475 = vmatmul.bf16.gmra.mxu0 %v2851
  %v3476 = vpop.f32.mrf.mxu0
  %v3477 = vadd.f32 0.0, %v3476
  %v3478 = vpop.f32.mrf.mxu0
  %v3479 = vadd.f32 0.0, %v3478
  %3480 = vmatmul.bf16.gmra.mxu0 %v2855
  %v3481 = vpop.f32.mrf.mxu0
  %v3482 = vadd.f32 0.0, %v3481
  %v3483 = vpop.f32.mrf.mxu0
  %v3484 = vadd.f32 0.0, %v3483
  %3485 = vmatmul.bf16.gmra.mxu0 %v2859
  %v3486 = vpop.f32.mrf.mxu0
  %v3487 = vadd.f32 0.0, %v3486
  %v3488 = vpop.f32.mrf.mxu0
  %v3489 = vadd.f32 0.0, %v3488
  %3490 = vmatmul.bf16.gmra.mxu0 %v2863
  %v3491 = vpop.f32.mrf.mxu0
  %v3492 = vadd.f32 0.0, %v3491
  %v3493 = vpop.f32.mrf.mxu0
  %v3494 = vadd.f32 0.0, %v3493
  %3495 = vmatmul.bf16.gmra.mxu0 %v2867
  %v3496 = vpop.f32.mrf.mxu0
  %v3497 = vadd.f32 0.0, %v3496
  %v3498 = vpop.f32.mrf.mxu0
  %v3499 = vadd.f32 0.0, %v3498
  %3500 = vmatmul.bf16.gmra.mxu0 %v2871
  %v3501 = vpop.f32.mrf.mxu0
  %v3502 = vadd.f32 0.0, %v3501
  %v3503 = vpop.f32.mrf.mxu0
  %v3504 = vadd.f32 0.0, %v3503
  %3505 = vmatmul.bf16.gmra.mxu0 %v2875
  %v3506 = vpop.f32.mrf.mxu0
  %v3507 = vadd.f32 0.0, %v3506
  %v3508 = vpop.f32.mrf.mxu0
  %v3509 = vadd.f32 0.0, %v3508
  %3510 = vmatmul.bf16.gmra.mxu0 %v2879
  %v3511 = vpop.f32.mrf.mxu0
  %v3512 = vadd.f32 0.0, %v3511
  %v3513 = vpop.f32.mrf.mxu0
  %v3514 = vadd.f32 0.0, %v3513
  %3515 = vmatmul.bf16.gmra.mxu0 %v2883
  %v3516 = vpop.f32.mrf.mxu0
  %v3517 = vadd.f32 0.0, %v3516
  %v3518 = vpop.f32.mrf.mxu0
  %v3519 = vadd.f32 0.0, %v3518
  %3520 = vmatmul.bf16.gmra.mxu0 %v2887
  %v3521 = vpop.f32.mrf.mxu0
  %v3522 = vadd.f32 0.0, %v3521
  %v3523 = vpop.f32.mrf.mxu0
  %v3524 = vadd.f32 0.0, %v3523
  %3525 = vmatmul.bf16.gmra.mxu0 %v2891
  %v3526 = vpop.f32.mrf.mxu0
  %v3527 = vadd.f32 0.0, %v3526
  %v3528 = vpop.f32.mrf.mxu0
  %v3529 = vadd.f32 0.0, %v3528
  %3530 = vmatmul.bf16.gmra.mxu0 %v2895
  %v3531 = vpop.f32.mrf.mxu0
  %v3532 = vadd.f32 0.0, %v3531
  %v3533 = vpop.f32.mrf.mxu0
  %v3534 = vadd.f32 0.0, %v3533
  %3535 = vmatmul.bf16.gmra.mxu0 %v2899
  %v3536 = vpop.f32.mrf.mxu0
  %v3537 = vadd.f32 0.0, %v3536
  %v3538 = vpop.f32.mrf.mxu0
  %v3539 = vadd.f32 0.0, %v3538
  %3540 = vmatmul.bf16.gmra.mxu0 %v2903
  %v3541 = vpop.f32.mrf.mxu0
  %v3542 = vadd.f32 0.0, %v3541
  %v3543 = vpop.f32.mrf.mxu0
  %v3544 = vadd.f32 0.0, %v3543
  %3545 = vmatmul.bf16.gmra.mxu0 %v2907
  %v3546 = vpop.f32.mrf.mxu0
  %v3547 = vadd.f32 0.0, %v3546
  %v3548 = vpop.f32.mrf.mxu0
  %v3549 = vadd.f32 0.0, %v3548
  %3550 = vmatmul.bf16.gmra.mxu0 %v2911
  %v3551 = vpop.f32.mrf.mxu0
  %v3552 = vadd.f32 0.0, %v3551
  %v3553 = vpop.f32.mrf.mxu0
  %v3554 = vadd.f32 0.0, %v3553
  %3555 = vmatmul.bf16.gmra.mxu0 %v2915
  %v3556 = vpop.f32.mrf.mxu0
  %v3557 = vadd.f32 0.0, %v3556
  %v3558 = vpop.f32.mrf.mxu0
  %v3559 = vadd.f32 0.0, %v3558
  %3560 = vmatmul.bf16.gmra.mxu0 %v2919
  %v3561 = vpop.f32.mrf.mxu0
  %v3562 = vadd.f32 0.0, %v3561
  %v3563 = vpop.f32.mrf.mxu0
  %v3564 = vadd.f32 0.0, %v3563
  %3565 = vmatmul.bf16.gmra.mxu0 %v2923
  %v3566 = vpop.f32.mrf.mxu0
  %v3567 = vadd.f32 0.0, %v3566
  %v3568 = vpop.f32.mrf.mxu0
  %v3569 = vadd.f32 0.0, %v3568
  %3570 = vmatmul.bf16.gmra.mxu0 %v2927
  %v3571 = vpop.f32.mrf.mxu0
  %v3572 = vadd.f32 0.0, %v3571
  %v3573 = vpop.f32.mrf.mxu0
  %v3574 = vadd.f32 0.0, %v3573
  %3575 = vmatmul.bf16.gmra.mxu0 %v2931
  %v3576 = vpop.f32.mrf.mxu0
  %v3577 = vadd.f32 0.0, %v3576
  %v3578 = vpop.f32.mrf.mxu0
  %v3579 = vadd.f32 0.0, %v3578
  %3580 = vmatmul.bf16.gmra.mxu0 %v2935
  %v3581 = vpop.f32.mrf.mxu0
  %v3582 = vadd.f32 0.0, %v3581
  %v3583 = vpop.f32.mrf.mxu0
  %v3584 = vadd.f32 0.0, %v3583
  %3585 = vmatmul.bf16.gmra.mxu0 %v2939
  %v3586 = vpop.f32.mrf.mxu0
  %v3587 = vadd.f32 0.0, %v3586
  %v3588 = vpop.f32.mrf.mxu0
  %v3589 = vadd.f32 0.0, %v3588
  %3590 = vmatmul.bf16.gmra.mxu0 %v2943
  %v3591 = vpop.f32.mrf.mxu0
  %v3592 = vadd.f32 0.0, %v3591
  %v3593 = vpop.f32.mrf.mxu0
  %v3594 = vadd.f32 0.0, %v3593
  %3595 = vmatmul.bf16.gmra.mxu0 %v2947
  %v3596 = vpop.f32.mrf.mxu0
  %v3597 = vadd.f32 0.0, %v3596
  %v3598 = vpop.f32.mrf.mxu0
  %v3599 = vadd.f32 0.0, %v3598
  %3600 = vmatmul.bf16.gmra.mxu0 %v2951
  %v3601 = vpop.f32.mrf.mxu0
  %v3602 = vadd.f32 0.0, %v3601
  %v3603 = vpop.f32.mrf.mxu0
  %v3604 = vadd.f32 0.0, %v3603
  %3605 = vmatmul.bf16.gmra.mxu0 %v2955
  %v3606 = vpop.f32.mrf.mxu0
  %v3607 = vadd.f32 0.0, %v3606
  %v3608 = vpop.f32.mrf.mxu0
  %v3609 = vadd.f32 0.0, %v3608
  %3610 = vmatmul.bf16.gmra.mxu0 %v2959
  %v3611 = vpop.f32.mrf.mxu0
  %v3612 = vadd.f32 0.0, %v3611
  %v3613 = vpop.f32.mrf.mxu0
  %v3614 = vadd.f32 0.0, %v3613
  %3615 = vmatmul.bf16.gmra.mxu0 %v2963
  %v3616 = vpop.f32.mrf.mxu0
  %v3617 = vadd.f32 0.0, %v3616
  %v3618 = vpop.f32.mrf.mxu0
  %v3619 = vadd.f32 0.0, %v3618
  %3620 = vmatmul.bf16.gmra.mxu0 %v2967
  %v3621 = vpop.f32.mrf.mxu0
  %v3622 = vadd.f32 0.0, %v3621
  %v3623 = vpop.f32.mrf.mxu0
  %v3624 = vadd.f32 0.0, %v3623
  %3625 = vmatmul.bf16.gmra.mxu0 %v2971
  %v3626 = vpop.f32.mrf.mxu0
  %v3627 = vadd.f32 0.0, %v3626
  %v3628 = vpop.f32.mrf.mxu0
  %v3629 = vadd.f32 0.0, %v3628
  %3630 = vmatmul.bf16.gmra.mxu0 %v2975
  %v3631 = vpop.f32.mrf.mxu0
  %v3632 = vadd.f32 0.0, %v3631
  %v3633 = vpop.f32.mrf.mxu0
  %v3634 = vadd.f32 0.0, %v3633
  %3635 = vdwg.mxu0
  %3636 = vmatpush.bf16.msra.mxu0 %v1522
  %3637 = vmatpush.bf16.msra.mxu0 %v1521
  %3638 = vmatpush.bf16.msra.mxu0 %v1520
  %3639 = vmatpush.bf16.msra.mxu0 %v1519
  %3640 = vmatpush.bf16.msra.mxu0 %v1518
  %3641 = vmatpush.bf16.msra.mxu0 %v1517
  %3642 = vmatpush.bf16.msra.mxu0 %v1516
  %3643 = vmatpush.bf16.msra.mxu0 %v1515
  %3644 = vmatmul.bf16.gmra.mxu0 %v2692
  %v3645 = vpop.f32.mrf.mxu0
  %v3646 = vadd.f32 %v3277, %v3645
  %v3647 = vpop.f32.mrf.mxu0
  %v3648 = vadd.f32 %v3279, %v3647
  %3649 = vmatmul.bf16.gmra.mxu0 %v2696
  %v3650 = vpop.f32.mrf.mxu0
  %v3651 = vadd.f32 %v3282, %v3650
  %v3652 = vpop.f32.mrf.mxu0
  %v3653 = vadd.f32 %v3284, %v3652
  %3654 = vmatmul.bf16.gmra.mxu0 %v2700
  %v3655 = vpop.f32.mrf.mxu0
  %v3656 = vadd.f32 %v3287, %v3655
  %v3657 = vpop.f32.mrf.mxu0
  %v3658 = vadd.f32 %v3289, %v3657
  %3659 = vmatmul.bf16.gmra.mxu0 %v2704
  %v3660 = vpop.f32.mrf.mxu0
  %v3661 = vadd.f32 %v3292, %v3660
  %v3662 = vpop.f32.mrf.mxu0
  %v3663 = vadd.f32 %v3294, %v3662
  %3664 = vmatmul.bf16.gmra.mxu0 %v2708
  %v3665 = vpop.f32.mrf.mxu0
  %v3666 = vadd.f32 %v3297, %v3665
  %v3667 = vpop.f32.mrf.mxu0
  %v3668 = vadd.f32 %v3299, %v3667
  %3669 = vmatmul.bf16.gmra.mxu0 %v2712
  %v3670 = vpop.f32.mrf.mxu0
  %v3671 = vadd.f32 %v3302, %v3670
  %v3672 = vpop.f32.mrf.mxu0
  %v3673 = vadd.f32 %v3304, %v3672
  %3674 = vmatmul.bf16.gmra.mxu0 %v2716
  %v3675 = vpop.f32.mrf.mxu0
  %v3676 = vadd.f32 %v3307, %v3675
  %v3677 = vpop.f32.mrf.mxu0
  %v3678 = vadd.f32 %v3309, %v3677
  %3679 = vmatmul.bf16.gmra.mxu0 %v2720
  %v3680 = vpop.f32.mrf.mxu0
  %v3681 = vadd.f32 %v3312, %v3680
  %v3682 = vpop.f32.mrf.mxu0
  %v3683 = vadd.f32 %v3314, %v3682
  %3684 = vmatmul.bf16.gmra.mxu0 %v2724
  %v3685 = vpop.f32.mrf.mxu0
  %v3686 = vadd.f32 %v3317, %v3685
  %v3687 = vpop.f32.mrf.mxu0
  %v3688 = vadd.f32 %v3319, %v3687
  %3689 = vmatmul.bf16.gmra.mxu0 %v2728
  %v3690 = vpop.f32.mrf.mxu0
  %v3691 = vadd.f32 %v3322, %v3690
  %v3692 = vpop.f32.mrf.mxu0
  %v3693 = vadd.f32 %v3324, %v3692
  %3694 = vmatmul.bf16.gmra.mxu0 %v2732
  %v3695 = vpop.f32.mrf.mxu0
  %v3696 = vadd.f32 %v3327, %v3695
  %v3697 = vpop.f32.mrf.mxu0
  %v3698 = vadd.f32 %v3329, %v3697
  %3699 = vmatmul.bf16.gmra.mxu0 %v2736
  %v3700 = vpop.f32.mrf.mxu0
  %v3701 = vadd.f32 %v3332, %v3700
  %v3702 = vpop.f32.mrf.mxu0
  %v3703 = vadd.f32 %v3334, %v3702
  %3704 = vmatmul.bf16.gmra.mxu0 %v2740
  %v3705 = vpop.f32.mrf.mxu0
  %v3706 = vadd.f32 %v3337, %v3705
  %v3707 = vpop.f32.mrf.mxu0
  %v3708 = vadd.f32 %v3339, %v3707
  %3709 = vmatmul.bf16.gmra.mxu0 %v2744
  %v3710 = vpop.f32.mrf.mxu0
  %v3711 = vadd.f32 %v3342, %v3710
  %v3712 = vpop.f32.mrf.mxu0
  %v3713 = vadd.f32 %v3344, %v3712
  %3714 = vmatmul.bf16.gmra.mxu0 %v2748
  %v3715 = vpop.f32.mrf.mxu0
  %v3716 = vadd.f32 %v3347, %v3715
  %v3717 = vpop.f32.mrf.mxu0
  %v3718 = vadd.f32 %v3349, %v3717
  %3719 = vmatmul.bf16.gmra.mxu0 %v2752
  %v3720 = vpop.f32.mrf.mxu0
  %v3721 = vadd.f32 %v3352, %v3720
  %v3722 = vpop.f32.mrf.mxu0
  %v3723 = vadd.f32 %v3354, %v3722
  %3724 = vmatmul.bf16.gmra.mxu0 %v2756
  %v3725 = vpop.f32.mrf.mxu0
  %v3726 = vadd.f32 %v3357, %v3725
  %v3727 = vpop.f32.mrf.mxu0
  %v3728 = vadd.f32 %v3359, %v3727
  %3729 = vmatmul.bf16.gmra.mxu0 %v2760
  %v3730 = vpop.f32.mrf.mxu0
  %v3731 = vadd.f32 %v3362, %v3730
  %v3732 = vpop.f32.mrf.mxu0
  %v3733 = vadd.f32 %v3364, %v3732
  %3734 = vmatmul.bf16.gmra.mxu0 %v2764
  %v3735 = vpop.f32.mrf.mxu0
  %v3736 = vadd.f32 %v3367, %v3735
  %v3737 = vpop.f32.mrf.mxu0
  %v3738 = vadd.f32 %v3369, %v3737
  %3739 = vmatmul.bf16.gmra.mxu0 %v2768
  %v3740 = vpop.f32.mrf.mxu0
  %v3741 = vadd.f32 %v3372, %v3740
  %v3742 = vpop.f32.mrf.mxu0
  %v3743 = vadd.f32 %v3374, %v3742
  %3744 = vmatmul.bf16.gmra.mxu0 %v2772
  %v3745 = vpop.f32.mrf.mxu0
  %v3746 = vadd.f32 %v3377, %v3745
  %v3747 = vpop.f32.mrf.mxu0
  %v3748 = vadd.f32 %v3379, %v3747
  %3749 = vmatmul.bf16.gmra.mxu0 %v2776
  %v3750 = vpop.f32.mrf.mxu0
  %v3751 = vadd.f32 %v3382, %v3750
  %v3752 = vpop.f32.mrf.mxu0
  %v3753 = vadd.f32 %v3384, %v3752
  %3754 = vmatmul.bf16.gmra.mxu0 %v2780
  %v3755 = vpop.f32.mrf.mxu0
  %v3756 = vadd.f32 %v3387, %v3755
  %v3757 = vpop.f32.mrf.mxu0
  %v3758 = vadd.f32 %v3389, %v3757
  %3759 = vmatmul.bf16.gmra.mxu0 %v2784
  %v3760 = vpop.f32.mrf.mxu0
  %v3761 = vadd.f32 %v3392, %v3760
  %v3762 = vpop.f32.mrf.mxu0
  %v3763 = vadd.f32 %v3394, %v3762
  %3764 = vmatmul.bf16.gmra.mxu0 %v2788
  %v3765 = vpop.f32.mrf.mxu0
  %v3766 = vadd.f32 %v3397, %v3765
  %v3767 = vpop.f32.mrf.mxu0
  %v3768 = vadd.f32 %v3399, %v3767
  %3769 = vmatmul.bf16.gmra.mxu0 %v2792
  %v3770 = vpop.f32.mrf.mxu0
  %v3771 = vadd.f32 %v3402, %v3770
  %v3772 = vpop.f32.mrf.mxu0
  %v3773 = vadd.f32 %v3404, %v3772
  %3774 = vmatmul.bf16.gmra.mxu0 %v2796
  %v3775 = vpop.f32.mrf.mxu0
  %v3776 = vadd.f32 %v3407, %v3775
  %v3777 = vpop.f32.mrf.mxu0
  %v3778 = vadd.f32 %v3409, %v3777
  %3779 = vmatmul.bf16.gmra.mxu0 %v2800
  %v3780 = vpop.f32.mrf.mxu0
  %v3781 = vadd.f32 %v3412, %v3780
  %v3782 = vpop.f32.mrf.mxu0
  %v3783 = vadd.f32 %v3414, %v3782
  %3784 = vmatmul.bf16.gmra.mxu0 %v2804
  %v3785 = vpop.f32.mrf.mxu0
  %v3786 = vadd.f32 %v3417, %v3785
  %v3787 = vpop.f32.mrf.mxu0
  %v3788 = vadd.f32 %v3419, %v3787
  %3789 = vmatmul.bf16.gmra.mxu0 %v2808
  %v3790 = vpop.f32.mrf.mxu0
  %v3791 = vadd.f32 %v3422, %v3790
  %v3792 = vpop.f32.mrf.mxu0
  %v3793 = vadd.f32 %v3424, %v3792
  %3794 = vmatmul.bf16.gmra.mxu0 %v2812
  %v3795 = vpop.f32.mrf.mxu0
  %v3796 = vadd.f32 %v3427, %v3795
  %v3797 = vpop.f32.mrf.mxu0
  %v3798 = vadd.f32 %v3429, %v3797
  %3799 = vmatmul.bf16.gmra.mxu0 %v2816
  %v3800 = vpop.f32.mrf.mxu0
  %v3801 = vadd.f32 %v3432, %v3800
  %v3802 = vpop.f32.mrf.mxu0
  %v3803 = vadd.f32 %v3434, %v3802
  %3804 = vmatmul.bf16.gmra.mxu0 %v2820
  %v3805 = vpop.f32.mrf.mxu0
  %v3806 = vadd.f32 %v3437, %v3805
  %v3807 = vpop.f32.mrf.mxu0
  %v3808 = vadd.f32 %v3439, %v3807
  %3809 = vmatmul.bf16.gmra.mxu0 %v2824
  %v3810 = vpop.f32.mrf.mxu0
  %v3811 = vadd.f32 %v3442, %v3810
  %v3812 = vpop.f32.mrf.mxu0
  %v3813 = vadd.f32 %v3444, %v3812
  %3814 = vmatmul.bf16.gmra.mxu0 %v2828
  %v3815 = vpop.f32.mrf.mxu0
  %v3816 = vadd.f32 %v3447, %v3815
  %v3817 = vpop.f32.mrf.mxu0
  %v3818 = vadd.f32 %v3449, %v3817
  %3819 = vmatmul.bf16.gmra.mxu0 %v2832
  %v3820 = vpop.f32.mrf.mxu0
  %v3821 = vadd.f32 %v3452, %v3820
  %v3822 = vpop.f32.mrf.mxu0
  %v3823 = vadd.f32 %v3454, %v3822
  %3824 = vmatmul.bf16.gmra.mxu0 %v2836
  %v3825 = vpop.f32.mrf.mxu0
  %v3826 = vadd.f32 %v3457, %v3825
  %v3827 = vpop.f32.mrf.mxu0
  %v3828 = vadd.f32 %v3459, %v3827
  %3829 = vmatmul.bf16.gmra.mxu0 %v2840
  %v3830 = vpop.f32.mrf.mxu0
  %v3831 = vadd.f32 %v3462, %v3830
  %v3832 = vpop.f32.mrf.mxu0
  %v3833 = vadd.f32 %v3464, %v3832
  %3834 = vmatmul.bf16.gmra.mxu0 %v2844
  %v3835 = vpop.f32.mrf.mxu0
  %v3836 = vadd.f32 %v3467, %v3835
  %v3837 = vpop.f32.mrf.mxu0
  %v3838 = vadd.f32 %v3469, %v3837
  %3839 = vmatmul.bf16.gmra.mxu0 %v2848
  %v3840 = vpop.f32.mrf.mxu0
  %v3841 = vadd.f32 %v3472, %v3840
  %v3842 = vpop.f32.mrf.mxu0
  %v3843 = vadd.f32 %v3474, %v3842
  %3844 = vmatmul.bf16.gmra.mxu0 %v2852
  %v3845 = vpop.f32.mrf.mxu0
  %v3846 = vadd.f32 %v3477, %v3845
  %v3847 = vpop.f32.mrf.mxu0
  %v3848 = vadd.f32 %v3479, %v3847
  %3849 = vmatmul.bf16.gmra.mxu0 %v2856
  %v3850 = vpop.f32.mrf.mxu0
  %v3851 = vadd.f32 %v3482, %v3850
  %v3852 = vpop.f32.mrf.mxu0
  %v3853 = vadd.f32 %v3484, %v3852
  %3854 = vmatmul.bf16.gmra.mxu0 %v2860
  %v3855 = vpop.f32.mrf.mxu0
  %v3856 = vadd.f32 %v3487, %v3855
  %v3857 = vpop.f32.mrf.mxu0
  %v3858 = vadd.f32 %v3489, %v3857
  %3859 = vmatmul.bf16.gmra.mxu0 %v2864
  %v3860 = vpop.f32.mrf.mxu0
  %v3861 = vadd.f32 %v3492, %v3860
  %v3862 = vpop.f32.mrf.mxu0
  %v3863 = vadd.f32 %v3494, %v3862
  %3864 = vmatmul.bf16.gmra.mxu0 %v2868
  %v3865 = vpop.f32.mrf.mxu0
  %v3866 = vadd.f32 %v3497, %v3865
  %v3867 = vpop.f32.mrf.mxu0
  %v3868 = vadd.f32 %v3499, %v3867
  %3869 = vmatmul.bf16.gmra.mxu0 %v2872
  %v3870 = vpop.f32.mrf.mxu0
  %v3871 = vadd.f32 %v3502, %v3870
  %v3872 = vpop.f32.mrf.mxu0
  %v3873 = vadd.f32 %v3504, %v3872
  %3874 = vmatmul.bf16.gmra.mxu0 %v2876
  %v3875 = vpop.f32.mrf.mxu0
  %v3876 = vadd.f32 %v3507, %v3875
  %v3877 = vpop.f32.mrf.mxu0
  %v3878 = vadd.f32 %v3509, %v3877
  %3879 = vmatmul.bf16.gmra.mxu0 %v2880
  %v3880 = vpop.f32.mrf.mxu0
  %v3881 = vadd.f32 %v3512, %v3880
  %v3882 = vpop.f32.mrf.mxu0
  %v3883 = vadd.f32 %v3514, %v3882
  %3884 = vmatmul.bf16.gmra.mxu0 %v2884
  %v3885 = vpop.f32.mrf.mxu0
  %v3886 = vadd.f32 %v3517, %v3885
  %v3887 = vpop.f32.mrf.mxu0
  %v3888 = vadd.f32 %v3519, %v3887
  %3889 = vmatmul.bf16.gmra.mxu0 %v2888
  %v3890 = vpop.f32.mrf.mxu0
  %v3891 = vadd.f32 %v3522, %v3890
  %v3892 = vpop.f32.mrf.mxu0
  %v3893 = vadd.f32 %v3524, %v3892
  %3894 = vmatmul.bf16.gmra.mxu0 %v2892
  %v3895 = vpop.f32.mrf.mxu0
  %v3896 = vadd.f32 %v3527, %v3895
  %v3897 = vpop.f32.mrf.mxu0
  %v3898 = vadd.f32 %v3529, %v3897
  %3899 = vmatmul.bf16.gmra.mxu0 %v2896
  %v3900 = vpop.f32.mrf.mxu0
  %v3901 = vadd.f32 %v3532, %v3900
  %v3902 = vpop.f32.mrf.mxu0
  %v3903 = vadd.f32 %v3534, %v3902
  %3904 = vmatmul.bf16.gmra.mxu0 %v2900
  %v3905 = vpop.f32.mrf.mxu0
  %v3906 = vadd.f32 %v3537, %v3905
  %v3907 = vpop.f32.mrf.mxu0
  %v3908 = vadd.f32 %v3539, %v3907
  %3909 = vmatmul.bf16.gmra.mxu0 %v2904
  %v3910 = vpop.f32.mrf.mxu0
  %v3911 = vadd.f32 %v3542, %v3910
  %v3912 = vpop.f32.mrf.mxu0
  %v3913 = vadd.f32 %v3544, %v3912
  %3914 = vmatmul.bf16.gmra.mxu0 %v2908
  %v3915 = vpop.f32.mrf.mxu0
  %v3916 = vadd.f32 %v3547, %v3915
  %v3917 = vpop.f32.mrf.mxu0
  %v3918 = vadd.f32 %v3549, %v3917
  %3919 = vmatmul.bf16.gmra.mxu0 %v2912
  %v3920 = vpop.f32.mrf.mxu0
  %v3921 = vadd.f32 %v3552, %v3920
  %v3922 = vpop.f32.mrf.mxu0
  %v3923 = vadd.f32 %v3554, %v3922
  %3924 = vmatmul.bf16.gmra.mxu0 %v2916
  %v3925 = vpop.f32.mrf.mxu0
  %v3926 = vadd.f32 %v3557, %v3925
  %v3927 = vpop.f32.mrf.mxu0
  %v3928 = vadd.f32 %v3559, %v3927
  %3929 = vmatmul.bf16.gmra.mxu0 %v2920
  %v3930 = vpop.f32.mrf.mxu0
  %v3931 = vadd.f32 %v3562, %v3930
  %v3932 = vpop.f32.mrf.mxu0
  %v3933 = vadd.f32 %v3564, %v3932
  %3934 = vmatmul.bf16.gmra.mxu0 %v2924
  %v3935 = vpop.f32.mrf.mxu0
  %v3936 = vadd.f32 %v3567, %v3935
  %v3937 = vpop.f32.mrf.mxu0
  %v3938 = vadd.f32 %v3569, %v3937
  %3939 = vmatmul.bf16.gmra.mxu0 %v2928
  %v3940 = vpop.f32.mrf.mxu0
  %v3941 = vadd.f32 %v3572, %v3940
  %v3942 = vpop.f32.mrf.mxu0
  %v3943 = vadd.f32 %v3574, %v3942
  %3944 = vmatmul.bf16.gmra.mxu0 %v2932
  %v3945 = vpop.f32.mrf.mxu0
  %v3946 = vadd.f32 %v3577, %v3945
  %v3947 = vpop.f32.mrf.mxu0
  %v3948 = vadd.f32 %v3579, %v3947
  %3949 = vmatmul.bf16.gmra.mxu0 %v2936
  %v3950 = vpop.f32.mrf.mxu0
  %v3951 = vadd.f32 %v3582, %v3950
  %v3952 = vpop.f32.mrf.mxu0
  %v3953 = vadd.f32 %v3584, %v3952
  %3954 = vmatmul.bf16.gmra.mxu0 %v2940
  %v3955 = vpop.f32.mrf.mxu0
  %v3956 = vadd.f32 %v3587, %v3955
  %v3957 = vpop.f32.mrf.mxu0
  %v3958 = vadd.f32 %v3589, %v3957
  %3959 = vmatmul.bf16.gmra.mxu0 %v2944
  %v3960 = vpop.f32.mrf.mxu0
  %v3961 = vadd.f32 %v3592, %v3960
  %v3962 = vpop.f32.mrf.mxu0
  %v3963 = vadd.f32 %v3594, %v3962
  %3964 = vmatmul.bf16.gmra.mxu0 %v2948
  %v3965 = vpop.f32.mrf.mxu0
  %v3966 = vadd.f32 %v3597, %v3965
  %v3967 = vpop.f32.mrf.mxu0
  %v3968 = vadd.f32 %v3599, %v3967
  %3969 = vmatmul.bf16.gmra.mxu0 %v2952
  %v3970 = vpop.f32.mrf.mxu0
  %v3971 = vadd.f32 %v3602, %v3970
  %v3972 = vpop.f32.mrf.mxu0
  %v3973 = vadd.f32 %v3604, %v3972
  %3974 = vmatmul.bf16.gmra.mxu0 %v2956
  %v3975 = vpop.f32.mrf.mxu0
  %v3976 = vadd.f32 %v3607, %v3975
  %v3977 = vpop.f32.mrf.mxu0
  %v3978 = vadd.f32 %v3609, %v3977
  %3979 = vmatmul.bf16.gmra.mxu0 %v2960
  %v3980 = vpop.f32.mrf.mxu0
  %v3981 = vadd.f32 %v3612, %v3980
  %v3982 = vpop.f32.mrf.mxu0
  %v3983 = vadd.f32 %v3614, %v3982
  %3984 = vmatmul.bf16.gmra.mxu0 %v2964
  %v3985 = vpop.f32.mrf.mxu0
  %v3986 = vadd.f32 %v3617, %v3985
  %v3987 = vpop.f32.mrf.mxu0
  %v3988 = vadd.f32 %v3619, %v3987
  %3989 = vmatmul.bf16.gmra.mxu0 %v2968
  %v3990 = vpop.f32.mrf.mxu0
  %v3991 = vadd.f32 %v3622, %v3990
  %v3992 = vpop.f32.mrf.mxu0
  %v3993 = vadd.f32 %v3624, %v3992
  %3994 = vmatmul.bf16.gmra.mxu0 %v2972
  %v3995 = vpop.f32.mrf.mxu0
  %v3996 = vadd.f32 %v3627, %v3995
  %v3997 = vpop.f32.mrf.mxu0
  %v3998 = vadd.f32 %v3629, %v3997
  %3999 = vmatmul.bf16.gmra.mxu0 %v2976
  %v4000 = vpop.f32.mrf.mxu0
  %v4001 = vadd.f32 %v3632, %v4000
  %v4002 = vpop.f32.mrf.mxu0
  %v4003 = vadd.f32 %v3634, %v4002
  %4004 = vdwg.mxu0
  %4005 = vmatpush.bf16.msra.mxu0 %v1530
  %4006 = vmatpush.bf16.msra.mxu0 %v1529
  %4007 = vmatpush.bf16.msra.mxu0 %v1528
  %4008 = vmatpush.bf16.msra.mxu0 %v1527
  %4009 = vmatpush.bf16.msra.mxu0 %v1526
  %4010 = vmatpush.bf16.msra.mxu0 %v1525
  %4011 = vmatpush.bf16.msra.mxu0 %v1524
  %4012 = vmatpush.bf16.msra.mxu0 %v1523
  %4013 = vmatmul.bf16.gmra.mxu0 %v2693
  %v4014 = vpop.f32.mrf.mxu0
  %v4015 = vadd.f32 %v3646, %v4014
  %v4016 = vpop.f32.mrf.mxu0
  %v4017 = vadd.f32 %v3648, %v4016
  %4018 = vmatmul.bf16.gmra.mxu0 %v2697
  %v4019 = vpop.f32.mrf.mxu0
  %v4020 = vadd.f32 %v3651, %v4019
  %v4021 = vpop.f32.mrf.mxu0
  %v4022 = vadd.f32 %v3653, %v4021
  %4023 = vmatmul.bf16.gmra.mxu0 %v2701
  %v4024 = vpop.f32.mrf.mxu0
  %v4025 = vadd.f32 %v3656, %v4024
  %v4026 = vpop.f32.mrf.mxu0
  %v4027 = vadd.f32 %v3658, %v4026
  %4028 = vmatmul.bf16.gmra.mxu0 %v2705
  %v4029 = vpop.f32.mrf.mxu0
  %v4030 = vadd.f32 %v3661, %v4029
  %v4031 = vpop.f32.mrf.mxu0
  %v4032 = vadd.f32 %v3663, %v4031
  %4033 = vmatmul.bf16.gmra.mxu0 %v2709
  %v4034 = vpop.f32.mrf.mxu0
  %v4035 = vadd.f32 %v3666, %v4034
  %v4036 = vpop.f32.mrf.mxu0
  %v4037 = vadd.f32 %v3668, %v4036
  %4038 = vmatmul.bf16.gmra.mxu0 %v2713
  %v4039 = vpop.f32.mrf.mxu0
  %v4040 = vadd.f32 %v3671, %v4039
  %v4041 = vpop.f32.mrf.mxu0
  %v4042 = vadd.f32 %v3673, %v4041
  %4043 = vmatmul.bf16.gmra.mxu0 %v2717
  %v4044 = vpop.f32.mrf.mxu0
  %v4045 = vadd.f32 %v3676, %v4044
  %v4046 = vpop.f32.mrf.mxu0
  %v4047 = vadd.f32 %v3678, %v4046
  %4048 = vmatmul.bf16.gmra.mxu0 %v2721
  %v4049 = vpop.f32.mrf.mxu0
  %v4050 = vadd.f32 %v3681, %v4049
  %v4051 = vpop.f32.mrf.mxu0
  %v4052 = vadd.f32 %v3683, %v4051
  %4053 = vmatmul.bf16.gmra.mxu0 %v2725
  %v4054 = vpop.f32.mrf.mxu0
  %v4055 = vadd.f32 %v3686, %v4054
  %v4056 = vpop.f32.mrf.mxu0
  %v4057 = vadd.f32 %v3688, %v4056
  %4058 = vmatmul.bf16.gmra.mxu0 %v2729
  %v4059 = vpop.f32.mrf.mxu0
  %v4060 = vadd.f32 %v3691, %v4059
  %v4061 = vpop.f32.mrf.mxu0
  %v4062 = vadd.f32 %v3693, %v4061
  %4063 = vmatmul.bf16.gmra.mxu0 %v2733
  %v4064 = vpop.f32.mrf.mxu0
  %v4065 = vadd.f32 %v3696, %v4064
  %v4066 = vpop.f32.mrf.mxu0
  %v4067 = vadd.f32 %v3698, %v4066
  %4068 = vmatmul.bf16.gmra.mxu0 %v2737
  %v4069 = vpop.f32.mrf.mxu0
  %v4070 = vadd.f32 %v3701, %v4069
  %v4071 = vpop.f32.mrf.mxu0
  %v4072 = vadd.f32 %v3703, %v4071
  %4073 = vmatmul.bf16.gmra.mxu0 %v2741
  %v4074 = vpop.f32.mrf.mxu0
  %v4075 = vadd.f32 %v3706, %v4074
  %v4076 = vpop.f32.mrf.mxu0
  %v4077 = vadd.f32 %v3708, %v4076
  %4078 = vmatmul.bf16.gmra.mxu0 %v2745
  %v4079 = vpop.f32.mrf.mxu0
  %v4080 = vadd.f32 %v3711, %v4079
  %v4081 = vpop.f32.mrf.mxu0
  %v4082 = vadd.f32 %v3713, %v4081
  %4083 = vmatmul.bf16.gmra.mxu0 %v2749
  %v4084 = vpop.f32.mrf.mxu0
  %v4085 = vadd.f32 %v3716, %v4084
  %v4086 = vpop.f32.mrf.mxu0
  %v4087 = vadd.f32 %v3718, %v4086
  %4088 = vmatmul.bf16.gmra.mxu0 %v2753
  %v4089 = vpop.f32.mrf.mxu0
  %v4090 = vadd.f32 %v3721, %v4089
  %v4091 = vpop.f32.mrf.mxu0
  %v4092 = vadd.f32 %v3723, %v4091
  %4093 = vmatmul.bf16.gmra.mxu0 %v2757
  %v4094 = vpop.f32.mrf.mxu0
  %v4095 = vadd.f32 %v3726, %v4094
  %v4096 = vpop.f32.mrf.mxu0
  %v4097 = vadd.f32 %v3728, %v4096
  %4098 = vmatmul.bf16.gmra.mxu0 %v2761
  %v4099 = vpop.f32.mrf.mxu0
  %v4100 = vadd.f32 %v3731, %v4099
  %v4101 = vpop.f32.mrf.mxu0
  %v4102 = vadd.f32 %v3733, %v4101
  %4103 = vmatmul.bf16.gmra.mxu0 %v2765
  %v4104 = vpop.f32.mrf.mxu0
  %v4105 = vadd.f32 %v3736, %v4104
  %v4106 = vpop.f32.mrf.mxu0
  %v4107 = vadd.f32 %v3738, %v4106
  %4108 = vmatmul.bf16.gmra.mxu0 %v2769
  %v4109 = vpop.f32.mrf.mxu0
  %v4110 = vadd.f32 %v3741, %v4109
  %v4111 = vpop.f32.mrf.mxu0
  %v4112 = vadd.f32 %v3743, %v4111
  %4113 = vmatmul.bf16.gmra.mxu0 %v2773
  %v4114 = vpop.f32.mrf.mxu0
  %v4115 = vadd.f32 %v3746, %v4114
  %v4116 = vpop.f32.mrf.mxu0
  %v4117 = vadd.f32 %v3748, %v4116
  %4118 = vmatmul.bf16.gmra.mxu0 %v2777
  %v4119 = vpop.f32.mrf.mxu0
  %v4120 = vadd.f32 %v3751, %v4119
  %v4121 = vpop.f32.mrf.mxu0
  %v4122 = vadd.f32 %v3753, %v4121
  %4123 = vmatmul.bf16.gmra.mxu0 %v2781
  %v4124 = vpop.f32.mrf.mxu0
  %v4125 = vadd.f32 %v3756, %v4124
  %v4126 = vpop.f32.mrf.mxu0
  %v4127 = vadd.f32 %v3758, %v4126
  %4128 = vmatmul.bf16.gmra.mxu0 %v2785
  %v4129 = vpop.f32.mrf.mxu0
  %v4130 = vadd.f32 %v3761, %v4129
  %v4131 = vpop.f32.mrf.mxu0
  %v4132 = vadd.f32 %v3763, %v4131
  %4133 = vmatmul.bf16.gmra.mxu0 %v2789
  %v4134 = vpop.f32.mrf.mxu0
  %v4135 = vadd.f32 %v3766, %v4134
  %v4136 = vpop.f32.mrf.mxu0
  %v4137 = vadd.f32 %v3768, %v4136
  %4138 = vmatmul.bf16.gmra.mxu0 %v2793
  %v4139 = vpop.f32.mrf.mxu0
  %v4140 = vadd.f32 %v3771, %v4139
  %v4141 = vpop.f32.mrf.mxu0
  %v4142 = vadd.f32 %v3773, %v4141
  %4143 = vmatmul.bf16.gmra.mxu0 %v2797
  %v4144 = vpop.f32.mrf.mxu0
  %v4145 = vadd.f32 %v3776, %v4144
  %v4146 = vpop.f32.mrf.mxu0
  %v4147 = vadd.f32 %v3778, %v4146
  %4148 = vmatmul.bf16.gmra.mxu0 %v2801
  %v4149 = vpop.f32.mrf.mxu0
  %v4150 = vadd.f32 %v3781, %v4149
  %v4151 = vpop.f32.mrf.mxu0
  %v4152 = vadd.f32 %v3783, %v4151
  %4153 = vmatmul.bf16.gmra.mxu0 %v2805
  %v4154 = vpop.f32.mrf.mxu0
  %v4155 = vadd.f32 %v3786, %v4154
  %v4156 = vpop.f32.mrf.mxu0
  %v4157 = vadd.f32 %v3788, %v4156
  %4158 = vmatmul.bf16.gmra.mxu0 %v2809
  %v4159 = vpop.f32.mrf.mxu0
  %v4160 = vadd.f32 %v3791, %v4159
  %v4161 = vpop.f32.mrf.mxu0
  %v4162 = vadd.f32 %v3793, %v4161
  %4163 = vmatmul.bf16.gmra.mxu0 %v2813
  %v4164 = vpop.f32.mrf.mxu0
  %v4165 = vadd.f32 %v3796, %v4164
  %v4166 = vpop.f32.mrf.mxu0
  %v4167 = vadd.f32 %v3798, %v4166
  %4168 = vmatmul.bf16.gmra.mxu0 %v2817
  %v4169 = vpop.f32.mrf.mxu0
  %v4170 = vadd.f32 %v3801, %v4169
  %v4171 = vpop.f32.mrf.mxu0
  %v4172 = vadd.f32 %v3803, %v4171
  %4173 = vmatmul.bf16.gmra.mxu0 %v2821
  %v4174 = vpop.f32.mrf.mxu0
  %v4175 = vadd.f32 %v3806, %v4174
  %v4176 = vpop.f32.mrf.mxu0
  %v4177 = vadd.f32 %v3808, %v4176
  %4178 = vmatmul.bf16.gmra.mxu0 %v2825
  %v4179 = vpop.f32.mrf.mxu0
  %v4180 = vadd.f32 %v3811, %v4179
  %v4181 = vpop.f32.mrf.mxu0
  %v4182 = vadd.f32 %v3813, %v4181
  %4183 = vmatmul.bf16.gmra.mxu0 %v2829
  %v4184 = vpop.f32.mrf.mxu0
  %v4185 = vadd.f32 %v3816, %v4184
  %v4186 = vpop.f32.mrf.mxu0
  %v4187 = vadd.f32 %v3818, %v4186
  %4188 = vmatmul.bf16.gmra.mxu0 %v2833
  %v4189 = vpop.f32.mrf.mxu0
  %v4190 = vadd.f32 %v3821, %v4189
  %v4191 = vpop.f32.mrf.mxu0
  %v4192 = vadd.f32 %v3823, %v4191
  %4193 = vmatmul.bf16.gmra.mxu0 %v2837
  %v4194 = vpop.f32.mrf.mxu0
  %v4195 = vadd.f32 %v3826, %v4194
  %v4196 = vpop.f32.mrf.mxu0
  %v4197 = vadd.f32 %v3828, %v4196
  %4198 = vmatmul.bf16.gmra.mxu0 %v2841
  %v4199 = vpop.f32.mrf.mxu0
  %v4200 = vadd.f32 %v3831, %v4199
  %v4201 = vpop.f32.mrf.mxu0
  %v4202 = vadd.f32 %v3833, %v4201
  %4203 = vmatmul.bf16.gmra.mxu0 %v2845
  %v4204 = vpop.f32.mrf.mxu0
  %v4205 = vadd.f32 %v3836, %v4204
  %v4206 = vpop.f32.mrf.mxu0
  %v4207 = vadd.f32 %v3838, %v4206
  %4208 = vmatmul.bf16.gmra.mxu0 %v2849
  %v4209 = vpop.f32.mrf.mxu0
  %v4210 = vadd.f32 %v3841, %v4209
  %v4211 = vpop.f32.mrf.mxu0
  %v4212 = vadd.f32 %v3843, %v4211
  %4213 = vmatmul.bf16.gmra.mxu0 %v2853
  %v4214 = vpop.f32.mrf.mxu0
  %v4215 = vadd.f32 %v3846, %v4214
  %v4216 = vpop.f32.mrf.mxu0
  %v4217 = vadd.f32 %v3848, %v4216
  %4218 = vmatmul.bf16.gmra.mxu0 %v2857
  %v4219 = vpop.f32.mrf.mxu0
  %v4220 = vadd.f32 %v3851, %v4219
  %v4221 = vpop.f32.mrf.mxu0
  %v4222 = vadd.f32 %v3853, %v4221
  %4223 = vmatmul.bf16.gmra.mxu0 %v2861
  %v4224 = vpop.f32.mrf.mxu0
  %v4225 = vadd.f32 %v3856, %v4224
  %v4226 = vpop.f32.mrf.mxu0
  %v4227 = vadd.f32 %v3858, %v4226
  %4228 = vmatmul.bf16.gmra.mxu0 %v2865
  %v4229 = vpop.f32.mrf.mxu0
  %v4230 = vadd.f32 %v3861, %v4229
  %v4231 = vpop.f32.mrf.mxu0
  %v4232 = vadd.f32 %v3863, %v4231
  %4233 = vmatmul.bf16.gmra.mxu0 %v2869
  %v4234 = vpop.f32.mrf.mxu0
  %v4235 = vadd.f32 %v3866, %v4234
  %v4236 = vpop.f32.mrf.mxu0
  %v4237 = vadd.f32 %v3868, %v4236
  %4238 = vmatmul.bf16.gmra.mxu0 %v2873
  %v4239 = vpop.f32.mrf.mxu0
  %v4240 = vadd.f32 %v3871, %v4239
  %v4241 = vpop.f32.mrf.mxu0
  %v4242 = vadd.f32 %v3873, %v4241
  %4243 = vmatmul.bf16.gmra.mxu0 %v2877
  %v4244 = vpop.f32.mrf.mxu0
  %v4245 = vadd.f32 %v3876, %v4244
  %v4246 = vpop.f32.mrf.mxu0
  %v4247 = vadd.f32 %v3878, %v4246
  %4248 = vmatmul.bf16.gmra.mxu0 %v2881
  %v4249 = vpop.f32.mrf.mxu0
  %v4250 = vadd.f32 %v3881, %v4249
  %v4251 = vpop.f32.mrf.mxu0
  %v4252 = vadd.f32 %v3883, %v4251
  %4253 = vmatmul.bf16.gmra.mxu0 %v2885
  %v4254 = vpop.f32.mrf.mxu0
  %v4255 = vadd.f32 %v3886, %v4254
  %v4256 = vpop.f32.mrf.mxu0
  %v4257 = vadd.f32 %v3888, %v4256
  %4258 = vmatmul.bf16.gmra.mxu0 %v2889
  %v4259 = vpop.f32.mrf.mxu0
  %v4260 = vadd.f32 %v3891, %v4259
  %v4261 = vpop.f32.mrf.mxu0
  %v4262 = vadd.f32 %v3893, %v4261
  %4263 = vmatmul.bf16.gmra.mxu0 %v2893
  %v4264 = vpop.f32.mrf.mxu0
  %v4265 = vadd.f32 %v3896, %v4264
  %v4266 = vpop.f32.mrf.mxu0
  %v4267 = vadd.f32 %v3898, %v4266
  %4268 = vmatmul.bf16.gmra.mxu0 %v2897
  %v4269 = vpop.f32.mrf.mxu0
  %v4270 = vadd.f32 %v3901, %v4269
  %v4271 = vpop.f32.mrf.mxu0
  %v4272 = vadd.f32 %v3903, %v4271
  %4273 = vmatmul.bf16.gmra.mxu0 %v2901
  %v4274 = vpop.f32.mrf.mxu0
  %v4275 = vadd.f32 %v3906, %v4274
  %v4276 = vpop.f32.mrf.mxu0
  %v4277 = vadd.f32 %v3908, %v4276
  %4278 = vmatmul.bf16.gmra.mxu0 %v2905
  %v4279 = vpop.f32.mrf.mxu0
  %v4280 = vadd.f32 %v3911, %v4279
  %v4281 = vpop.f32.mrf.mxu0
  %v4282 = vadd.f32 %v3913, %v4281
  %4283 = vmatmul.bf16.gmra.mxu0 %v2909
  %v4284 = vpop.f32.mrf.mxu0
  %v4285 = vadd.f32 %v3916, %v4284
  %v4286 = vpop.f32.mrf.mxu0
  %v4287 = vadd.f32 %v3918, %v4286
  %4288 = vmatmul.bf16.gmra.mxu0 %v2913
  %v4289 = vpop.f32.mrf.mxu0
  %v4290 = vadd.f32 %v3921, %v4289
  %v4291 = vpop.f32.mrf.mxu0
  %v4292 = vadd.f32 %v3923, %v4291
  %4293 = vmatmul.bf16.gmra.mxu0 %v2917
  %v4294 = vpop.f32.mrf.mxu0
  %v4295 = vadd.f32 %v3926, %v4294
  %v4296 = vpop.f32.mrf.mxu0
  %v4297 = vadd.f32 %v3928, %v4296
  %4298 = vmatmul.bf16.gmra.mxu0 %v2921
  %v4299 = vpop.f32.mrf.mxu0
  %v4300 = vadd.f32 %v3931, %v4299
  %v4301 = vpop.f32.mrf.mxu0
  %v4302 = vadd.f32 %v3933, %v4301
  %4303 = vmatmul.bf16.gmra.mxu0 %v2925
  %v4304 = vpop.f32.mrf.mxu0
  %v4305 = vadd.f32 %v3936, %v4304
  %v4306 = vpop.f32.mrf.mxu0
  %v4307 = vadd.f32 %v3938, %v4306
  %4308 = vmatmul.bf16.gmra.mxu0 %v2929
  %v4309 = vpop.f32.mrf.mxu0
  %v4310 = vadd.f32 %v3941, %v4309
  %v4311 = vpop.f32.mrf.mxu0
  %v4312 = vadd.f32 %v3943, %v4311
  %4313 = vmatmul.bf16.gmra.mxu0 %v2933
  %v4314 = vpop.f32.mrf.mxu0
  %v4315 = vadd.f32 %v3946, %v4314
  %v4316 = vpop.f32.mrf.mxu0
  %v4317 = vadd.f32 %v3948, %v4316
  %4318 = vmatmul.bf16.gmra.mxu0 %v2937
  %v4319 = vpop.f32.mrf.mxu0
  %v4320 = vadd.f32 %v3951, %v4319
  %v4321 = vpop.f32.mrf.mxu0
  %v4322 = vadd.f32 %v3953, %v4321
  %4323 = vmatmul.bf16.gmra.mxu0 %v2941
  %v4324 = vpop.f32.mrf.mxu0
  %v4325 = vadd.f32 %v3956, %v4324
  %v4326 = vpop.f32.mrf.mxu0
  %v4327 = vadd.f32 %v3958, %v4326
  %4328 = vmatmul.bf16.gmra.mxu0 %v2945
  %v4329 = vpop.f32.mrf.mxu0
  %v4330 = vadd.f32 %v3961, %v4329
  %v4331 = vpop.f32.mrf.mxu0
  %v4332 = vadd.f32 %v3963, %v4331
  %4333 = vmatmul.bf16.gmra.mxu0 %v2949
  %v4334 = vpop.f32.mrf.mxu0
  %v4335 = vadd.f32 %v3966, %v4334
  %v4336 = vpop.f32.mrf.mxu0
  %v4337 = vadd.f32 %v3968, %v4336
  %4338 = vmatmul.bf16.gmra.mxu0 %v2953
  %v4339 = vpop.f32.mrf.mxu0
  %v4340 = vadd.f32 %v3971, %v4339
  %v4341 = vpop.f32.mrf.mxu0
  %v4342 = vadd.f32 %v3973, %v4341
  %4343 = vmatmul.bf16.gmra.mxu0 %v2957
  %v4344 = vpop.f32.mrf.mxu0
  %v4345 = vadd.f32 %v3976, %v4344
  %v4346 = vpop.f32.mrf.mxu0
  %v4347 = vadd.f32 %v3978, %v4346
  %4348 = vmatmul.bf16.gmra.mxu0 %v2961
  %v4349 = vpop.f32.mrf.mxu0
  %v4350 = vadd.f32 %v3981, %v4349
  %v4351 = vpop.f32.mrf.mxu0
  %v4352 = vadd.f32 %v3983, %v4351
  %4353 = vmatmul.bf16.gmra.mxu0 %v2965
  %v4354 = vpop.f32.mrf.mxu0
  %v4355 = vadd.f32 %v3986, %v4354
  %v4356 = vpop.f32.mrf.mxu0
  %v4357 = vadd.f32 %v3988, %v4356
  %4358 = vmatmul.bf16.gmra.mxu0 %v2969
  %v4359 = vpop.f32.mrf.mxu0
  %v4360 = vadd.f32 %v3991, %v4359
  %v4361 = vpop.f32.mrf.mxu0
  %v4362 = vadd.f32 %v3993, %v4361
  %4363 = vmatmul.bf16.gmra.mxu0 %v2973
  %v4364 = vpop.f32.mrf.mxu0
  %v4365 = vadd.f32 %v3996, %v4364
  %v4366 = vpop.f32.mrf.mxu0
  %v4367 = vadd.f32 %v3998, %v4366
  %4368 = vmatmul.bf16.gmra.mxu0 %v2977
  %v4369 = vpop.f32.mrf.mxu0
  %v4370 = vadd.f32 %v4001, %v4369
  %v4371 = vpop.f32.mrf.mxu0
  %v4372 = vadd.f32 %v4003, %v4371
  %4373 = vdwg.mxu0
  %4374 = vmatpush.bf16.msra.mxu0 %v1538
  %4375 = vmatpush.bf16.msra.mxu0 %v1537
  %4376 = vmatpush.bf16.msra.mxu0 %v1536
  %4377 = vmatpush.bf16.msra.mxu0 %v1535
  %4378 = vmatpush.bf16.msra.mxu0 %v1534
  %4379 = vmatpush.bf16.msra.mxu0 %v1533
  %4380 = vmatpush.bf16.msra.mxu0 %v1532
  %4381 = vmatpush.bf16.msra.mxu0 %v1531
  %4382 = vmatmul.bf16.gmra.mxu0 %v2694
  %v4383 = vpop.f32.mrf.mxu0
  %v4384 = vadd.f32 %v4015, %v4383
  %v4385 = vpop.f32.mrf.mxu0
  %v4386 = vadd.f32 %v4017, %v4385
  %4387 = vmatmul.bf16.gmra.mxu0 %v2698
  %v4388 = vpop.f32.mrf.mxu0
  %v4389 = vadd.f32 %v4020, %v4388
  %v4390 = vpop.f32.mrf.mxu0
  %v4391 = vadd.f32 %v4022, %v4390
  %4392 = vmatmul.bf16.gmra.mxu0 %v2702
  %v4393 = vpop.f32.mrf.mxu0
  %v4394 = vadd.f32 %v4025, %v4393
  %v4395 = vpop.f32.mrf.mxu0
  %v4396 = vadd.f32 %v4027, %v4395
  %4397 = vmatmul.bf16.gmra.mxu0 %v2706
  %v4398 = vpop.f32.mrf.mxu0
  %v4399 = vadd.f32 %v4030, %v4398
  %v4400 = vpop.f32.mrf.mxu0
  %v4401 = vadd.f32 %v4032, %v4400
  %4402 = vmatmul.bf16.gmra.mxu0 %v2710
  %v4403 = vpop.f32.mrf.mxu0
  %v4404 = vadd.f32 %v4035, %v4403
  %v4405 = vpop.f32.mrf.mxu0
  %v4406 = vadd.f32 %v4037, %v4405
  %4407 = vmatmul.bf16.gmra.mxu0 %v2714
  %v4408 = vpop.f32.mrf.mxu0
  %v4409 = vadd.f32 %v4040, %v4408
  %v4410 = vpop.f32.mrf.mxu0
  %v4411 = vadd.f32 %v4042, %v4410
  %4412 = vmatmul.bf16.gmra.mxu0 %v2718
  %v4413 = vpop.f32.mrf.mxu0
  %v4414 = vadd.f32 %v4045, %v4413
  %v4415 = vpop.f32.mrf.mxu0
  %v4416 = vadd.f32 %v4047, %v4415
  %4417 = vmatmul.bf16.gmra.mxu0 %v2722
  %v4418 = vpop.f32.mrf.mxu0
  %v4419 = vadd.f32 %v4050, %v4418
  %v4420 = vpop.f32.mrf.mxu0
  %v4421 = vadd.f32 %v4052, %v4420
  %4422 = vmatmul.bf16.gmra.mxu0 %v2726
  %v4423 = vpop.f32.mrf.mxu0
  %v4424 = vadd.f32 %v4055, %v4423
  %v4425 = vpop.f32.mrf.mxu0
  %v4426 = vadd.f32 %v4057, %v4425
  %4427 = vmatmul.bf16.gmra.mxu0 %v2730
  %v4428 = vpop.f32.mrf.mxu0
  %v4429 = vadd.f32 %v4060, %v4428
  %v4430 = vpop.f32.mrf.mxu0
  %v4431 = vadd.f32 %v4062, %v4430
  %4432 = vmatmul.bf16.gmra.mxu0 %v2734
  %v4433 = vpop.f32.mrf.mxu0
  %v4434 = vadd.f32 %v4065, %v4433
  %v4435 = vpop.f32.mrf.mxu0
  %v4436 = vadd.f32 %v4067, %v4435
  %4437 = vmatmul.bf16.gmra.mxu0 %v2738
  %v4438 = vpop.f32.mrf.mxu0
  %v4439 = vadd.f32 %v4070, %v4438
  %v4440 = vpop.f32.mrf.mxu0
  %v4441 = vadd.f32 %v4072, %v4440
  %4442 = vmatmul.bf16.gmra.mxu0 %v2742
  %v4443 = vpop.f32.mrf.mxu0
  %v4444 = vadd.f32 %v4075, %v4443
  %v4445 = vpop.f32.mrf.mxu0
  %v4446 = vadd.f32 %v4077, %v4445
  %4447 = vmatmul.bf16.gmra.mxu0 %v2746
  %v4448 = vpop.f32.mrf.mxu0
  %v4449 = vadd.f32 %v4080, %v4448
  %v4450 = vpop.f32.mrf.mxu0
  %v4451 = vadd.f32 %v4082, %v4450
  %4452 = vmatmul.bf16.gmra.mxu0 %v2750
  %v4453 = vpop.f32.mrf.mxu0
  %v4454 = vadd.f32 %v4085, %v4453
  %v4455 = vpop.f32.mrf.mxu0
  %v4456 = vadd.f32 %v4087, %v4455
  %4457 = vmatmul.bf16.gmra.mxu0 %v2754
  %v4458 = vpop.f32.mrf.mxu0
  %v4459 = vadd.f32 %v4090, %v4458
  %v4460 = vpop.f32.mrf.mxu0
  %v4461 = vadd.f32 %v4092, %v4460
  %4462 = vmatmul.bf16.gmra.mxu0 %v2758
  %v4463 = vpop.f32.mrf.mxu0
  %v4464 = vadd.f32 %v4095, %v4463
  %v4465 = vpop.f32.mrf.mxu0
  %v4466 = vadd.f32 %v4097, %v4465
  %4467 = vmatmul.bf16.gmra.mxu0 %v2762
  %v4468 = vpop.f32.mrf.mxu0
  %v4469 = vadd.f32 %v4100, %v4468
  %v4470 = vpop.f32.mrf.mxu0
  %v4471 = vadd.f32 %v4102, %v4470
  %4472 = vmatmul.bf16.gmra.mxu0 %v2766
  %v4473 = vpop.f32.mrf.mxu0
  %v4474 = vadd.f32 %v4105, %v4473
  %v4475 = vpop.f32.mrf.mxu0
  %v4476 = vadd.f32 %v4107, %v4475
  %4477 = vmatmul.bf16.gmra.mxu0 %v2770
  %v4478 = vpop.f32.mrf.mxu0
  %v4479 = vadd.f32 %v4110, %v4478
  %v4480 = vpop.f32.mrf.mxu0
  %v4481 = vadd.f32 %v4112, %v4480
  %4482 = vmatmul.bf16.gmra.mxu0 %v2774
  %v4483 = vpop.f32.mrf.mxu0
  %v4484 = vadd.f32 %v4115, %v4483
  %v4485 = vpop.f32.mrf.mxu0
  %v4486 = vadd.f32 %v4117, %v4485
  %4487 = vmatmul.bf16.gmra.mxu0 %v2778
  %v4488 = vpop.f32.mrf.mxu0
  %v4489 = vadd.f32 %v4120, %v4488
  %v4490 = vpop.f32.mrf.mxu0
  %v4491 = vadd.f32 %v4122, %v4490
  %4492 = vmatmul.bf16.gmra.mxu0 %v2782
  %v4493 = vpop.f32.mrf.mxu0
  %v4494 = vadd.f32 %v4125, %v4493
  %v4495 = vpop.f32.mrf.mxu0
  %v4496 = vadd.f32 %v4127, %v4495
  %4497 = vmatmul.bf16.gmra.mxu0 %v2786
  %v4498 = vpop.f32.mrf.mxu0
  %v4499 = vadd.f32 %v4130, %v4498
  %v4500 = vpop.f32.mrf.mxu0
  %v4501 = vadd.f32 %v4132, %v4500
  %4502 = vmatmul.bf16.gmra.mxu0 %v2790
  %v4503 = vpop.f32.mrf.mxu0
  %v4504 = vadd.f32 %v4135, %v4503
  %v4505 = vpop.f32.mrf.mxu0
  %v4506 = vadd.f32 %v4137, %v4505
  %4507 = vmatmul.bf16.gmra.mxu0 %v2794
  %v4508 = vpop.f32.mrf.mxu0
  %v4509 = vadd.f32 %v4140, %v4508
  %v4510 = vpop.f32.mrf.mxu0
  %v4511 = vadd.f32 %v4142, %v4510
  %4512 = vmatmul.bf16.gmra.mxu0 %v2798
  %v4513 = vpop.f32.mrf.mxu0
  %v4514 = vadd.f32 %v4145, %v4513
  %v4515 = vpop.f32.mrf.mxu0
  %v4516 = vadd.f32 %v4147, %v4515
  %4517 = vmatmul.bf16.gmra.mxu0 %v2802
  %v4518 = vpop.f32.mrf.mxu0
  %v4519 = vadd.f32 %v4150, %v4518
  %v4520 = vpop.f32.mrf.mxu0
  %v4521 = vadd.f32 %v4152, %v4520
  %4522 = vmatmul.bf16.gmra.mxu0 %v2806
  %v4523 = vpop.f32.mrf.mxu0
  %v4524 = vadd.f32 %v4155, %v4523
  %v4525 = vpop.f32.mrf.mxu0
  %v4526 = vadd.f32 %v4157, %v4525
  %4527 = vmatmul.bf16.gmra.mxu0 %v2810
  %v4528 = vpop.f32.mrf.mxu0
  %v4529 = vadd.f32 %v4160, %v4528
  %v4530 = vpop.f32.mrf.mxu0
  %v4531 = vadd.f32 %v4162, %v4530
  %4532 = vmatmul.bf16.gmra.mxu0 %v2814
  %v4533 = vpop.f32.mrf.mxu0
  %v4534 = vadd.f32 %v4165, %v4533
  %v4535 = vpop.f32.mrf.mxu0
  %v4536 = vadd.f32 %v4167, %v4535
  %4537 = vmatmul.bf16.gmra.mxu0 %v2818
  %v4538 = vpop.f32.mrf.mxu0
  %v4539 = vadd.f32 %v4170, %v4538
  %v4540 = vpop.f32.mrf.mxu0
  %v4541 = vadd.f32 %v4172, %v4540
  %4542 = vmatmul.bf16.gmra.mxu0 %v2822
  %v4543 = vpop.f32.mrf.mxu0
  %v4544 = vadd.f32 %v4175, %v4543
  %v4545 = vpop.f32.mrf.mxu0
  %v4546 = vadd.f32 %v4177, %v4545
  %4547 = vmatmul.bf16.gmra.mxu0 %v2826
  %v4548 = vpop.f32.mrf.mxu0
  %v4549 = vadd.f32 %v4180, %v4548
  %v4550 = vpop.f32.mrf.mxu0
  %v4551 = vadd.f32 %v4182, %v4550
  %4552 = vmatmul.bf16.gmra.mxu0 %v2830
  %v4553 = vpop.f32.mrf.mxu0
  %v4554 = vadd.f32 %v4185, %v4553
  %v4555 = vpop.f32.mrf.mxu0
  %v4556 = vadd.f32 %v4187, %v4555
  %4557 = vmatmul.bf16.gmra.mxu0 %v2834
  %v4558 = vpop.f32.mrf.mxu0
  %v4559 = vadd.f32 %v4190, %v4558
  %v4560 = vpop.f32.mrf.mxu0
  %v4561 = vadd.f32 %v4192, %v4560
  %4562 = vmatmul.bf16.gmra.mxu0 %v2838
  %v4563 = vpop.f32.mrf.mxu0
  %v4564 = vadd.f32 %v4195, %v4563
  %v4565 = vpop.f32.mrf.mxu0
  %v4566 = vadd.f32 %v4197, %v4565
  %4567 = vmatmul.bf16.gmra.mxu0 %v2842
  %v4568 = vpop.f32.mrf.mxu0
  %v4569 = vadd.f32 %v4200, %v4568
  %v4570 = vpop.f32.mrf.mxu0
  %v4571 = vadd.f32 %v4202, %v4570
  %4572 = vmatmul.bf16.gmra.mxu0 %v2846
  %v4573 = vpop.f32.mrf.mxu0
  %v4574 = vadd.f32 %v4205, %v4573
  %v4575 = vpop.f32.mrf.mxu0
  %v4576 = vadd.f32 %v4207, %v4575
  %4577 = vmatmul.bf16.gmra.mxu0 %v2850
  %v4578 = vpop.f32.mrf.mxu0
  %v4579 = vadd.f32 %v4210, %v4578
  %v4580 = vpop.f32.mrf.mxu0
  %v4581 = vadd.f32 %v4212, %v4580
  %4582 = vmatmul.bf16.gmra.mxu0 %v2854
  %v4583 = vpop.f32.mrf.mxu0
  %v4584 = vadd.f32 %v4215, %v4583
  %v4585 = vpop.f32.mrf.mxu0
  %v4586 = vadd.f32 %v4217, %v4585
  %4587 = vmatmul.bf16.gmra.mxu0 %v2858
  %v4588 = vpop.f32.mrf.mxu0
  %v4589 = vadd.f32 %v4220, %v4588
  %v4590 = vpop.f32.mrf.mxu0
  %v4591 = vadd.f32 %v4222, %v4590
  %4592 = vmatmul.bf16.gmra.mxu0 %v2862
  %v4593 = vpop.f32.mrf.mxu0
  %v4594 = vadd.f32 %v4225, %v4593
  %v4595 = vpop.f32.mrf.mxu0
  %v4596 = vadd.f32 %v4227, %v4595
  %4597 = vmatmul.bf16.gmra.mxu0 %v2866
  %v4598 = vpop.f32.mrf.mxu0
  %v4599 = vadd.f32 %v4230, %v4598
  %v4600 = vpop.f32.mrf.mxu0
  %v4601 = vadd.f32 %v4232, %v4600
  %4602 = vmatmul.bf16.gmra.mxu0 %v2870
  %v4603 = vpop.f32.mrf.mxu0
  %v4604 = vadd.f32 %v4235, %v4603
  %v4605 = vpop.f32.mrf.mxu0
  %v4606 = vadd.f32 %v4237, %v4605
  %4607 = vmatmul.bf16.gmra.mxu0 %v2874
  %v4608 = vpop.f32.mrf.mxu0
  %v4609 = vadd.f32 %v4240, %v4608
  %v4610 = vpop.f32.mrf.mxu0
  %v4611 = vadd.f32 %v4242, %v4610
  %4612 = vmatmul.bf16.gmra.mxu0 %v2878
  %v4613 = vpop.f32.mrf.mxu0
  %v4614 = vadd.f32 %v4245, %v4613
  %v4615 = vpop.f32.mrf.mxu0
  %v4616 = vadd.f32 %v4247, %v4615
  %4617 = vmatmul.bf16.gmra.mxu0 %v2882
  %v4618 = vpop.f32.mrf.mxu0
  %v4619 = vadd.f32 %v4250, %v4618
  %v4620 = vpop.f32.mrf.mxu0
  %v4621 = vadd.f32 %v4252, %v4620
  %4622 = vmatmul.bf16.gmra.mxu0 %v2886
  %v4623 = vpop.f32.mrf.mxu0
  %v4624 = vadd.f32 %v4255, %v4623
  %v4625 = vpop.f32.mrf.mxu0
  %v4626 = vadd.f32 %v4257, %v4625
  %4627 = vmatmul.bf16.gmra.mxu0 %v2890
  %v4628 = vpop.f32.mrf.mxu0
  %v4629 = vadd.f32 %v4260, %v4628
  %v4630 = vpop.f32.mrf.mxu0
  %v4631 = vadd.f32 %v4262, %v4630
  %4632 = vmatmul.bf16.gmra.mxu0 %v2894
  %v4633 = vpop.f32.mrf.mxu0
  %v4634 = vadd.f32 %v4265, %v4633
  %v4635 = vpop.f32.mrf.mxu0
  %v4636 = vadd.f32 %v4267, %v4635
  %4637 = vmatmul.bf16.gmra.mxu0 %v2898
  %v4638 = vpop.f32.mrf.mxu0
  %v4639 = vadd.f32 %v4270, %v4638
  %v4640 = vpop.f32.mrf.mxu0
  %v4641 = vadd.f32 %v4272, %v4640
  %4642 = vmatmul.bf16.gmra.mxu0 %v2902
  %v4643 = vpop.f32.mrf.mxu0
  %v4644 = vadd.f32 %v4275, %v4643
  %v4645 = vpop.f32.mrf.mxu0
  %v4646 = vadd.f32 %v4277, %v4645
  %4647 = vmatmul.bf16.gmra.mxu0 %v2906
  %v4648 = vpop.f32.mrf.mxu0
  %v4649 = vadd.f32 %v4280, %v4648
  %v4650 = vpop.f32.mrf.mxu0
  %v4651 = vadd.f32 %v4282, %v4650
  %4652 = vmatmul.bf16.gmra.mxu0 %v2910
  %v4653 = vpop.f32.mrf.mxu0
  %v4654 = vadd.f32 %v4285, %v4653
  %v4655 = vpop.f32.mrf.mxu0
  %v4656 = vadd.f32 %v4287, %v4655
  %4657 = vmatmul.bf16.gmra.mxu0 %v2914
  %v4658 = vpop.f32.mrf.mxu0
  %v4659 = vadd.f32 %v4290, %v4658
  %v4660 = vpop.f32.mrf.mxu0
  %v4661 = vadd.f32 %v4292, %v4660
  %4662 = vmatmul.bf16.gmra.mxu0 %v2918
  %v4663 = vpop.f32.mrf.mxu0
  %v4664 = vadd.f32 %v4295, %v4663
  %v4665 = vpop.f32.mrf.mxu0
  %v4666 = vadd.f32 %v4297, %v4665
  %4667 = vmatmul.bf16.gmra.mxu0 %v2922
  %v4668 = vpop.f32.mrf.mxu0
  %v4669 = vadd.f32 %v4300, %v4668
  %v4670 = vpop.f32.mrf.mxu0
  %v4671 = vadd.f32 %v4302, %v4670
  %4672 = vmatmul.bf16.gmra.mxu0 %v2926
  %v4673 = vpop.f32.mrf.mxu0
  %v4674 = vadd.f32 %v4305, %v4673
  %v4675 = vpop.f32.mrf.mxu0
  %v4676 = vadd.f32 %v4307, %v4675
  %4677 = vmatmul.bf16.gmra.mxu0 %v2930
  %v4678 = vpop.f32.mrf.mxu0
  %v4679 = vadd.f32 %v4310, %v4678
  %v4680 = vpop.f32.mrf.mxu0
  %v4681 = vadd.f32 %v4312, %v4680
  %4682 = vmatmul.bf16.gmra.mxu0 %v2934
  %v4683 = vpop.f32.mrf.mxu0
  %v4684 = vadd.f32 %v4315, %v4683
  %v4685 = vpop.f32.mrf.mxu0
  %v4686 = vadd.f32 %v4317, %v4685
  %4687 = vmatmul.bf16.gmra.mxu0 %v2938
  %v4688 = vpop.f32.mrf.mxu0
  %v4689 = vadd.f32 %v4320, %v4688
  %v4690 = vpop.f32.mrf.mxu0
  %v4691 = vadd.f32 %v4322, %v4690
  %4692 = vmatmul.bf16.gmra.mxu0 %v2942
  %v4693 = vpop.f32.mrf.mxu0
  %v4694 = vadd.f32 %v4325, %v4693
  %v4695 = vpop.f32.mrf.mxu0
  %v4696 = vadd.f32 %v4327, %v4695
  %4697 = vmatmul.bf16.gmra.mxu0 %v2946
  %v4698 = vpop.f32.mrf.mxu0
  %v4699 = vadd.f32 %v4330, %v4698
  %v4700 = vpop.f32.mrf.mxu0
  %v4701 = vadd.f32 %v4332, %v4700
  %4702 = vmatmul.bf16.gmra.mxu0 %v2950
  %v4703 = vpop.f32.mrf.mxu0
  %v4704 = vadd.f32 %v4335, %v4703
  %v4705 = vpop.f32.mrf.mxu0
  %v4706 = vadd.f32 %v4337, %v4705
  %4707 = vmatmul.bf16.gmra.mxu0 %v2954
  %v4708 = vpop.f32.mrf.mxu0
  %v4709 = vadd.f32 %v4340, %v4708
  %v4710 = vpop.f32.mrf.mxu0
  %v4711 = vadd.f32 %v4342, %v4710
  %4712 = vmatmul.bf16.gmra.mxu0 %v2958
  %v4713 = vpop.f32.mrf.mxu0
  %v4714 = vadd.f32 %v4345, %v4713
  %v4715 = vpop.f32.mrf.mxu0
  %v4716 = vadd.f32 %v4347, %v4715
  %4717 = vmatmul.bf16.gmra.mxu0 %v2962
  %v4718 = vpop.f32.mrf.mxu0
  %v4719 = vadd.f32 %v4350, %v4718
  %v4720 = vpop.f32.mrf.mxu0
  %v4721 = vadd.f32 %v4352, %v4720
  %4722 = vmatmul.bf16.gmra.mxu0 %v2966
  %v4723 = vpop.f32.mrf.mxu0
  %v4724 = vadd.f32 %v4355, %v4723
  %v4725 = vpop.f32.mrf.mxu0
  %v4726 = vadd.f32 %v4357, %v4725
  %4727 = vmatmul.bf16.gmra.mxu0 %v2970
  %v4728 = vpop.f32.mrf.mxu0
  %v4729 = vadd.f32 %v4360, %v4728
  %v4730 = vpop.f32.mrf.mxu0
  %v4731 = vadd.f32 %v4362, %v4730
  %4732 = vmatmul.bf16.gmra.mxu0 %v2974
  %v4733 = vpop.f32.mrf.mxu0
  %v4734 = vadd.f32 %v4365, %v4733
  %v4735 = vpop.f32.mrf.mxu0
  %v4736 = vadd.f32 %v4367, %v4735
  %4737 = vmatmul.bf16.gmra.mxu0 %v2978
  %v4738 = vpop.f32.mrf.mxu0
  %v4739 = vadd.f32 %v4370, %v4738
  %v4740 = vpop.f32.mrf.mxu0
  %v4741 = vadd.f32 %v4372, %v4740
  %4742 = vdwg.mxu0
  %v4743 = vmax.f32 %v4384, %v4424
  %v4744 = vmax.f32 %v4386, %v4426
  %v4745 = vmax.f32 %v4389, %v4429
  %v4746 = vmax.f32 %v4391, %v4431
  %v4747 = vmax.f32 %v4394, %v4434
  %v4748 = vmax.f32 %v4396, %v4436
  %v4749 = vmax.f32 %v4399, %v4439
  %v4750 = vmax.f32 %v4401, %v4441
  %v4751 = vmax.f32 %v4404, %v4444
  %v4752 = vmax.f32 %v4406, %v4446
  %v4753 = vmax.f32 %v4409, %v4449
  %v4754 = vmax.f32 %v4411, %v4451
  %v4755 = vmax.f32 %v4414, %v4454
  %v4756 = vmax.f32 %v4416, %v4456
  %v4757 = vmax.f32 %v4419, %v4459
  %v4758 = vmax.f32 %v4421, %v4461
  %v4759 = vmax.f32 %v4743, %v4464
  %v4760 = vmax.f32 %v4744, %v4466
  %v4761 = vmax.f32 %v4745, %v4469
  %v4762 = vmax.f32 %v4746, %v4471
  %v4763 = vmax.f32 %v4747, %v4474
  %v4764 = vmax.f32 %v4748, %v4476
  %v4765 = vmax.f32 %v4749, %v4479
  %v4766 = vmax.f32 %v4750, %v4481
  %v4767 = vmax.f32 %v4751, %v4484
  %v4768 = vmax.f32 %v4752, %v4486
  %v4769 = vmax.f32 %v4753, %v4489
  %v4770 = vmax.f32 %v4754, %v4491
  %v4771 = vmax.f32 %v4755, %v4494
  %v4772 = vmax.f32 %v4756, %v4496
  %v4773 = vmax.f32 %v4757, %v4499
  %v4774 = vmax.f32 %v4758, %v4501
  %v4775 = vmax.f32 %v4759, %v4504
  %v4776 = vmax.f32 %v4760, %v4506
  %v4777 = vmax.f32 %v4761, %v4509
  %v4778 = vmax.f32 %v4762, %v4511
  %v4779 = vmax.f32 %v4763, %v4514
  %v4780 = vmax.f32 %v4764, %v4516
  %v4781 = vmax.f32 %v4765, %v4519
  %v4782 = vmax.f32 %v4766, %v4521
  %v4783 = vmax.f32 %v4767, %v4524
  %v4784 = vmax.f32 %v4768, %v4526
  %v4785 = vmax.f32 %v4769, %v4529
  %v4786 = vmax.f32 %v4770, %v4531
  %v4787 = vmax.f32 %v4771, %v4534
  %v4788 = vmax.f32 %v4772, %v4536
  %v4789 = vmax.f32 %v4773, %v4539
  %v4790 = vmax.f32 %v4774, %v4541
  %v4791 = vmax.f32 %v4775, %v4544
  %v4792 = vmax.f32 %v4776, %v4546
  %v4793 = vmax.f32 %v4777, %v4549
  %v4794 = vmax.f32 %v4778, %v4551
  %v4795 = vmax.f32 %v4779, %v4554
  %v4796 = vmax.f32 %v4780, %v4556
  %v4797 = vmax.f32 %v4781, %v4559
  %v4798 = vmax.f32 %v4782, %v4561
  %v4799 = vmax.f32 %v4783, %v4564
  %v4800 = vmax.f32 %v4784, %v4566
  %v4801 = vmax.f32 %v4785, %v4569
  %v4802 = vmax.f32 %v4786, %v4571
  %v4803 = vmax.f32 %v4787, %v4574
  %v4804 = vmax.f32 %v4788, %v4576
  %v4805 = vmax.f32 %v4789, %v4579
  %v4806 = vmax.f32 %v4790, %v4581
  %v4807 = vmax.f32 %v4791, %v4584
  %v4808 = vmax.f32 %v4792, %v4586
  %v4809 = vmax.f32 %v4793, %v4589
  %v4810 = vmax.f32 %v4794, %v4591
  %v4811 = vmax.f32 %v4795, %v4594
  %v4812 = vmax.f32 %v4796, %v4596
  %v4813 = vmax.f32 %v4797, %v4599
  %v4814 = vmax.f32 %v4798, %v4601
  %v4815 = vmax.f32 %v4799, %v4604
  %v4816 = vmax.f32 %v4800, %v4606
  %v4817 = vmax.f32 %v4801, %v4609
  %v4818 = vmax.f32 %v4802, %v4611
  %v4819 = vmax.f32 %v4803, %v4614
  %v4820 = vmax.f32 %v4804, %v4616
  %v4821 = vmax.f32 %v4805, %v4619
  %v4822 = vmax.f32 %v4806, %v4621
  %v4823 = vmax.f32 %v4807, %v4624
  %v4824 = vmax.f32 %v4808, %v4626
  %v4825 = vmax.f32 %v4809, %v4629
  %v4826 = vmax.f32 %v4810, %v4631
  %v4827 = vmax.f32 %v4811, %v4634
  %v4828 = vmax.f32 %v4812, %v4636
  %v4829 = vmax.f32 %v4813, %v4639
  %v4830 = vmax.f32 %v4814, %v4641
  %v4831 = vmax.f32 %v4815, %v4644
  %v4832 = vmax.f32 %v4816, %v4646
  %v4833 = vmax.f32 %v4817, %v4649
  %v4834 = vmax.f32 %v4818, %v4651
  %v4835 = vmax.f32 %v4819, %v4654
  %v4836 = vmax.f32 %v4820, %v4656
  %v4837 = vmax.f32 %v4821, %v4659
  %v4838 = vmax.f32 %v4822, %v4661
  %v4839 = vmax.f32 %v4823, %v4664
  %v4840 = vmax.f32 %v4824, %v4666
  %v4841 = vmax.f32 %v4825, %v4669
  %v4842 = vmax.f32 %v4826, %v4671
  %v4843 = vmax.f32 %v4827, %v4674
  %v4844 = vmax.f32 %v4828, %v4676
  %v4845 = vmax.f32 %v4829, %v4679
  %v4846 = vmax.f32 %v4830, %v4681
  %v4847 = vmax.f32 %v4831, %v4684
  %v4848 = vmax.f32 %v4832, %v4686
  %v4849 = vmax.f32 %v4833, %v4689
  %v4850 = vmax.f32 %v4834, %v4691
  %v4851 = vmax.f32 %v4835, %v4694
  %v4852 = vmax.f32 %v4836, %v4696
  %v4853 = vmax.f32 %v4837, %v4699
  %v4854 = vmax.f32 %v4838, %v4701
  %v4855 = vmax.f32 %v4839, %v4704
  %v4856 = vmax.f32 %v4840, %v4706
  %v4857 = vmax.f32 %v4841, %v4709
  %v4858 = vmax.f32 %v4842, %v4711
  %v4859 = vmax.f32 %v4843, %v4714
  %v4860 = vmax.f32 %v4844, %v4716
  %v4861 = vmax.f32 %v4845, %v4719
  %v4862 = vmax.f32 %v4846, %v4721
  %v4863 = vmax.f32 %v4847, %v4724
  %v4864 = vmax.f32 %v4848, %v4726
  %v4865 = vmax.f32 %v4849, %v4729
  %v4866 = vmax.f32 %v4850, %v4731
  %v4867 = vmax.f32 %v4851, %v4734
  %v4868 = vmax.f32 %v4852, %v4736
  %v4869 = vmax.f32 %v4853, %v4739
  %v4870 = vmax.f32 %v4854, %v4741
  %4871 = vst.msk [vmem:[%s5] sm:$0xff] %vm893, %v4855
  %4872 = vst.msk [vmem:[%s5 + $0x8] sm:$0xff] %vm893, %v4856
  %4873 = vst.msk [vmem:[%s5 + $0x10] sm:$0xff] %vm893, %v4857
  %4874 = vst.msk [vmem:[%s5 + $0x18] sm:$0xff] %vm893, %v4858
  %4875 = vst.msk [vmem:[%s5 + $0x20] sm:$0xff] %vm893, %v4859
  %4876 = vst.msk [vmem:[%s5 + $0x28] sm:$0xff] %vm893, %v4860
  %4877 = vst.msk [vmem:[%s5 + $0x30] sm:$0xff] %vm893, %v4861
  %4878 = vst.msk [vmem:[%s5 + $0x38] sm:$0xff] %vm893, %v4862
  %4879 = vst.msk [vmem:[%s5 + $0x40] sm:$0xff] %vm893, %v4863
  %4880 = vst.msk [vmem:[%s5 + $0x48] sm:$0xff] %vm893, %v4864
  %4881 = vst.msk [vmem:[%s5 + $0x50] sm:$0xff] %vm893, %v4865
  %4882 = vst.msk [vmem:[%s5 + $0x58] sm:$0xff] %vm893, %v4866
  %4883 = vst.msk [vmem:[%s5 + $0x60] sm:$0xff] %vm893, %v4867
  %4884 = vst.msk [vmem:[%s5 + $0x68] sm:$0xff] %vm893, %v4868
  %4885 = vst.msk [vmem:[%s5 + $0x70] sm:$0xff] %vm893, %v4869
  %4886 = vst.msk [vmem:[%s5 + $0x78] sm:$0xff] %vm893, %v4870
  // Predicated region
  $region22: #{_stem_maxpool.1} parent=0 // pred_check
    _
  $region23: #{_stem_maxpool.1} parent=0 // pred_check_branch
    %4888 = sbr.rel (0) target = $region25
  $region24: #{_stem_maxpool.1} parent=0 // pred_region
    _
  $region25: #{_stem_maxpool.1} parent=0 // pred_fallthru
    _
  // Predicated region
  $region26: #{_stem_maxpool.1} parent=0 // pred_check
    _
  $region27: #{_stem_maxpool.1} parent=0 // pred_check_branch
    %4890 = sbr.rel (0) target = $region29
  $region28: #{_stem_maxpool.1} parent=0 // pred_region
    _
  $region29: #{_stem_maxpool.1} parent=0 // pred_fallthru
    _

</llo_original>
